<compile_context>
chip_gen: v7x
topology: tpu7x:2x2x1
jax: 0.10.0
libtpu: 0.0.40
codegen_flags: <defaults>
</compile_context>

<pallas_src>
import jax
import jax.numpy as jnp
from jax.experimental import pallas as pl
from jax.experimental.pallas import tpu as pltpu

FEAT_C = 2048       # resnet50 (minus avgpool/fc) output channels
FEAT_H = 7          # standard resnet50 7x7 feature map
FEAT_W = 7
NUM_CLASSES = 16    # config.numcls (kept small for the demo)


def _head_kernel(x_ref, w_ref, o_ref, acc_ref):
    """K-tiled fused avg-pool + bias-free classifier.

    x_ref  : [TB, TK]      feature tile (native NCHW order, flattened, lane-dense)
    w_ref  : [TK, N]  f32  repeated-over-HW, 1/HW-pre-scaled classifier weight tile
    o_ref  : [1, TB, N] f32 partial output for this K-partition
    acc_ref: [TB, N]  f32  accumulator scratch (persists across the K grid axis)
    """
    k = pl.program_id(2)

    @pl.when(k == 0)
    def _():
        acc_ref[...] = jnp.zeros_like(acc_ref)

    # Upcast the (possibly bf16) feature tile; accumulate in f32 on the MXU.
    x = x_ref[...].astype(jnp.float32)
    acc_ref[...] += jnp.dot(x, w_ref[...], preferred_element_type=jnp.float32)

    @pl.when(k == pl.num_programs(2) - 1)
    def _():
        o_ref[0] = acc_ref[...].astype(o_ref.dtype)


def prepare_classifier_weight(classifier_w, feat_h, feat_w):
    """One-time (load-time) weight prep.

    Folds the AdaptiveAvgPool2d 1/(H*W) scale and the nn.Linear transpose into
    a repeated-over-HW [C*HW, N] f32 operand so the kernel's contraction runs
    directly over the flattened native-NCHW feature axis (no in-kernel pooling
    or relayout).  ~6.4 MB for resnet50; done once per model load.
    """
    hw = feat_h * feat_w
    w = classifier_w.astype(jnp.float32).T * (1.0 / hw)   # [C, N]
    return jnp.repeat(w, hw, axis=0)                       # [C*HW, N]


def _largest_aligned_divisor(n, align, cap):
    """Largest d <= cap with n % d == 0 and d % align == 0 (None if none)."""
    best = None
    for m in range(1, cap // align + 1):
        d = align * m
        if n % d == 0:
            best = d
    return best


def main_model_head(feat_nchw, w_expanded):
    """Pallas head: AdaptiveAvgPool2d(1) + Linear(C, N, bias=False).

    feat_nchw  : [B, C, H, W]   backbone output (f32 or bf16; NCHW, untransposed)
    w_expanded : [C*H*W, N] f32 output of prepare_classifier_weight
    returns    : [B, N] f32
    """
    B, C, H, W = feat_nchw.shape
    K, N = w_expanded.shape
    assert K == C * H * W

    # Free reshape of the native NCHW layout: lane-dense [B, C*HW], no transpose.
    x = feat_nchw.reshape(B, K)

    # Batch tile: full batch for small B (block == full dim), 8 otherwise.
    tb = B if B <= 8 else 8
    nb = pl.cdiv(B, tb)

    # K tile: multiple of 128 (lane-dense) that divides K; 6272 = 49*128 keeps
    # the padded [tk, 128] weight buffers at 2 x 3.2 MiB, safe on every gen.
    tk = _largest_aligned_divisor(K, 128, min(6272, K)) or K
    nk_total = K // tk

    # Split K into 2 "parallel" partial-sum partitions so v7x's two TensorCores
    # both get work even when the batch grid collapses to a single block.
    np_ = 2 if (nk_total % 2 == 0 and nk_total >= 2) else 1
    nk = nk_total // np_

    x_map = lambda p, i, k, nk=nk: (i, p * nk + k)
    w_map = lambda p, i, k, nk=nk: (p * nk + k, 0)
    o_map = lambda p, i, k: (p, i, 0)

    partial = pl.pallas_call(
        _head_kernel,
        out_shape=jax.ShapeDtypeStruct((np_, B, N), jnp.float32),
        grid_spec=pltpu.PrefetchScalarGridSpec(
            num_scalar_prefetch=0,
            grid=(np_, nb, nk),
            in_specs=[
                pl.BlockSpec((tb, tk), x_map),   # feature stream (bf16 or f32)
                pl.BlockSpec((tk, N), w_map),    # f32 weight stream
            ],
            out_specs=pl.BlockSpec((1, tb, N), o_map),
            scratch_shapes=[pltpu.VMEM((tb, N), jnp.float32)],
        ),
        compiler_params=pltpu.CompilerParams(
            dimension_semantics=("parallel", "parallel", "arbitrary")),
    )(x, w_expanded)

    # Tiny [np_, B, N] partial-sum combine (256 B at the demo size).
    return jnp.sum(partial, axis=0)


def main_model_forward(backbone_feat, w_expanded, swap_map=None):
    """Mirrors MainModel.forward for the swap_map=None path."""
    # TODO(synk): swap_map branch requires SwapLayer, which is undefined in the
    #             provided module source; only the default (None) path is run.
    cls_feat = backbone_feat
    out = main_model_head(cls_feat, w_expanded)
    swap_out = None
    pred_dis = pred_ang = pred_n_dis = pred_n_ang = None
    return (out, swap_out, pred_dis, pred_ang, pred_n_dis, pred_n_ang)


if __name__ == "__main__":
    key = jax.random.PRNGKey(0)
    k_feat, k_w = jax.random.split(key)

    B = 2
    # Backbone (resnet50 w/o avgpool+fc) output feature map, NCHW, in bf16 to
    # exercise the half-traffic feature path (accumulation stays f32 in-kernel).
    feat = jax.random.normal(k_feat, (B, FEAT_C, FEAT_H, FEAT_W),
                             dtype=jnp.bfloat16)

    # Deterministic nn.Linear(2048, num_classes, bias=False) init:
    # uniform(-1/sqrt(in_features), 1/sqrt(in_features)).
    bound = float(FEAT_C) ** -0.5
    classifier_w = jax.random.uniform(
        k_w, (NUM_CLASSES, FEAT_C), minval=-bound, maxval=bound,
        dtype=jnp.float32)

    # One-time, load-time weight prep (outside the per-call path).
    w_exp = prepare_classifier_weight(classifier_w, FEAT_H, FEAT_W)

    outs = main_model_forward(feat, w_exp, swap_map=None)
    out = jax.block_until_ready(outs[0])

    # Reference in plain JAX from the same bf16 features (f32 math):
    # avgpool over H,W then bias-free linear.  Tolerance covers MXU pass
    # rounding of the f32 matmul and summation-order differences.
    ref = jnp.mean(feat.astype(jnp.float32), axis=(2, 3)) @ classifier_w.T
    assert out.shape == (B, NUM_CLASSES)
    err = float(jnp.max(jnp.abs(out - ref)))
    assert jnp.allclose(out, ref, atol=2e-3, rtol=2e-3), err
    assert outs[1] is None and outs[2] is None and outs[3] is None
    assert outs[4] is None and outs[5] is None

    print("KERNEL_OK")
</pallas_src>

<mosaic_0001>
module attributes {stable_mosaic.version = 11 : i64} {
  func.func @_head_kernel(%arg0: i32, %arg1: i32, %arg2: i32, %arg3: memref<2x6272xbf16, #tpu.memory_space<vmem>>, %arg4: memref<6272x16xf32, #tpu.memory_space<vmem>>, %arg5: memref<1x2x16xf32, #tpu.memory_space<vmem>>, %arg6: memref<2x16xf32, #tpu.memory_space<vmem>>) attributes {dimension_semantics = [#tpu.dimension_semantics<parallel>, #tpu.dimension_semantics<parallel>, #tpu.dimension_semantics<arbitrary>], iteration_bounds = array<i64: 2, 1, 8>, scalar_prefetch = 0 : i64, scratch_operands = 1 : i64, tpu.core_type = #tpu.core_type<tc>, window_params = [{transform_indices = @transform_0, window_bounds = array<i64: 2, 6272>}, {transform_indices = @transform_1, window_bounds = array<i64: 6272, 16>}, {transform_indices = @transform_2, window_bounds = array<i64: 1, 2, 16>}]} {
    %c0_i32 = arith.constant 0 : i32
    %0 = arith.cmpi eq, %arg2, %c0_i32 : i32
    %1 = arith.extui %0 : i1 to i32
    %c0_i32_0 = arith.constant 0 : i32
    %2 = arith.cmpi ne, %1, %c0_i32_0 : i32
    scf.if %2 {
      %cst_9 = arith.constant 0.000000e+00 : f32
      %13 = vector.broadcast %cst_9 : f32 to vector<2x16xf32>
      %c0_10 = arith.constant 0 : index
      %c0_11 = arith.constant 0 : index
      %14 = vector.load %arg6[%c0_10, %c0_11] : memref<2x16xf32, #tpu.memory_space<vmem>>, vector<2x16xf32>
      tpu.vector_store %arg6[%c0_10, %c0_11], %13 {strides = array<i32>} : memref<2x16xf32, #tpu.memory_space<vmem>>, vector<2x16xf32>,
    } else {
    }
    %c0 = arith.constant 0 : index
    %c0_1 = arith.constant 0 : index
    %3 = vector.load %arg3[%c0, %c0_1] : memref<2x6272xbf16, #tpu.memory_space<vmem>>, vector<2x6272xbf16>
    %4 = arith.extf %3 : vector<2x6272xbf16> to vector<2x6272xf32>
    %c0_2 = arith.constant 0 : index
    %c0_3 = arith.constant 0 : index
    %5 = vector.load %arg6[%c0_2, %c0_3] : memref<2x16xf32, #tpu.memory_space<vmem>>, vector<2x16xf32>
    %c0_4 = arith.constant 0 : index
    %c0_5 = arith.constant 0 : index
    %6 = vector.load %arg4[%c0_4, %c0_5] : memref<6272x16xf32, #tpu.memory_space<vmem>>, vector<6272x16xf32>
    %cst = arith.constant dense<0.000000e+00> : vector<2x16xf32>
    %7 = tpu.matmul %4, %6, %cst {dimension_numbers = #tpu.dot_dimension_numbers<[1], [0], [0], [1], [0, 0, 1, 1], [], []>} : vector<2x6272xf32>, vector<6272x16xf32>, vector<2x16xf32> -> vector<2x16xf32>
    %8 = arith.addf %5, %7 : vector<2x16xf32>
    %c0_6 = arith.constant 0 : index
    %c0_7 = arith.constant 0 : index
    %9 = vector.load %arg6[%c0_6, %c0_7] : memref<2x16xf32, #tpu.memory_space<vmem>>, vector<2x16xf32>
    tpu.vector_store %arg6[%c0_6, %c0_7], %8 {strides = array<i32>} : memref<2x16xf32, #tpu.memory_space<vmem>>, vector<2x16xf32>,
    %c7_i32 = arith.constant 7 : i32
    %10 = arith.cmpi eq, %arg2, %c7_i32 : i32
    %11 = arith.extui %10 : i1 to i32
    %c0_i32_8 = arith.constant 0 : i32
    %12 = arith.cmpi ne, %11, %c0_i32_8 : i32
    scf.if %12 {
      %c0_9 = arith.constant 0 : index
      %c0_10 = arith.constant 0 : index
      %13 = vector.load %arg6[%c0_9, %c0_10] : memref<2x16xf32, #tpu.memory_space<vmem>>, vector<2x16xf32>
      %c0_11 = arith.constant 0 : index
      %c0_12 = arith.constant 0 : index
      %c0_13 = arith.constant 0 : index
      %14 = vector.load %arg5[%c0_11, %c0_12, %c0_13] : memref<1x2x16xf32, #tpu.memory_space<vmem>>, vector<1x2x16xf32>
      %15 = vector.shape_cast %14 : vector<1x2x16xf32> to vector<2x16xf32>
      %16 = vector.shape_cast %13 : vector<2x16xf32> to vector<1x2x16xf32>
      tpu.vector_store %arg5[%c0_11, %c0_12, %c0_13], %16 {strides = array<i32>} : memref<1x2x16xf32, #tpu.memory_space<vmem>>, vector<1x2x16xf32>,
    } else {
    }
    return
  }
  func.func @transform_0(%arg0: i32, %arg1: i32, %arg2: i32) -> (i32, i32) {
    %c8_i32 = arith.constant 8 : i32
    %0 = arith.muli %arg0, %c8_i32 : i32
    %1 = arith.addi %0, %arg2 : i32
    %c0_i32 = arith.constant 0 : i32
    return %arg1, %1 : i32, i32
  }
  func.func @transform_1(%arg0: i32, %arg1: i32, %arg2: i32) -> (i32, i32) {
    %c8_i32 = arith.constant 8 : i32
    %0 = arith.muli %arg0, %c8_i32 : i32
    %1 = arith.addi %0, %arg2 : i32
    %c0_i32 = arith.constant 0 : i32
    %c0_i32_0 = arith.constant 0 : i32
    return %1, %c0_i32 : i32, i32
  }
  func.func @transform_2(%arg0: i32, %arg1: i32, %arg2: i32) -> (i32, i32, i32) {
    %c0_i32 = arith.constant 0 : i32
    %c0_i32_0 = arith.constant 0 : i32
    return %arg0, %arg1, %c0_i32 : i32, i32, i32
  }
}

</mosaic_0001>

<llo_original>
// kernel: tpu_custom_call.1
$region0: #{tpu_custom_call.1}
  #allocation0 [shape = 'u32[]', space=smem, size = 0x4, offset = 0x4, fixed_abs, tag = 'smem constant byte address 0x4 - core index']
  #allocation1 [shape = 'u32[144,128]{1,0:T(1,128)}', space=vmem, size = 0x12000, scoped, tag = 'internal scratch']
  #allocation2 [shape = 'f32[2,16]{1,0:T(2,128)}', space=vmem, size = 0x400, scoped, tag = 'scratch operand']
  %s0 = inlined_call_operand.vmem [shape: bf16[2,100352], index: 0, kind: input, shape index: {}]
  %s1 = inlined_call_operand.hbm [shape: f32[100352,16], index: 1, kind: input, shape index: {}]
  %s2 = inlined_call_operand.hbm [shape: f32[2,2,16], index: 2, kind: output, shape index: {}]
  %s3 = sld [smem:[#allocation0]]
  $region53: #{tpu_custom_call.1} parent=0
    _
  %s5 = ssub.s32 1, %s3
  %s6 = scalar_select 0, %s5, %s3
  $region1: #{tpu_custom_call.1} parent=0
    #allocation3 [shape = 'u8[6422528]{0}', space=vmem, size = 0x620000, scoped, tag = 'input window, operand 1']
    #allocation4 [shape = 's32[2]{0}', space=sflag, size = 0x8, scoped, tag = 'scoped memory for tpu_custom_call.1']
    #allocation5 [shape = 's32[2]{0}', space=sflag, size = 0x8, scoped, tag = 'scoped memory for tpu_custom_call.1']
    #allocation6 [shape = 'u8[2048]{0}', space=vmem, size = 0x800, scoped, tag = 'output window, operand 0']
    %7 = vsyncpa [#allocation4], 0
    %s8 = scalar_lea.sflag [#allocation4], 1
    %9 = vsyncpa %s8, 0
    %10 = vsyncpa [#allocation5], 0
    %s11 = scalar_lea.sflag [#allocation5], 1
    %12 = vsyncpa %s11, 0
    loop: start=0, step=1, limit=18
    $region2: #{tpu_custom_call.1} parent=1 // loop_pre_header
      _
    $region3: #{tpu_custom_call.1} parent=1 // loop_header
      %s14 = sphi 0, %s18
      %p15 = scmp.ge.s32.totalorder %s14, 18
      %s21 = sphi 0, %s40
      %s22 = sphi 0, %s36
      %s23 = sphi 0, %s32
      %s24 = sphi 0, %s21
      %s25 = sphi 0, %s22
      %s26 = sphi 0, %s23
      %s27 = sphi 0, %s24
      %s28 = sphi 0, %s25
      %s29 = sphi 0, %s26
      %s49 = sphi 0, %s51
      %s52 = sphi 0, %s49
      %s53 = sphi 0, %s52
      %s69 = sphi 0, %s53
      %s79 = sphi 0, %s81
      %s82 = sphi 0, %s79
      %s83 = sphi 0, %s82
      %s99 = sphi 0, %s83
      %s107 = sphi 0, %s109
      %s110 = sphi 0, %s107
      %s111 = sphi 0, %s110
      %s127 = sphi 0, %s111
    $region4: #{tpu_custom_call.1} parent=1 // loop_header_branch
      %17 = sbr.rel (%p15) target = $region8
    $region5: #{tpu_custom_call.1} parent=1 // loop_body
      %s19 = ssub.s32 %s14, 1
      %s20 = ssub.s32 %s14, 2
      %s30 = sadd.s32 1, %s23
      %p31 = scmp.ge.s32.totalorder %s30, 8
      %s32 = scalar_select %p31, 0, %s30
      %s33 = sadd.s32 1, %s22
      %s34 = scalar_select %p31, %s33, %s22
      %p35 = scmp.ge.s32.totalorder %s34, 1
      %s36 = scalar_select %p35, 0, %s34
      %s37 = sadd.s32 1, %s21
      %s38 = scalar_select %p35, %s37, %s21
      %p39 = scmp.ge.s32.totalorder %s38, 2
      %s40 = scalar_select %p39, 0, %s38
      %s41 = smul.u32 %s21, 8
      %s42 = sadd.s32 %s41, %s23
      %s43 = smul.u32 %s40, 8
      %s44 = sadd.s32 %s43, %s32
      %s45 = ssub.s32 %s22, %s36
      %s46 = ssub.s32 %s42, %s44
      %s47 = sor.u32 %s45, %s46
      %p48 = scmp.eq.s32.totalorder %s47, 0
      %s50 = sadd.s32 %s49, 1
      %s51 = scalar_select %p48, %s49, %s50
      %p54 = pneg %p48
      %p55 = scmp.eq.s32.totalorder %s14, 15
      %p56 = por %p54, %p55
      %p57 = scmp.ne.s32.totalorder %s49, %s52
      %p58 = scmp.eq.s32.totalorder %s14, 0
      %p59 = por %p57, %p58
      %p60 = scmp.ne.s32.totalorder %s49, %s52
      %p61 = scmp.eq.s32.totalorder %s19, 15
      %p62 = por %p60, %p61
      %p63 = scmp.ne.s32.totalorder %s52, %s53
      %p64 = scmp.eq.s32.totalorder %s19, 0
      %p65 = por %p63, %p64
      %p66 = scmp.ne.s32.totalorder %s52, %s53
      %p67 = scmp.eq.s32.totalorder %s20, 15
      %p68 = por %p66, %p67
      %p70 = scmp.ne.s32.totalorder %s53, %s69
      %p71 = scmp.eq.s32.totalorder %s20, 0
      %p72 = por %p70, %p71
      %s73 = smul.u32 %s21, 8
      %s74 = sadd.s32 %s73, %s23
      %s75 = smul.u32 %s40, 8
      %s76 = sadd.s32 %s75, %s32
      %s77 = ssub.s32 %s74, %s76
      %p78 = scmp.eq.s32.totalorder %s77, 0
      %s80 = sadd.s32 %s79, 1
      %s81 = scalar_select %p78, %s79, %s80
      %p84 = pneg %p78
      %p85 = scmp.eq.s32.totalorder %s14, 15
      %p86 = por %p84, %p85
      %p87 = scmp.ne.s32.totalorder %s79, %s82
      %p88 = scmp.eq.s32.totalorder %s14, 0
      %p89 = por %p87, %p88
      %p90 = scmp.ne.s32.totalorder %s79, %s82
      %p91 = scmp.eq.s32.totalorder %s19, 15
      %p92 = por %p90, %p91
      %p93 = scmp.ne.s32.totalorder %s82, %s83
      %p94 = scmp.eq.s32.totalorder %s19, 0
      %p95 = por %p93, %p94
      %p96 = scmp.ne.s32.totalorder %s82, %s83
      %p97 = scmp.eq.s32.totalorder %s20, 15
      %p98 = por %p96, %p97
      %p100 = scmp.ne.s32.totalorder %s83, %s99
      %p101 = scmp.eq.s32.totalorder %s20, 0
      %p102 = por %p100, %p101
      %s103 = ssub.s32 %s21, %s40
      %s104 = ssub.s32 %s22, %s36
      %s105 = sor.u32 %s103, %s104
      %p106 = scmp.eq.s32.totalorder %s105, 0
      %s108 = sadd.s32 %s107, 1
      %s109 = scalar_select %p106, %s107, %s108
      %p112 = pneg %p106
      %p113 = scmp.eq.s32.totalorder %s14, 15
      %p114 = por %p112, %p113
      %p115 = scmp.ne.s32.totalorder %s107, %s110
      %p116 = scmp.eq.s32.totalorder %s14, 0
      %p117 = por %p115, %p116
      %p118 = scmp.ne.s32.totalorder %s107, %s110
      %p119 = scmp.eq.s32.totalorder %s19, 15
      %p120 = por %p118, %p119
      %p121 = scmp.ne.s32.totalorder %s110, %s111
      %p122 = scmp.eq.s32.totalorder %s19, 0
      %p123 = por %p121, %p122
      %p124 = scmp.ne.s32.totalorder %s110, %s111
      %p125 = scmp.eq.s32.totalorder %s20, 15
      %p126 = por %p124, %p125
      %p128 = scmp.ne.s32.totalorder %s111, %s127
      %p129 = scmp.eq.s32.totalorder %s20, 0
      %p130 = por %p128, %p129
      %p131 = scmp.le.s32.totalorder 1, %s14
      %p132 = scmp.lt.s32.totalorder %s14, 17
      %p133 = pnand %p131, %p132
      %p134 = pneg %p133
      // Predicated region
      $region9: #{tpu_custom_call.1} parent=5 // pred_check
        _
      $region10: #{tpu_custom_call.1} parent=5 // pred_check_branch
        %136 = sbr.rel (%p133) target = $region12
      $region11: #{tpu_custom_call.1} parent=5 // pred_region
        %s137 = ssub.s32 %s14, 1
      $region12: #{tpu_custom_call.1} parent=5 // pred_fallthru
        _
      %p138 = scmp.lt.s32.totalorder %s14, 16
      // Predicated region
      $region13: #{tpu_custom_call.1} parent=5 // pred_check
        %p139 = pneg %p138
      $region14: #{tpu_custom_call.1} parent=5 // pred_check_branch
        %141 = sbr.rel (%p139) target = $region16
      $region15: #{tpu_custom_call.1} parent=5 // pred_region
        // Predicated region
        $region17: #{tpu_custom_call.1} parent=15 // pred_check
          %p142 = pneg %p59
        $region18: #{tpu_custom_call.1} parent=15 // pred_check_branch
          %144 = sbr.rel (%p142) target = $region20
        $region19: #{tpu_custom_call.1} parent=15 // pred_region
          %s145 = smul.u32 %s21, 8
          %s146 = sadd.s32 %s145, %s23
          %s147 = smul.u32 49, %s146
          %p148 = scmp.lt.s32.totalorder %s22, 0
          %s149 = scalar_select %p148, %s22, 0
          %p150 = scmp.lt.s32.totalorder %s147, 783
          %s151 = scalar_select %p150, %s147, 783
          %s152 = smul.addr %s149, 784
          %s153 = sadd.s32 %s151, %s152
          %s154 = scalar_lea.vmem %s0, %s153
          %s155 = smul.u32 %s21, 8
          %s156 = sadd.s32 %s155, %s23
          %s157 = smul.u32 49, %s156
        $region20: #{tpu_custom_call.1} parent=15 // pred_fallthru
          _
        // Predicated region
        $region21: #{tpu_custom_call.1} parent=15 // pred_check
          %p158 = pneg %p89
        $region22: #{tpu_custom_call.1} parent=15 // pred_check_branch
          %160 = sbr.rel (%p158) target = $region24
        $region23: #{tpu_custom_call.1} parent=15 // pred_region
          %s161 = sand.u32 %s79, 1
          %s162 = scalar_lea.sflag [#allocation4], %s161
          %s163 = sand.u32 %s79, 1
          %s164 = smul.addr %s163, 6272
          %s165 = scalar_lea.vmem [#allocation3], %s164
          %s166 = smul.u32 %s21, 8
          %s167 = sadd.s32 %s166, %s23
          %s168 = smul.u32 784, %s167
          %s170 = ssub.s32 100352, 100352
          %171 = vsyncadd %s162, %s170
          %s172 = smul.addr %s168, 128
          %s173 = scalar_lea.hbm %s1, %s172
          %s174 = sshll.u32 %s165, 4
          %s175 = int_to_ptr.vmem [resolvable:$true] %s174
          %180 = dma.hbm_to_vmem [thread:$0]  %s173, 100352, %s175, %s162, 128, 128, 8
        $region24: #{tpu_custom_call.1} parent=15 // pred_fallthru
          _
      $region16: #{tpu_custom_call.1} parent=5 // pred_fallthru
        _
      %p181 = scmp.le.s32.totalorder 1, %s14
      %p182 = scmp.lt.s32.totalorder %s14, 17
      %p183 = pnand %p181, %p182
      %p184 = pneg %p183
      // Predicated region
      $region25: #{tpu_custom_call.1} parent=5 // pred_check
        _
      $region26: #{tpu_custom_call.1} parent=5 // pred_check_branch
        %186 = sbr.rel (%p183) target = $region28
      $region27: #{tpu_custom_call.1} parent=5 // pred_region
        %s187 = ssub.s32 %s14, 1
        %s188 = sand.u32 %s82, 1
        %s189 = scalar_lea.sflag [#allocation4], %s188
        %s190 = sand.u32 %s82, 1
        %s191 = smul.addr %s190, 6272
        %s192 = scalar_lea.vmem [#allocation3], %s191
        // Predicated region
        $region29: #{tpu_custom_call.1} parent=27 // pred_check
          %p193 = pneg %p95
        $region30: #{tpu_custom_call.1} parent=27 // pred_check_branch
          %195 = sbr.rel (%p193) target = $region32
        $region31: #{tpu_custom_call.1} parent=27 // pred_region
          %196 = dma.done %s189, 100352
        $region32: #{tpu_custom_call.1} parent=27 // pred_fallthru
          _
        %s197 = smul.u32 %s24, 8
        %s198 = sadd.s32 %s197, %s26
        %s199 = smul.u32 49, %s198
        %p200 = scmp.lt.s32.totalorder %s25, 0
        %s201 = scalar_select %p200, %s25, 0
        %p202 = scmp.lt.s32.totalorder %s199, 783
        %s203 = scalar_select %p202, %s199, 783
        %s204 = smul.addr %s201, 784
        %s205 = sadd.s32 %s203, %s204
        %s206 = scalar_lea.vmem %s0, %s205
        %p207 = pneg %p65
        %p208 = pneg %p62
        %s209 = sand.u32 %s82, 1
        %s210 = scalar_lea.sflag [#allocation4], %s209
        %s211 = sand.u32 %s82, 1
        %s212 = smul.addr %s211, 6272
        %s213 = scalar_lea.vmem [#allocation3], %s212
        %p214 = pneg %p95
        %p215 = pneg %p92
        %p216 = pneg %p123
        %p217 = pneg %p120
        %s218 = sand.u32 %s110, 1
        %s219 = scalar_lea.sflag [#allocation5], %s218
        %s220 = sand.u32 %s110, 1
        %s221 = smul.addr %s220, 2
        %s222 = scalar_lea.vmem [#allocation6], %s221
        %s223 = smul.u32 %s24, 8
        %s224 = sadd.s32 %s223, %s26
        %s225 = smul.u32 49, %s224
        %p226 = scmp.lt.s32.totalorder %s25, 0
        %s227 = scalar_select %p226, %s25, 0
        %p228 = scmp.lt.s32.totalorder %s225, 783
        %s229 = scalar_select %p228, %s225, 783
        %s230 = smul.addr %s227, 784
        %s231 = sadd.s32 %s229, %s230
        %s232 = scalar_lea.vmem %s0, %s231
        %s233 = smul.u32 %s24, 8
        %s234 = sadd.s32 %s233, %s26
        %s235 = smul.u32 49, %s234
        %s236 = smul.u32 %s24, 8
        %s237 = sadd.s32 %s236, %s26
        %s238 = smul.u32 784, %s237
        %p239 = scmp.eq.s32.totalorder %s26, 0
        // Predicated region
        $region33: #{tpu_custom_call.1} parent=27 // pred_check
          %p240 = pneg %p239
        $region34: #{tpu_custom_call.1} parent=27 // pred_check_branch
          %242 = sbr.rel (%p240) target = $region36
        $region35: #{tpu_custom_call.1} parent=27 // pred_region
          %vm243 = vcmask 123904
          %244 = vst.msk [vmem:[#allocation2] sm:$0x3] %vm243, 0.0
        $region36: #{tpu_custom_call.1} parent=27 // pred_fallthru
          _
        %v245 = vld [vmem:[%s232] sm:$0xff]
        %v246 = vld [vmem:[%s232 + $0x8] sm:$0xff]
        %v247 = vld [vmem:[%s232 + $0x10] sm:$0xff]
        %v248 = vld [vmem:[%s232 + $0x18] sm:$0xff]
        %v249 = vld [vmem:[%s232 + $0x20] sm:$0xff]
        %v250 = vld [vmem:[%s232 + $0x28] sm:$0xff]
        %v251 = vld [vmem:[%s232 + $0x30] sm:$0x1]
        %v252 = vunpack.c.l.bf16 %v245
        %v253 = vunpack.c.h.bf16 %v245
        %v254 = vunpack.c.l.bf16 %v246
        %v255 = vunpack.c.h.bf16 %v246
        %v256 = vunpack.c.l.bf16 %v247
        %v257 = vunpack.c.h.bf16 %v247
        %v258 = vunpack.c.l.bf16 %v248
        %v259 = vunpack.c.h.bf16 %v248
        %v260 = vunpack.c.l.bf16 %v249
        %v261 = vunpack.c.h.bf16 %v249
        %v262 = vunpack.c.l.bf16 %v250
        %v263 = vunpack.c.h.bf16 %v250
        %v264 = vunpack.c.l.bf16 %v251
        %v265 = vld [vmem:[#allocation2] sm:$0x3]
        %v266 = vld [vmem:[%s192] sm:$0xff]
        %v267 = vld [vmem:[%s192 + $0x8] sm:$0xff]
        %v268 = vld [vmem:[%s192 + $0x10] sm:$0xff]
        %v269 = vld [vmem:[%s192 + $0x18] sm:$0xff]
        %v270 = vld [vmem:[%s192 + $0x20] sm:$0xff]
        %v271 = vld [vmem:[%s192 + $0x28] sm:$0xff]
        %v272 = vld [vmem:[%s192 + $0x30] sm:$0xff]
        %v273 = vld [vmem:[%s192 + $0x38] sm:$0xff]
        %v274 = vld [vmem:[%s192 + $0x40] sm:$0xff]
        %v275 = vld [vmem:[%s192 + $0x48] sm:$0xff]
        %v276 = vld [vmem:[%s192 + $0x50] sm:$0xff]
        %v277 = vld [vmem:[%s192 + $0x58] sm:$0xff]
        %v278 = vld [vmem:[%s192 + $0x60] sm:$0xff]
        %v279 = vld [vmem:[%s192 + $0x68] sm:$0xff]
        %v280 = vld [vmem:[%s192 + $0x70] sm:$0xff]
        %v281 = vld [vmem:[%s192 + $0x78] sm:$0xff]
        %v282 = vld [vmem:[%s192 + $0x80] sm:$0xff]
        %v283 = vld [vmem:[%s192 + $0x88] sm:$0xff]
        %v284 = vld [vmem:[%s192 + $0x90] sm:$0xff]
        %v285 = vld [vmem:[%s192 + $0x98] sm:$0xff]
        %v286 = vld [vmem:[%s192 + $0xa0] sm:$0xff]
        %v287 = vld [vmem:[%s192 + $0xa8] sm:$0xff]
        %v288 = vld [vmem:[%s192 + $0xb0] sm:$0xff]
        %v289 = vld [vmem:[%s192 + $0xb8] sm:$0xff]
        %v290 = vld [vmem:[%s192 + $0xc0] sm:$0xff]
        %v291 = vld [vmem:[%s192 + $0xc8] sm:$0xff]
        %v292 = vld [vmem:[%s192 + $0xd0] sm:$0xff]
        %v293 = vld [vmem:[%s192 + $0xd8] sm:$0xff]
        %v294 = vld [vmem:[%s192 + $0xe0] sm:$0xff]
        %v295 = vld [vmem:[%s192 + $0xe8] sm:$0xff]
        %v296 = vld [vmem:[%s192 + $0xf0] sm:$0xff]
        %v297 = vld [vmem:[%s192 + $0xf8] sm:$0xff]
        %v298 = vld [vmem:[%s192 + $0x100] sm:$0xff]
        %v299 = vld [vmem:[%s192 + $0x108] sm:$0xff]
        %v300 = vld [vmem:[%s192 + $0x110] sm:$0xff]
        %v301 = vld [vmem:[%s192 + $0x118] sm:$0xff]
        %v302 = vld [vmem:[%s192 + $0x120] sm:$0xff]
        %v303 = vld [vmem:[%s192 + $0x128] sm:$0xff]
        %v304 = vld [vmem:[%s192 + $0x130] sm:$0xff]
        %v305 = vld [vmem:[%s192 + $0x138] sm:$0xff]
        %v306 = vld [vmem:[%s192 + $0x140] sm:$0xff]
        %v307 = vld [vmem:[%s192 + $0x148] sm:$0xff]
        %v308 = vld [vmem:[%s192 + $0x150] sm:$0xff]
        %v309 = vld [vmem:[%s192 + $0x158] sm:$0xff]
        %v310 = vld [vmem:[%s192 + $0x160] sm:$0xff]
        %v311 = vld [vmem:[%s192 + $0x168] sm:$0xff]
        %v312 = vld [vmem:[%s192 + $0x170] sm:$0xff]
        %v313 = vld [vmem:[%s192 + $0x178] sm:$0xff]
        %v314 = vld [vmem:[%s192 + $0x180] sm:$0xff]
        %v315 = vld [vmem:[%s192 + $0x188] sm:$0xff]
        %v316 = vld [vmem:[%s192 + $0x190] sm:$0xff]
        %v317 = vld [vmem:[%s192 + $0x198] sm:$0xff]
        %v318 = vld [vmem:[%s192 + $0x1a0] sm:$0xff]
        %v319 = vld [vmem:[%s192 + $0x1a8] sm:$0xff]
        %v320 = vld [vmem:[%s192 + $0x1b0] sm:$0xff]
        %v321 = vld [vmem:[%s192 + $0x1b8] sm:$0xff]
        %v322 = vld [vmem:[%s192 + $0x1c0] sm:$0xff]
        %v323 = vld [vmem:[%s192 + $0x1c8] sm:$0xff]
        %v324 = vld [vmem:[%s192 + $0x1d0] sm:$0xff]
        %v325 = vld [vmem:[%s192 + $0x1d8] sm:$0xff]
        %v326 = vld [vmem:[%s192 + $0x1e0] sm:$0xff]
        %v327 = vld [vmem:[%s192 + $0x1e8] sm:$0xff]
        %v328 = vld [vmem:[%s192 + $0x1f0] sm:$0xff]
        %v329 = vld [vmem:[%s192 + $0x1f8] sm:$0xff]
        %v330 = vld [vmem:[%s192 + $0x200] sm:$0xff]
        %v331 = vld [vmem:[%s192 + $0x208] sm:$0xff]
        %v332 = vld [vmem:[%s192 + $0x210] sm:$0xff]
        %v333 = vld [vmem:[%s192 + $0x218] sm:$0xff]
        %v334 = vld [vmem:[%s192 + $0x220] sm:$0xff]
        %v335 = vld [vmem:[%s192 + $0x228] sm:$0xff]
        %v336 = vld [vmem:[%s192 + $0x230] sm:$0xff]
        %v337 = vld [vmem:[%s192 + $0x238] sm:$0xff]
        %v338 = vld [vmem:[%s192 + $0x240] sm:$0xff]
        %v339 = vld [vmem:[%s192 + $0x248] sm:$0xff]
        %v340 = vld [vmem:[%s192 + $0x250] sm:$0xff]
        %v341 = vld [vmem:[%s192 + $0x258] sm:$0xff]
        %v342 = vld [vmem:[%s192 + $0x260] sm:$0xff]
        %v343 = vld [vmem:[%s192 + $0x268] sm:$0xff]
        %v344 = vld [vmem:[%s192 + $0x270] sm:$0xff]
        %v345 = vld [vmem:[%s192 + $0x278] sm:$0xff]
        %v346 = vld [vmem:[%s192 + $0x280] sm:$0xff]
        %v347 = vld [vmem:[%s192 + $0x288] sm:$0xff]
        %v348 = vld [vmem:[%s192 + $0x290] sm:$0xff]
        %v349 = vld [vmem:[%s192 + $0x298] sm:$0xff]
        %v350 = vld [vmem:[%s192 + $0x2a0] sm:$0xff]
        %v351 = vld [vmem:[%s192 + $0x2a8] sm:$0xff]
        %v352 = vld [vmem:[%s192 + $0x2b0] sm:$0xff]
        %v353 = vld [vmem:[%s192 + $0x2b8] sm:$0xff]
        %v354 = vld [vmem:[%s192 + $0x2c0] sm:$0xff]
        %v355 = vld [vmem:[%s192 + $0x2c8] sm:$0xff]
        %v356 = vld [vmem:[%s192 + $0x2d0] sm:$0xff]
        %v357 = vld [vmem:[%s192 + $0x2d8] sm:$0xff]
        %v358 = vld [vmem:[%s192 + $0x2e0] sm:$0xff]
        %v359 = vld [vmem:[%s192 + $0x2e8] sm:$0xff]
        %v360 = vld [vmem:[%s192 + $0x2f0] sm:$0xff]
        %v361 = vld [vmem:[%s192 + $0x2f8] sm:$0xff]
        %v362 = vld [vmem:[%s192 + $0x300] sm:$0xff]
        %v363 = vld [vmem:[%s192 + $0x308] sm:$0xff]
        %v364 = vld [vmem:[%s192 + $0x310] sm:$0xff]
        %v365 = vld [vmem:[%s192 + $0x318] sm:$0xff]
        %v366 = vld [vmem:[%s192 + $0x320] sm:$0xff]
        %v367 = vld [vmem:[%s192 + $0x328] sm:$0xff]
        %v368 = vld [vmem:[%s192 + $0x330] sm:$0xff]
        %v369 = vld [vmem:[%s192 + $0x338] sm:$0xff]
        %v370 = vld [vmem:[%s192 + $0x340] sm:$0xff]
        %v371 = vld [vmem:[%s192 + $0x348] sm:$0xff]
        %v372 = vld [vmem:[%s192 + $0x350] sm:$0xff]
        %v373 = vld [vmem:[%s192 + $0x358] sm:$0xff]
        %v374 = vld [vmem:[%s192 + $0x360] sm:$0xff]
        %v375 = vld [vmem:[%s192 + $0x368] sm:$0xff]
        %v376 = vld [vmem:[%s192 + $0x370] sm:$0xff]
        %v377 = vld [vmem:[%s192 + $0x378] sm:$0xff]
        %v378 = vld [vmem:[%s192 + $0x380] sm:$0xff]
        %v379 = vld [vmem:[%s192 + $0x388] sm:$0xff]
        %v380 = vld [vmem:[%s192 + $0x390] sm:$0xff]
        %v381 = vld [vmem:[%s192 + $0x398] sm:$0xff]
        %v382 = vld [vmem:[%s192 + $0x3a0] sm:$0xff]
        %v383 = vld [vmem:[%s192 + $0x3a8] sm:$0xff]
        %v384 = vld [vmem:[%s192 + $0x3b0] sm:$0xff]
        %v385 = vld [vmem:[%s192 + $0x3b8] sm:$0xff]
        %v386 = vld [vmem:[%s192 + $0x3c0] sm:$0xff]
        %v387 = vld [vmem:[%s192 + $0x3c8] sm:$0xff]
        %v388 = vld [vmem:[%s192 + $0x3d0] sm:$0xff]
        %v389 = vld [vmem:[%s192 + $0x3d8] sm:$0xff]
        %v390 = vld [vmem:[%s192 + $0x3e0] sm:$0xff]
        %v391 = vld [vmem:[%s192 + $0x3e8] sm:$0xff]
        %v392 = vld [vmem:[%s192 + $0x3f0] sm:$0xff]
        %v393 = vld [vmem:[%s192 + $0x3f8] sm:$0xff]
        %v394 = vld [vmem:[%s192 + $0x400] sm:$0xff]
        %v395 = vld [vmem:[%s192 + $0x408] sm:$0xff]
        %v396 = vld [vmem:[%s192 + $0x410] sm:$0xff]
        %v397 = vld [vmem:[%s192 + $0x418] sm:$0xff]
        %v398 = vld [vmem:[%s192 + $0x420] sm:$0xff]
        %v399 = vld [vmem:[%s192 + $0x428] sm:$0xff]
        %v400 = vld [vmem:[%s192 + $0x430] sm:$0xff]
        %v401 = vld [vmem:[%s192 + $0x438] sm:$0xff]
        %v402 = vld [vmem:[%s192 + $0x440] sm:$0xff]
        %v403 = vld [vmem:[%s192 + $0x448] sm:$0xff]
        %v404 = vld [vmem:[%s192 + $0x450] sm:$0xff]
        %v405 = vld [vmem:[%s192 + $0x458] sm:$0xff]
        %v406 = vld [vmem:[%s192 + $0x460] sm:$0xff]
        %v407 = vld [vmem:[%s192 + $0x468] sm:$0xff]
        %v408 = vld [vmem:[%s192 + $0x470] sm:$0xff]
        %v409 = vld [vmem:[%s192 + $0x478] sm:$0xff]
        %v410 = vld [vmem:[%s192 + $0x480] sm:$0xff]
        %v411 = vld [vmem:[%s192 + $0x488] sm:$0xff]
        %v412 = vld [vmem:[%s192 + $0x490] sm:$0xff]
        %v413 = vld [vmem:[%s192 + $0x498] sm:$0xff]
        %v414 = vld [vmem:[%s192 + $0x4a0] sm:$0xff]
        %v415 = vld [vmem:[%s192 + $0x4a8] sm:$0xff]
        %v416 = vld [vmem:[%s192 + $0x4b0] sm:$0xff]
        %v417 = vld [vmem:[%s192 + $0x4b8] sm:$0xff]
        %v418 = vld [vmem:[%s192 + $0x4c0] sm:$0xff]
        %v419 = vld [vmem:[%s192 + $0x4c8] sm:$0xff]
        %v420 = vld [vmem:[%s192 + $0x4d0] sm:$0xff]
        %v421 = vld [vmem:[%s192 + $0x4d8] sm:$0xff]
        %v422 = vld [vmem:[%s192 + $0x4e0] sm:$0xff]
        %v423 = vld [vmem:[%s192 + $0x4e8] sm:$0xff]
        %v424 = vld [vmem:[%s192 + $0x4f0] sm:$0xff]
        %v425 = vld [vmem:[%s192 + $0x4f8] sm:$0xff]
        %v426 = vld [vmem:[%s192 + $0x500] sm:$0xff]
        %v427 = vld [vmem:[%s192 + $0x508] sm:$0xff]
        %v428 = vld [vmem:[%s192 + $0x510] sm:$0xff]
        %v429 = vld [vmem:[%s192 + $0x518] sm:$0xff]
        %v430 = vld [vmem:[%s192 + $0x520] sm:$0xff]
        %v431 = vld [vmem:[%s192 + $0x528] sm:$0xff]
        %v432 = vld [vmem:[%s192 + $0x530] sm:$0xff]
        %v433 = vld [vmem:[%s192 + $0x538] sm:$0xff]
        %v434 = vld [vmem:[%s192 + $0x540] sm:$0xff]
        %v435 = vld [vmem:[%s192 + $0x548] sm:$0xff]
        %v436 = vld [vmem:[%s192 + $0x550] sm:$0xff]
        %v437 = vld [vmem:[%s192 + $0x558] sm:$0xff]
        %v438 = vld [vmem:[%s192 + $0x560] sm:$0xff]
        %v439 = vld [vmem:[%s192 + $0x568] sm:$0xff]
        %v440 = vld [vmem:[%s192 + $0x570] sm:$0xff]
        %v441 = vld [vmem:[%s192 + $0x578] sm:$0xff]
        %v442 = vld [vmem:[%s192 + $0x580] sm:$0xff]
        %v443 = vld [vmem:[%s192 + $0x588] sm:$0xff]
        %v444 = vld [vmem:[%s192 + $0x590] sm:$0xff]
        %v445 = vld [vmem:[%s192 + $0x598] sm:$0xff]
        %v446 = vld [vmem:[%s192 + $0x5a0] sm:$0xff]
        %v447 = vld [vmem:[%s192 + $0x5a8] sm:$0xff]
        %v448 = vld [vmem:[%s192 + $0x5b0] sm:$0xff]
        %v449 = vld [vmem:[%s192 + $0x5b8] sm:$0xff]
        %v450 = vld [vmem:[%s192 + $0x5c0] sm:$0xff]
        %v451 = vld [vmem:[%s192 + $0x5c8] sm:$0xff]
        %v452 = vld [vmem:[%s192 + $0x5d0] sm:$0xff]
        %v453 = vld [vmem:[%s192 + $0x5d8] sm:$0xff]
        %v454 = vld [vmem:[%s192 + $0x5e0] sm:$0xff]
        %v455 = vld [vmem:[%s192 + $0x5e8] sm:$0xff]
        %v456 = vld [vmem:[%s192 + $0x5f0] sm:$0xff]
        %v457 = vld [vmem:[%s192 + $0x5f8] sm:$0xff]
        %v458 = vld [vmem:[%s192 + $0x600] sm:$0xff]
        %v459 = vld [vmem:[%s192 + $0x608] sm:$0xff]
        %v460 = vld [vmem:[%s192 + $0x610] sm:$0xff]
        %v461 = vld [vmem:[%s192 + $0x618] sm:$0xff]
        %v462 = vld [vmem:[%s192 + $0x620] sm:$0xff]
        %v463 = vld [vmem:[%s192 + $0x628] sm:$0xff]
        %v464 = vld [vmem:[%s192 + $0x630] sm:$0xff]
        %v465 = vld [vmem:[%s192 + $0x638] sm:$0xff]
        %v466 = vld [vmem:[%s192 + $0x640] sm:$0xff]
        %v467 = vld [vmem:[%s192 + $0x648] sm:$0xff]
        %v468 = vld [vmem:[%s192 + $0x650] sm:$0xff]
        %v469 = vld [vmem:[%s192 + $0x658] sm:$0xff]
        %v470 = vld [vmem:[%s192 + $0x660] sm:$0xff]
        %v471 = vld [vmem:[%s192 + $0x668] sm:$0xff]
        %v472 = vld [vmem:[%s192 + $0x670] sm:$0xff]
        %v473 = vld [vmem:[%s192 + $0x678] sm:$0xff]
        %v474 = vld [vmem:[%s192 + $0x680] sm:$0xff]
        %v475 = vld [vmem:[%s192 + $0x688] sm:$0xff]
        %v476 = vld [vmem:[%s192 + $0x690] sm:$0xff]
        %v477 = vld [vmem:[%s192 + $0x698] sm:$0xff]
        %v478 = vld [vmem:[%s192 + $0x6a0] sm:$0xff]
        %v479 = vld [vmem:[%s192 + $0x6a8] sm:$0xff]
        %v480 = vld [vmem:[%s192 + $0x6b0] sm:$0xff]
        %v481 = vld [vmem:[%s192 + $0x6b8] sm:$0xff]
        %v482 = vld [vmem:[%s192 + $0x6c0] sm:$0xff]
        %v483 = vld [vmem:[%s192 + $0x6c8] sm:$0xff]
        %v484 = vld [vmem:[%s192 + $0x6d0] sm:$0xff]
        %v485 = vld [vmem:[%s192 + $0x6d8] sm:$0xff]
        %v486 = vld [vmem:[%s192 + $0x6e0] sm:$0xff]
        %v487 = vld [vmem:[%s192 + $0x6e8] sm:$0xff]
        %v488 = vld [vmem:[%s192 + $0x6f0] sm:$0xff]
        %v489 = vld [vmem:[%s192 + $0x6f8] sm:$0xff]
        %v490 = vld [vmem:[%s192 + $0x700] sm:$0xff]
        %v491 = vld [vmem:[%s192 + $0x708] sm:$0xff]
        %v492 = vld [vmem:[%s192 + $0x710] sm:$0xff]
        %v493 = vld [vmem:[%s192 + $0x718] sm:$0xff]
        %v494 = vld [vmem:[%s192 + $0x720] sm:$0xff]
        %v495 = vld [vmem:[%s192 + $0x728] sm:$0xff]
        %v496 = vld [vmem:[%s192 + $0x730] sm:$0xff]
        %v497 = vld [vmem:[%s192 + $0x738] sm:$0xff]
        %v498 = vld [vmem:[%s192 + $0x740] sm:$0xff]
        %v499 = vld [vmem:[%s192 + $0x748] sm:$0xff]
        %v500 = vld [vmem:[%s192 + $0x750] sm:$0xff]
        %v501 = vld [vmem:[%s192 + $0x758] sm:$0xff]
        %v502 = vld [vmem:[%s192 + $0x760] sm:$0xff]
        %v503 = vld [vmem:[%s192 + $0x768] sm:$0xff]
        %v504 = vld [vmem:[%s192 + $0x770] sm:$0xff]
        %v505 = vld [vmem:[%s192 + $0x778] sm:$0xff]
        %v506 = vld [vmem:[%s192 + $0x780] sm:$0xff]
        %v507 = vld [vmem:[%s192 + $0x788] sm:$0xff]
        %v508 = vld [vmem:[%s192 + $0x790] sm:$0xff]
        %v509 = vld [vmem:[%s192 + $0x798] sm:$0xff]
        %v510 = vld [vmem:[%s192 + $0x7a0] sm:$0xff]
        %v511 = vld [vmem:[%s192 + $0x7a8] sm:$0xff]
        %v512 = vld [vmem:[%s192 + $0x7b0] sm:$0xff]
        %v513 = vld [vmem:[%s192 + $0x7b8] sm:$0xff]
        %v514 = vld [vmem:[%s192 + $0x7c0] sm:$0xff]
        %v515 = vld [vmem:[%s192 + $0x7c8] sm:$0xff]
        %v516 = vld [vmem:[%s192 + $0x7d0] sm:$0xff]
        %v517 = vld [vmem:[%s192 + $0x7d8] sm:$0xff]
        %v518 = vld [vmem:[%s192 + $0x7e0] sm:$0xff]
        %v519 = vld [vmem:[%s192 + $0x7e8] sm:$0xff]
        %v520 = vld [vmem:[%s192 + $0x7f0] sm:$0xff]
        %v521 = vld [vmem:[%s192 + $0x7f8] sm:$0xff]
        %v522 = vld [vmem:[%s192 + $0x800] sm:$0xff]
        %v523 = vld [vmem:[%s192 + $0x808] sm:$0xff]
        %v524 = vld [vmem:[%s192 + $0x810] sm:$0xff]
        %v525 = vld [vmem:[%s192 + $0x818] sm:$0xff]
        %v526 = vld [vmem:[%s192 + $0x820] sm:$0xff]
        %v527 = vld [vmem:[%s192 + $0x828] sm:$0xff]
        %v528 = vld [vmem:[%s192 + $0x830] sm:$0xff]
        %v529 = vld [vmem:[%s192 + $0x838] sm:$0xff]
        %v530 = vld [vmem:[%s192 + $0x840] sm:$0xff]
        %v531 = vld [vmem:[%s192 + $0x848] sm:$0xff]
        %v532 = vld [vmem:[%s192 + $0x850] sm:$0xff]
        %v533 = vld [vmem:[%s192 + $0x858] sm:$0xff]
        %v534 = vld [vmem:[%s192 + $0x860] sm:$0xff]
        %v535 = vld [vmem:[%s192 + $0x868] sm:$0xff]
        %v536 = vld [vmem:[%s192 + $0x870] sm:$0xff]
        %v537 = vld [vmem:[%s192 + $0x878] sm:$0xff]
        %v538 = vld [vmem:[%s192 + $0x880] sm:$0xff]
        %v539 = vld [vmem:[%s192 + $0x888] sm:$0xff]
        %v540 = vld [vmem:[%s192 + $0x890] sm:$0xff]
        %v541 = vld [vmem:[%s192 + $0x898] sm:$0xff]
        %v542 = vld [vmem:[%s192 + $0x8a0] sm:$0xff]
        %v543 = vld [vmem:[%s192 + $0x8a8] sm:$0xff]
        %v544 = vld [vmem:[%s192 + $0x8b0] sm:$0xff]
        %v545 = vld [vmem:[%s192 + $0x8b8] sm:$0xff]
        %v546 = vld [vmem:[%s192 + $0x8c0] sm:$0xff]
        %v547 = vld [vmem:[%s192 + $0x8c8] sm:$0xff]
        %v548 = vld [vmem:[%s192 + $0x8d0] sm:$0xff]
        %v549 = vld [vmem:[%s192 + $0x8d8] sm:$0xff]
        %v550 = vld [vmem:[%s192 + $0x8e0] sm:$0xff]
        %v551 = vld [vmem:[%s192 + $0x8e8] sm:$0xff]
        %v552 = vld [vmem:[%s192 + $0x8f0] sm:$0xff]
        %v553 = vld [vmem:[%s192 + $0x8f8] sm:$0xff]
        %v554 = vld [vmem:[%s192 + $0x900] sm:$0xff]
        %v555 = vld [vmem:[%s192 + $0x908] sm:$0xff]
        %v556 = vld [vmem:[%s192 + $0x910] sm:$0xff]
        %v557 = vld [vmem:[%s192 + $0x918] sm:$0xff]
        %v558 = vld [vmem:[%s192 + $0x920] sm:$0xff]
        %v559 = vld [vmem:[%s192 + $0x928] sm:$0xff]
        %v560 = vld [vmem:[%s192 + $0x930] sm:$0xff]
        %v561 = vld [vmem:[%s192 + $0x938] sm:$0xff]
        %v562 = vld [vmem:[%s192 + $0x940] sm:$0xff]
        %v563 = vld [vmem:[%s192 + $0x948] sm:$0xff]
        %v564 = vld [vmem:[%s192 + $0x950] sm:$0xff]
        %v565 = vld [vmem:[%s192 + $0x958] sm:$0xff]
        %v566 = vld [vmem:[%s192 + $0x960] sm:$0xff]
        %v567 = vld [vmem:[%s192 + $0x968] sm:$0xff]
        %v568 = vld [vmem:[%s192 + $0x970] sm:$0xff]
        %v569 = vld [vmem:[%s192 + $0x978] sm:$0xff]
        %v570 = vld [vmem:[%s192 + $0x980] sm:$0xff]
        %v571 = vld [vmem:[%s192 + $0x988] sm:$0xff]
        %v572 = vld [vmem:[%s192 + $0x990] sm:$0xff]
        %v573 = vld [vmem:[%s192 + $0x998] sm:$0xff]
        %v574 = vld [vmem:[%s192 + $0x9a0] sm:$0xff]
        %v575 = vld [vmem:[%s192 + $0x9a8] sm:$0xff]
        %v576 = vld [vmem:[%s192 + $0x9b0] sm:$0xff]
        %v577 = vld [vmem:[%s192 + $0x9b8] sm:$0xff]
        %v578 = vld [vmem:[%s192 + $0x9c0] sm:$0xff]
        %v579 = vld [vmem:[%s192 + $0x9c8] sm:$0xff]
        %v580 = vld [vmem:[%s192 + $0x9d0] sm:$0xff]
        %v581 = vld [vmem:[%s192 + $0x9d8] sm:$0xff]
        %v582 = vld [vmem:[%s192 + $0x9e0] sm:$0xff]
        %v583 = vld [vmem:[%s192 + $0x9e8] sm:$0xff]
        %v584 = vld [vmem:[%s192 + $0x9f0] sm:$0xff]
        %v585 = vld [vmem:[%s192 + $0x9f8] sm:$0xff]
        %v586 = vld [vmem:[%s192 + $0xa00] sm:$0xff]
        %v587 = vld [vmem:[%s192 + $0xa08] sm:$0xff]
        %v588 = vld [vmem:[%s192 + $0xa10] sm:$0xff]
        %v589 = vld [vmem:[%s192 + $0xa18] sm:$0xff]
        %v590 = vld [vmem:[%s192 + $0xa20] sm:$0xff]
        %v591 = vld [vmem:[%s192 + $0xa28] sm:$0xff]
        %v592 = vld [vmem:[%s192 + $0xa30] sm:$0xff]
        %v593 = vld [vmem:[%s192 + $0xa38] sm:$0xff]
        %v594 = vld [vmem:[%s192 + $0xa40] sm:$0xff]
        %v595 = vld [vmem:[%s192 + $0xa48] sm:$0xff]
        %v596 = vld [vmem:[%s192 + $0xa50] sm:$0xff]
        %v597 = vld [vmem:[%s192 + $0xa58] sm:$0xff]
        %v598 = vld [vmem:[%s192 + $0xa60] sm:$0xff]
        %v599 = vld [vmem:[%s192 + $0xa68] sm:$0xff]
        %v600 = vld [vmem:[%s192 + $0xa70] sm:$0xff]
        %v601 = vld [vmem:[%s192 + $0xa78] sm:$0xff]
        %v602 = vld [vmem:[%s192 + $0xa80] sm:$0xff]
        %v603 = vld [vmem:[%s192 + $0xa88] sm:$0xff]
        %v604 = vld [vmem:[%s192 + $0xa90] sm:$0xff]
        %v605 = vld [vmem:[%s192 + $0xa98] sm:$0xff]
        %v606 = vld [vmem:[%s192 + $0xaa0] sm:$0xff]
        %v607 = vld [vmem:[%s192 + $0xaa8] sm:$0xff]
        %v608 = vld [vmem:[%s192 + $0xab0] sm:$0xff]
        %v609 = vld [vmem:[%s192 + $0xab8] sm:$0xff]
        %v610 = vld [vmem:[%s192 + $0xac0] sm:$0xff]
        %v611 = vld [vmem:[%s192 + $0xac8] sm:$0xff]
        %v612 = vld [vmem:[%s192 + $0xad0] sm:$0xff]
        %v613 = vld [vmem:[%s192 + $0xad8] sm:$0xff]
        %v614 = vld [vmem:[%s192 + $0xae0] sm:$0xff]
        %v615 = vld [vmem:[%s192 + $0xae8] sm:$0xff]
        %v616 = vld [vmem:[%s192 + $0xaf0] sm:$0xff]
        %v617 = vld [vmem:[%s192 + $0xaf8] sm:$0xff]
        %v618 = vld [vmem:[%s192 + $0xb00] sm:$0xff]
        %v619 = vld [vmem:[%s192 + $0xb08] sm:$0xff]
        %v620 = vld [vmem:[%s192 + $0xb10] sm:$0xff]
        %v621 = vld [vmem:[%s192 + $0xb18] sm:$0xff]
        %v622 = vld [vmem:[%s192 + $0xb20] sm:$0xff]
        %v623 = vld [vmem:[%s192 + $0xb28] sm:$0xff]
        %v624 = vld [vmem:[%s192 + $0xb30] sm:$0xff]
        %v625 = vld [vmem:[%s192 + $0xb38] sm:$0xff]
        %v626 = vld [vmem:[%s192 + $0xb40] sm:$0xff]
        %v627 = vld [vmem:[%s192 + $0xb48] sm:$0xff]
        %v628 = vld [vmem:[%s192 + $0xb50] sm:$0xff]
        %v629 = vld [vmem:[%s192 + $0xb58] sm:$0xff]
        %v630 = vld [vmem:[%s192 + $0xb60] sm:$0xff]
        %v631 = vld [vmem:[%s192 + $0xb68] sm:$0xff]
        %v632 = vld [vmem:[%s192 + $0xb70] sm:$0xff]
        %v633 = vld [vmem:[%s192 + $0xb78] sm:$0xff]
        %v634 = vld [vmem:[%s192 + $0xb80] sm:$0xff]
        %v635 = vld [vmem:[%s192 + $0xb88] sm:$0xff]
        %v636 = vld [vmem:[%s192 + $0xb90] sm:$0xff]
        %v637 = vld [vmem:[%s192 + $0xb98] sm:$0xff]
        %v638 = vld [vmem:[%s192 + $0xba0] sm:$0xff]
        %v639 = vld [vmem:[%s192 + $0xba8] sm:$0xff]
        %v640 = vld [vmem:[%s192 + $0xbb0] sm:$0xff]
        %v641 = vld [vmem:[%s192 + $0xbb8] sm:$0xff]
        %v642 = vld [vmem:[%s192 + $0xbc0] sm:$0xff]
        %v643 = vld [vmem:[%s192 + $0xbc8] sm:$0xff]
        %v644 = vld [vmem:[%s192 + $0xbd0] sm:$0xff]
        %v645 = vld [vmem:[%s192 + $0xbd8] sm:$0xff]
        %v646 = vld [vmem:[%s192 + $0xbe0] sm:$0xff]
        %v647 = vld [vmem:[%s192 + $0xbe8] sm:$0xff]
        %v648 = vld [vmem:[%s192 + $0xbf0] sm:$0xff]
        %v649 = vld [vmem:[%s192 + $0xbf8] sm:$0xff]
        %v650 = vld [vmem:[%s192 + $0xc00] sm:$0xff]
        %v651 = vld [vmem:[%s192 + $0xc08] sm:$0xff]
        %v652 = vld [vmem:[%s192 + $0xc10] sm:$0xff]
        %v653 = vld [vmem:[%s192 + $0xc18] sm:$0xff]
        %v654 = vld [vmem:[%s192 + $0xc20] sm:$0xff]
        %v655 = vld [vmem:[%s192 + $0xc28] sm:$0xff]
        %v656 = vld [vmem:[%s192 + $0xc30] sm:$0xff]
        %v657 = vld [vmem:[%s192 + $0xc38] sm:$0xff]
        %v658 = vld [vmem:[%s192 + $0xc40] sm:$0xff]
        %v659 = vld [vmem:[%s192 + $0xc48] sm:$0xff]
        %v660 = vld [vmem:[%s192 + $0xc50] sm:$0xff]
        %v661 = vld [vmem:[%s192 + $0xc58] sm:$0xff]
        %v662 = vld [vmem:[%s192 + $0xc60] sm:$0xff]
        %v663 = vld [vmem:[%s192 + $0xc68] sm:$0xff]
        %v664 = vld [vmem:[%s192 + $0xc70] sm:$0xff]
        %v665 = vld [vmem:[%s192 + $0xc78] sm:$0xff]
        %v666 = vld [vmem:[%s192 + $0xc80] sm:$0xff]
        %v667 = vld [vmem:[%s192 + $0xc88] sm:$0xff]
        %v668 = vld [vmem:[%s192 + $0xc90] sm:$0xff]
        %v669 = vld [vmem:[%s192 + $0xc98] sm:$0xff]
        %v670 = vld [vmem:[%s192 + $0xca0] sm:$0xff]
        %v671 = vld [vmem:[%s192 + $0xca8] sm:$0xff]
        %v672 = vld [vmem:[%s192 + $0xcb0] sm:$0xff]
        %v673 = vld [vmem:[%s192 + $0xcb8] sm:$0xff]
        %v674 = vld [vmem:[%s192 + $0xcc0] sm:$0xff]
        %v675 = vld [vmem:[%s192 + $0xcc8] sm:$0xff]
        %v676 = vld [vmem:[%s192 + $0xcd0] sm:$0xff]
        %v677 = vld [vmem:[%s192 + $0xcd8] sm:$0xff]
        %v678 = vld [vmem:[%s192 + $0xce0] sm:$0xff]
        %v679 = vld [vmem:[%s192 + $0xce8] sm:$0xff]
        %v680 = vld [vmem:[%s192 + $0xcf0] sm:$0xff]
        %v681 = vld [vmem:[%s192 + $0xcf8] sm:$0xff]
        %v682 = vld [vmem:[%s192 + $0xd00] sm:$0xff]
        %v683 = vld [vmem:[%s192 + $0xd08] sm:$0xff]
        %v684 = vld [vmem:[%s192 + $0xd10] sm:$0xff]
        %v685 = vld [vmem:[%s192 + $0xd18] sm:$0xff]
        %v686 = vld [vmem:[%s192 + $0xd20] sm:$0xff]
        %v687 = vld [vmem:[%s192 + $0xd28] sm:$0xff]
        %v688 = vld [vmem:[%s192 + $0xd30] sm:$0xff]
        %v689 = vld [vmem:[%s192 + $0xd38] sm:$0xff]
        %v690 = vld [vmem:[%s192 + $0xd40] sm:$0xff]
        %v691 = vld [vmem:[%s192 + $0xd48] sm:$0xff]
        %v692 = vld [vmem:[%s192 + $0xd50] sm:$0xff]
        %v693 = vld [vmem:[%s192 + $0xd58] sm:$0xff]
        %v694 = vld [vmem:[%s192 + $0xd60] sm:$0xff]
        %v695 = vld [vmem:[%s192 + $0xd68] sm:$0xff]
        %v696 = vld [vmem:[%s192 + $0xd70] sm:$0xff]
        %v697 = vld [vmem:[%s192 + $0xd78] sm:$0xff]
        %v698 = vld [vmem:[%s192 + $0xd80] sm:$0xff]
        %v699 = vld [vmem:[%s192 + $0xd88] sm:$0xff]
        %v700 = vld [vmem:[%s192 + $0xd90] sm:$0xff]
        %v701 = vld [vmem:[%s192 + $0xd98] sm:$0xff]
        %v702 = vld [vmem:[%s192 + $0xda0] sm:$0xff]
        %v703 = vld [vmem:[%s192 + $0xda8] sm:$0xff]
        %v704 = vld [vmem:[%s192 + $0xdb0] sm:$0xff]
        %v705 = vld [vmem:[%s192 + $0xdb8] sm:$0xff]
        %v706 = vld [vmem:[%s192 + $0xdc0] sm:$0xff]
        %v707 = vld [vmem:[%s192 + $0xdc8] sm:$0xff]
        %v708 = vld [vmem:[%s192 + $0xdd0] sm:$0xff]
        %v709 = vld [vmem:[%s192 + $0xdd8] sm:$0xff]
        %v710 = vld [vmem:[%s192 + $0xde0] sm:$0xff]
        %v711 = vld [vmem:[%s192 + $0xde8] sm:$0xff]
        %v712 = vld [vmem:[%s192 + $0xdf0] sm:$0xff]
        %v713 = vld [vmem:[%s192 + $0xdf8] sm:$0xff]
        %v714 = vld [vmem:[%s192 + $0xe00] sm:$0xff]
        %v715 = vld [vmem:[%s192 + $0xe08] sm:$0xff]
        %v716 = vld [vmem:[%s192 + $0xe10] sm:$0xff]
        %v717 = vld [vmem:[%s192 + $0xe18] sm:$0xff]
        %v718 = vld [vmem:[%s192 + $0xe20] sm:$0xff]
        %v719 = vld [vmem:[%s192 + $0xe28] sm:$0xff]
        %v720 = vld [vmem:[%s192 + $0xe30] sm:$0xff]
        %v721 = vld [vmem:[%s192 + $0xe38] sm:$0xff]
        %v722 = vld [vmem:[%s192 + $0xe40] sm:$0xff]
        %v723 = vld [vmem:[%s192 + $0xe48] sm:$0xff]
        %v724 = vld [vmem:[%s192 + $0xe50] sm:$0xff]
        %v725 = vld [vmem:[%s192 + $0xe58] sm:$0xff]
        %v726 = vld [vmem:[%s192 + $0xe60] sm:$0xff]
        %v727 = vld [vmem:[%s192 + $0xe68] sm:$0xff]
        %v728 = vld [vmem:[%s192 + $0xe70] sm:$0xff]
        %v729 = vld [vmem:[%s192 + $0xe78] sm:$0xff]
        %v730 = vld [vmem:[%s192 + $0xe80] sm:$0xff]
        %v731 = vld [vmem:[%s192 + $0xe88] sm:$0xff]
        %v732 = vld [vmem:[%s192 + $0xe90] sm:$0xff]
        %v733 = vld [vmem:[%s192 + $0xe98] sm:$0xff]
        %v734 = vld [vmem:[%s192 + $0xea0] sm:$0xff]
        %v735 = vld [vmem:[%s192 + $0xea8] sm:$0xff]
        %v736 = vld [vmem:[%s192 + $0xeb0] sm:$0xff]
        %v737 = vld [vmem:[%s192 + $0xeb8] sm:$0xff]
        %v738 = vld [vmem:[%s192 + $0xec0] sm:$0xff]
        %v739 = vld [vmem:[%s192 + $0xec8] sm:$0xff]
        %v740 = vld [vmem:[%s192 + $0xed0] sm:$0xff]
        %v741 = vld [vmem:[%s192 + $0xed8] sm:$0xff]
        %v742 = vld [vmem:[%s192 + $0xee0] sm:$0xff]
        %v743 = vld [vmem:[%s192 + $0xee8] sm:$0xff]
        %v744 = vld [vmem:[%s192 + $0xef0] sm:$0xff]
        %v745 = vld [vmem:[%s192 + $0xef8] sm:$0xff]
        %v746 = vld [vmem:[%s192 + $0xf00] sm:$0xff]
        %v747 = vld [vmem:[%s192 + $0xf08] sm:$0xff]
        %v748 = vld [vmem:[%s192 + $0xf10] sm:$0xff]
        %v749 = vld [vmem:[%s192 + $0xf18] sm:$0xff]
        %v750 = vld [vmem:[%s192 + $0xf20] sm:$0xff]
        %v751 = vld [vmem:[%s192 + $0xf28] sm:$0xff]
        %v752 = vld [vmem:[%s192 + $0xf30] sm:$0xff]
        %v753 = vld [vmem:[%s192 + $0xf38] sm:$0xff]
        %v754 = vld [vmem:[%s192 + $0xf40] sm:$0xff]
        %v755 = vld [vmem:[%s192 + $0xf48] sm:$0xff]
        %v756 = vld [vmem:[%s192 + $0xf50] sm:$0xff]
        %v757 = vld [vmem:[%s192 + $0xf58] sm:$0xff]
        %v758 = vld [vmem:[%s192 + $0xf60] sm:$0xff]
        %v759 = vld [vmem:[%s192 + $0xf68] sm:$0xff]
        %v760 = vld [vmem:[%s192 + $0xf70] sm:$0xff]
        %v761 = vld [vmem:[%s192 + $0xf78] sm:$0xff]
        %v762 = vld [vmem:[%s192 + $0xf80] sm:$0xff]
        %v763 = vld [vmem:[%s192 + $0xf88] sm:$0xff]
        %v764 = vld [vmem:[%s192 + $0xf90] sm:$0xff]
        %v765 = vld [vmem:[%s192 + $0xf98] sm:$0xff]
        %v766 = vld [vmem:[%s192 + $0xfa0] sm:$0xff]
        %v767 = vld [vmem:[%s192 + $0xfa8] sm:$0xff]
        %v768 = vld [vmem:[%s192 + $0xfb0] sm:$0xff]
        %v769 = vld [vmem:[%s192 + $0xfb8] sm:$0xff]
        %v770 = vld [vmem:[%s192 + $0xfc0] sm:$0xff]
        %v771 = vld [vmem:[%s192 + $0xfc8] sm:$0xff]
        %v772 = vld [vmem:[%s192 + $0xfd0] sm:$0xff]
        %v773 = vld [vmem:[%s192 + $0xfd8] sm:$0xff]
        %v774 = vld [vmem:[%s192 + $0xfe0] sm:$0xff]
        %v775 = vld [vmem:[%s192 + $0xfe8] sm:$0xff]
        %v776 = vld [vmem:[%s192 + $0xff0] sm:$0xff]
        %v777 = vld [vmem:[%s192 + $0xff8] sm:$0xff]
        %v778 = vld [vmem:[%s192 + $0x1000] sm:$0xff]
        %v779 = vld [vmem:[%s192 + $0x1008] sm:$0xff]
        %v780 = vld [vmem:[%s192 + $0x1010] sm:$0xff]
        %v781 = vld [vmem:[%s192 + $0x1018] sm:$0xff]
        %v782 = vld [vmem:[%s192 + $0x1020] sm:$0xff]
        %v783 = vld [vmem:[%s192 + $0x1028] sm:$0xff]
        %v784 = vld [vmem:[%s192 + $0x1030] sm:$0xff]
        %v785 = vld [vmem:[%s192 + $0x1038] sm:$0xff]
        %v786 = vld [vmem:[%s192 + $0x1040] sm:$0xff]
        %v787 = vld [vmem:[%s192 + $0x1048] sm:$0xff]
        %v788 = vld [vmem:[%s192 + $0x1050] sm:$0xff]
        %v789 = vld [vmem:[%s192 + $0x1058] sm:$0xff]
        %v790 = vld [vmem:[%s192 + $0x1060] sm:$0xff]
        %v791 = vld [vmem:[%s192 + $0x1068] sm:$0xff]
        %v792 = vld [vmem:[%s192 + $0x1070] sm:$0xff]
        %v793 = vld [vmem:[%s192 + $0x1078] sm:$0xff]
        %v794 = vld [vmem:[%s192 + $0x1080] sm:$0xff]
        %v795 = vld [vmem:[%s192 + $0x1088] sm:$0xff]
        %v796 = vld [vmem:[%s192 + $0x1090] sm:$0xff]
        %v797 = vld [vmem:[%s192 + $0x1098] sm:$0xff]
        %v798 = vld [vmem:[%s192 + $0x10a0] sm:$0xff]
        %v799 = vld [vmem:[%s192 + $0x10a8] sm:$0xff]
        %v800 = vld [vmem:[%s192 + $0x10b0] sm:$0xff]
        %v801 = vld [vmem:[%s192 + $0x10b8] sm:$0xff]
        %v802 = vld [vmem:[%s192 + $0x10c0] sm:$0xff]
        %v803 = vld [vmem:[%s192 + $0x10c8] sm:$0xff]
        %v804 = vld [vmem:[%s192 + $0x10d0] sm:$0xff]
        %v805 = vld [vmem:[%s192 + $0x10d8] sm:$0xff]
        %v806 = vld [vmem:[%s192 + $0x10e0] sm:$0xff]
        %v807 = vld [vmem:[%s192 + $0x10e8] sm:$0xff]
        %v808 = vld [vmem:[%s192 + $0x10f0] sm:$0xff]
        %v809 = vld [vmem:[%s192 + $0x10f8] sm:$0xff]
        %v810 = vld [vmem:[%s192 + $0x1100] sm:$0xff]
        %v811 = vld [vmem:[%s192 + $0x1108] sm:$0xff]
        %v812 = vld [vmem:[%s192 + $0x1110] sm:$0xff]
        %v813 = vld [vmem:[%s192 + $0x1118] sm:$0xff]
        %v814 = vld [vmem:[%s192 + $0x1120] sm:$0xff]
        %v815 = vld [vmem:[%s192 + $0x1128] sm:$0xff]
        %v816 = vld [vmem:[%s192 + $0x1130] sm:$0xff]
        %v817 = vld [vmem:[%s192 + $0x1138] sm:$0xff]
        %v818 = vld [vmem:[%s192 + $0x1140] sm:$0xff]
        %v819 = vld [vmem:[%s192 + $0x1148] sm:$0xff]
        %v820 = vld [vmem:[%s192 + $0x1150] sm:$0xff]
        %v821 = vld [vmem:[%s192 + $0x1158] sm:$0xff]
        %v822 = vld [vmem:[%s192 + $0x1160] sm:$0xff]
        %v823 = vld [vmem:[%s192 + $0x1168] sm:$0xff]
        %v824 = vld [vmem:[%s192 + $0x1170] sm:$0xff]
        %v825 = vld [vmem:[%s192 + $0x1178] sm:$0xff]
        %v826 = vld [vmem:[%s192 + $0x1180] sm:$0xff]
        %v827 = vld [vmem:[%s192 + $0x1188] sm:$0xff]
        %v828 = vld [vmem:[%s192 + $0x1190] sm:$0xff]
        %v829 = vld [vmem:[%s192 + $0x1198] sm:$0xff]
        %v830 = vld [vmem:[%s192 + $0x11a0] sm:$0xff]
        %v831 = vld [vmem:[%s192 + $0x11a8] sm:$0xff]
        %v832 = vld [vmem:[%s192 + $0x11b0] sm:$0xff]
        %v833 = vld [vmem:[%s192 + $0x11b8] sm:$0xff]
        %v834 = vld [vmem:[%s192 + $0x11c0] sm:$0xff]
        %v835 = vld [vmem:[%s192 + $0x11c8] sm:$0xff]
        %v836 = vld [vmem:[%s192 + $0x11d0] sm:$0xff]
        %v837 = vld [vmem:[%s192 + $0x11d8] sm:$0xff]
        %v838 = vld [vmem:[%s192 + $0x11e0] sm:$0xff]
        %v839 = vld [vmem:[%s192 + $0x11e8] sm:$0xff]
        %v840 = vld [vmem:[%s192 + $0x11f0] sm:$0xff]
        %v841 = vld [vmem:[%s192 + $0x11f8] sm:$0xff]
        %v842 = vld [vmem:[%s192 + $0x1200] sm:$0xff]
        %v843 = vld [vmem:[%s192 + $0x1208] sm:$0xff]
        %v844 = vld [vmem:[%s192 + $0x1210] sm:$0xff]
        %v845 = vld [vmem:[%s192 + $0x1218] sm:$0xff]
        %v846 = vld [vmem:[%s192 + $0x1220] sm:$0xff]
        %v847 = vld [vmem:[%s192 + $0x1228] sm:$0xff]
        %v848 = vld [vmem:[%s192 + $0x1230] sm:$0xff]
        %v849 = vld [vmem:[%s192 + $0x1238] sm:$0xff]
        %v850 = vld [vmem:[%s192 + $0x1240] sm:$0xff]
        %v851 = vld [vmem:[%s192 + $0x1248] sm:$0xff]
        %v852 = vld [vmem:[%s192 + $0x1250] sm:$0xff]
        %v853 = vld [vmem:[%s192 + $0x1258] sm:$0xff]
        %v854 = vld [vmem:[%s192 + $0x1260] sm:$0xff]
        %v855 = vld [vmem:[%s192 + $0x1268] sm:$0xff]
        %v856 = vld [vmem:[%s192 + $0x1270] sm:$0xff]
        %v857 = vld [vmem:[%s192 + $0x1278] sm:$0xff]
        %v858 = vld [vmem:[%s192 + $0x1280] sm:$0xff]
        %v859 = vld [vmem:[%s192 + $0x1288] sm:$0xff]
        %v860 = vld [vmem:[%s192 + $0x1290] sm:$0xff]
        %v861 = vld [vmem:[%s192 + $0x1298] sm:$0xff]
        %v862 = vld [vmem:[%s192 + $0x12a0] sm:$0xff]
        %v863 = vld [vmem:[%s192 + $0x12a8] sm:$0xff]
        %v864 = vld [vmem:[%s192 + $0x12b0] sm:$0xff]
        %v865 = vld [vmem:[%s192 + $0x12b8] sm:$0xff]
        %v866 = vld [vmem:[%s192 + $0x12c0] sm:$0xff]
        %v867 = vld [vmem:[%s192 + $0x12c8] sm:$0xff]
        %v868 = vld [vmem:[%s192 + $0x12d0] sm:$0xff]
        %v869 = vld [vmem:[%s192 + $0x12d8] sm:$0xff]
        %v870 = vld [vmem:[%s192 + $0x12e0] sm:$0xff]
        %v871 = vld [vmem:[%s192 + $0x12e8] sm:$0xff]
        %v872 = vld [vmem:[%s192 + $0x12f0] sm:$0xff]
        %v873 = vld [vmem:[%s192 + $0x12f8] sm:$0xff]
        %v874 = vld [vmem:[%s192 + $0x1300] sm:$0xff]
        %v875 = vld [vmem:[%s192 + $0x1308] sm:$0xff]
        %v876 = vld [vmem:[%s192 + $0x1310] sm:$0xff]
        %v877 = vld [vmem:[%s192 + $0x1318] sm:$0xff]
        %v878 = vld [vmem:[%s192 + $0x1320] sm:$0xff]
        %v879 = vld [vmem:[%s192 + $0x1328] sm:$0xff]
        %v880 = vld [vmem:[%s192 + $0x1330] sm:$0xff]
        %v881 = vld [vmem:[%s192 + $0x1338] sm:$0xff]
        %v882 = vld [vmem:[%s192 + $0x1340] sm:$0xff]
        %v883 = vld [vmem:[%s192 + $0x1348] sm:$0xff]
        %v884 = vld [vmem:[%s192 + $0x1350] sm:$0xff]
        %v885 = vld [vmem:[%s192 + $0x1358] sm:$0xff]
        %v886 = vld [vmem:[%s192 + $0x1360] sm:$0xff]
        %v887 = vld [vmem:[%s192 + $0x1368] sm:$0xff]
        %v888 = vld [vmem:[%s192 + $0x1370] sm:$0xff]
        %v889 = vld [vmem:[%s192 + $0x1378] sm:$0xff]
        %v890 = vld [vmem:[%s192 + $0x1380] sm:$0xff]
        %v891 = vld [vmem:[%s192 + $0x1388] sm:$0xff]
        %v892 = vld [vmem:[%s192 + $0x1390] sm:$0xff]
        %v893 = vld [vmem:[%s192 + $0x1398] sm:$0xff]
        %v894 = vld [vmem:[%s192 + $0x13a0] sm:$0xff]
        %v895 = vld [vmem:[%s192 + $0x13a8] sm:$0xff]
        %v896 = vld [vmem:[%s192 + $0x13b0] sm:$0xff]
        %v897 = vld [vmem:[%s192 + $0x13b8] sm:$0xff]
        %v898 = vld [vmem:[%s192 + $0x13c0] sm:$0xff]
        %v899 = vld [vmem:[%s192 + $0x13c8] sm:$0xff]
        %v900 = vld [vmem:[%s192 + $0x13d0] sm:$0xff]
        %v901 = vld [vmem:[%s192 + $0x13d8] sm:$0xff]
        %v902 = vld [vmem:[%s192 + $0x13e0] sm:$0xff]
        %v903 = vld [vmem:[%s192 + $0x13e8] sm:$0xff]
        %v904 = vld [vmem:[%s192 + $0x13f0] sm:$0xff]
        %v905 = vld [vmem:[%s192 + $0x13f8] sm:$0xff]
        %v906 = vld [vmem:[%s192 + $0x1400] sm:$0xff]
        %v907 = vld [vmem:[%s192 + $0x1408] sm:$0xff]
        %v908 = vld [vmem:[%s192 + $0x1410] sm:$0xff]
        %v909 = vld [vmem:[%s192 + $0x1418] sm:$0xff]
        %v910 = vld [vmem:[%s192 + $0x1420] sm:$0xff]
        %v911 = vld [vmem:[%s192 + $0x1428] sm:$0xff]
        %v912 = vld [vmem:[%s192 + $0x1430] sm:$0xff]
        %v913 = vld [vmem:[%s192 + $0x1438] sm:$0xff]
        %v914 = vld [vmem:[%s192 + $0x1440] sm:$0xff]
        %v915 = vld [vmem:[%s192 + $0x1448] sm:$0xff]
        %v916 = vld [vmem:[%s192 + $0x1450] sm:$0xff]
        %v917 = vld [vmem:[%s192 + $0x1458] sm:$0xff]
        %v918 = vld [vmem:[%s192 + $0x1460] sm:$0xff]
        %v919 = vld [vmem:[%s192 + $0x1468] sm:$0xff]
        %v920 = vld [vmem:[%s192 + $0x1470] sm:$0xff]
        %v921 = vld [vmem:[%s192 + $0x1478] sm:$0xff]
        %v922 = vld [vmem:[%s192 + $0x1480] sm:$0xff]
        %v923 = vld [vmem:[%s192 + $0x1488] sm:$0xff]
        %v924 = vld [vmem:[%s192 + $0x1490] sm:$0xff]
        %v925 = vld [vmem:[%s192 + $0x1498] sm:$0xff]
        %v926 = vld [vmem:[%s192 + $0x14a0] sm:$0xff]
        %v927 = vld [vmem:[%s192 + $0x14a8] sm:$0xff]
        %v928 = vld [vmem:[%s192 + $0x14b0] sm:$0xff]
        %v929 = vld [vmem:[%s192 + $0x14b8] sm:$0xff]
        %v930 = vld [vmem:[%s192 + $0x14c0] sm:$0xff]
        %v931 = vld [vmem:[%s192 + $0x14c8] sm:$0xff]
        %v932 = vld [vmem:[%s192 + $0x14d0] sm:$0xff]
        %v933 = vld [vmem:[%s192 + $0x14d8] sm:$0xff]
        %v934 = vld [vmem:[%s192 + $0x14e0] sm:$0xff]
        %v935 = vld [vmem:[%s192 + $0x14e8] sm:$0xff]
        %v936 = vld [vmem:[%s192 + $0x14f0] sm:$0xff]
        %v937 = vld [vmem:[%s192 + $0x14f8] sm:$0xff]
        %v938 = vld [vmem:[%s192 + $0x1500] sm:$0xff]
        %v939 = vld [vmem:[%s192 + $0x1508] sm:$0xff]
        %v940 = vld [vmem:[%s192 + $0x1510] sm:$0xff]
        %v941 = vld [vmem:[%s192 + $0x1518] sm:$0xff]
        %v942 = vld [vmem:[%s192 + $0x1520] sm:$0xff]
        %v943 = vld [vmem:[%s192 + $0x1528] sm:$0xff]
        %v944 = vld [vmem:[%s192 + $0x1530] sm:$0xff]
        %v945 = vld [vmem:[%s192 + $0x1538] sm:$0xff]
        %v946 = vld [vmem:[%s192 + $0x1540] sm:$0xff]
        %v947 = vld [vmem:[%s192 + $0x1548] sm:$0xff]
        %v948 = vld [vmem:[%s192 + $0x1550] sm:$0xff]
        %v949 = vld [vmem:[%s192 + $0x1558] sm:$0xff]
        %v950 = vld [vmem:[%s192 + $0x1560] sm:$0xff]
        %v951 = vld [vmem:[%s192 + $0x1568] sm:$0xff]
        %v952 = vld [vmem:[%s192 + $0x1570] sm:$0xff]
        %v953 = vld [vmem:[%s192 + $0x1578] sm:$0xff]
        %v954 = vld [vmem:[%s192 + $0x1580] sm:$0xff]
        %v955 = vld [vmem:[%s192 + $0x1588] sm:$0xff]
        %v956 = vld [vmem:[%s192 + $0x1590] sm:$0xff]
        %v957 = vld [vmem:[%s192 + $0x1598] sm:$0xff]
        %v958 = vld [vmem:[%s192 + $0x15a0] sm:$0xff]
        %v959 = vld [vmem:[%s192 + $0x15a8] sm:$0xff]
        %v960 = vld [vmem:[%s192 + $0x15b0] sm:$0xff]
        %v961 = vld [vmem:[%s192 + $0x15b8] sm:$0xff]
        %v962 = vld [vmem:[%s192 + $0x15c0] sm:$0xff]
        %v963 = vld [vmem:[%s192 + $0x15c8] sm:$0xff]
        %v964 = vld [vmem:[%s192 + $0x15d0] sm:$0xff]
        %v965 = vld [vmem:[%s192 + $0x15d8] sm:$0xff]
        %v966 = vld [vmem:[%s192 + $0x15e0] sm:$0xff]
        %v967 = vld [vmem:[%s192 + $0x15e8] sm:$0xff]
        %v968 = vld [vmem:[%s192 + $0x15f0] sm:$0xff]
        %v969 = vld [vmem:[%s192 + $0x15f8] sm:$0xff]
        %v970 = vld [vmem:[%s192 + $0x1600] sm:$0xff]
        %v971 = vld [vmem:[%s192 + $0x1608] sm:$0xff]
        %v972 = vld [vmem:[%s192 + $0x1610] sm:$0xff]
        %v973 = vld [vmem:[%s192 + $0x1618] sm:$0xff]
        %v974 = vld [vmem:[%s192 + $0x1620] sm:$0xff]
        %v975 = vld [vmem:[%s192 + $0x1628] sm:$0xff]
        %v976 = vld [vmem:[%s192 + $0x1630] sm:$0xff]
        %v977 = vld [vmem:[%s192 + $0x1638] sm:$0xff]
        %v978 = vld [vmem:[%s192 + $0x1640] sm:$0xff]
        %v979 = vld [vmem:[%s192 + $0x1648] sm:$0xff]
        %v980 = vld [vmem:[%s192 + $0x1650] sm:$0xff]
        %v981 = vld [vmem:[%s192 + $0x1658] sm:$0xff]
        %v982 = vld [vmem:[%s192 + $0x1660] sm:$0xff]
        %v983 = vld [vmem:[%s192 + $0x1668] sm:$0xff]
        %v984 = vld [vmem:[%s192 + $0x1670] sm:$0xff]
        %v985 = vld [vmem:[%s192 + $0x1678] sm:$0xff]
        %v986 = vld [vmem:[%s192 + $0x1680] sm:$0xff]
        %v987 = vld [vmem:[%s192 + $0x1688] sm:$0xff]
        %v988 = vld [vmem:[%s192 + $0x1690] sm:$0xff]
        %v989 = vld [vmem:[%s192 + $0x1698] sm:$0xff]
        %v990 = vld [vmem:[%s192 + $0x16a0] sm:$0xff]
        %v991 = vld [vmem:[%s192 + $0x16a8] sm:$0xff]
        %v992 = vld [vmem:[%s192 + $0x16b0] sm:$0xff]
        %v993 = vld [vmem:[%s192 + $0x16b8] sm:$0xff]
        %v994 = vld [vmem:[%s192 + $0x16c0] sm:$0xff]
        %v995 = vld [vmem:[%s192 + $0x16c8] sm:$0xff]
        %v996 = vld [vmem:[%s192 + $0x16d0] sm:$0xff]
        %v997 = vld [vmem:[%s192 + $0x16d8] sm:$0xff]
        %v998 = vld [vmem:[%s192 + $0x16e0] sm:$0xff]
        %v999 = vld [vmem:[%s192 + $0x16e8] sm:$0xff]
        %v1000 = vld [vmem:[%s192 + $0x16f0] sm:$0xff]
        %v1001 = vld [vmem:[%s192 + $0x16f8] sm:$0xff]
        %v1002 = vld [vmem:[%s192 + $0x1700] sm:$0xff]
        %v1003 = vld [vmem:[%s192 + $0x1708] sm:$0xff]
        %v1004 = vld [vmem:[%s192 + $0x1710] sm:$0xff]
        %v1005 = vld [vmem:[%s192 + $0x1718] sm:$0xff]
        %v1006 = vld [vmem:[%s192 + $0x1720] sm:$0xff]
        %v1007 = vld [vmem:[%s192 + $0x1728] sm:$0xff]
        %v1008 = vld [vmem:[%s192 + $0x1730] sm:$0xff]
        %v1009 = vld [vmem:[%s192 + $0x1738] sm:$0xff]
        %v1010 = vld [vmem:[%s192 + $0x1740] sm:$0xff]
        %v1011 = vld [vmem:[%s192 + $0x1748] sm:$0xff]
        %v1012 = vld [vmem:[%s192 + $0x1750] sm:$0xff]
        %v1013 = vld [vmem:[%s192 + $0x1758] sm:$0xff]
        %v1014 = vld [vmem:[%s192 + $0x1760] sm:$0xff]
        %v1015 = vld [vmem:[%s192 + $0x1768] sm:$0xff]
        %v1016 = vld [vmem:[%s192 + $0x1770] sm:$0xff]
        %v1017 = vld [vmem:[%s192 + $0x1778] sm:$0xff]
        %v1018 = vld [vmem:[%s192 + $0x1780] sm:$0xff]
        %v1019 = vld [vmem:[%s192 + $0x1788] sm:$0xff]
        %v1020 = vld [vmem:[%s192 + $0x1790] sm:$0xff]
        %v1021 = vld [vmem:[%s192 + $0x1798] sm:$0xff]
        %v1022 = vld [vmem:[%s192 + $0x17a0] sm:$0xff]
        %v1023 = vld [vmem:[%s192 + $0x17a8] sm:$0xff]
        %v1024 = vld [vmem:[%s192 + $0x17b0] sm:$0xff]
        %v1025 = vld [vmem:[%s192 + $0x17b8] sm:$0xff]
        %v1026 = vld [vmem:[%s192 + $0x17c0] sm:$0xff]
        %v1027 = vld [vmem:[%s192 + $0x17c8] sm:$0xff]
        %v1028 = vld [vmem:[%s192 + $0x17d0] sm:$0xff]
        %v1029 = vld [vmem:[%s192 + $0x17d8] sm:$0xff]
        %v1030 = vld [vmem:[%s192 + $0x17e0] sm:$0xff]
        %v1031 = vld [vmem:[%s192 + $0x17e8] sm:$0xff]
        %v1032 = vld [vmem:[%s192 + $0x17f0] sm:$0xff]
        %v1033 = vld [vmem:[%s192 + $0x17f8] sm:$0xff]
        %v1034 = vld [vmem:[%s192 + $0x1800] sm:$0xff]
        %v1035 = vld [vmem:[%s192 + $0x1808] sm:$0xff]
        %v1036 = vld [vmem:[%s192 + $0x1810] sm:$0xff]
        %v1037 = vld [vmem:[%s192 + $0x1818] sm:$0xff]
        %v1038 = vld [vmem:[%s192 + $0x1820] sm:$0xff]
        %v1039 = vld [vmem:[%s192 + $0x1828] sm:$0xff]
        %v1040 = vld [vmem:[%s192 + $0x1830] sm:$0xff]
        %v1041 = vld [vmem:[%s192 + $0x1838] sm:$0xff]
        %v1042 = vld [vmem:[%s192 + $0x1840] sm:$0xff]
        %v1043 = vld [vmem:[%s192 + $0x1848] sm:$0xff]
        %v1044 = vld [vmem:[%s192 + $0x1850] sm:$0xff]
        %v1045 = vld [vmem:[%s192 + $0x1858] sm:$0xff]
        %v1046 = vld [vmem:[%s192 + $0x1860] sm:$0xff]
        %v1047 = vld [vmem:[%s192 + $0x1868] sm:$0xff]
        %v1048 = vld [vmem:[%s192 + $0x1870] sm:$0xff]
        %v1049 = vld [vmem:[%s192 + $0x1878] sm:$0xff]
        %v1063 = vcombine.high %v252, %v252
        %v1065 = vunpack.c.l.s4 1983009808
        %v1066 = vunpack.c.0.s8 %v1065
        %v1067 = vlaneseq
        %v1068 = vshrl.u32 %v1067, 7
        %v1069 = vsub.s32 %v1066, %v1068
        %v1070 = vrot.slane %v252, %v1069
        %v1072 = vunpack.c.l.s4 1983009808
        %v1073 = vunpack.c.0.s8 %v1072
        %v1074 = vlaneseq
        %v1075 = vshrl.u32 %v1074, 7
        %v1076 = vsub.s32 %v1073, %v1075
        %v1077 = vrot.slane %v1063, %v1076
        %v1078 = vcombine.high %v1070, %v1070
        %v1079 = vcombine.high %v1077, %v1077
        %v1080 = vcombine.high %v253, %v253
        %v1082 = vunpack.c.l.s4 1983009808
        %v1083 = vunpack.c.0.s8 %v1082
        %v1084 = vlaneseq
        %v1085 = vshrl.u32 %v1084, 7
        %v1086 = vsub.s32 %v1083, %v1085
        %v1087 = vrot.slane %v253, %v1086
        %v1089 = vunpack.c.l.s4 1983009808
        %v1090 = vunpack.c.0.s8 %v1089
        %v1091 = vlaneseq
        %v1092 = vshrl.u32 %v1091, 7
        %v1093 = vsub.s32 %v1090, %v1092
        %v1094 = vrot.slane %v1080, %v1093
        %v1095 = vcombine.high %v1087, %v1087
        %v1096 = vcombine.high %v1094, %v1094
        %v1097 = vcombine.high %v254, %v254
        %v1099 = vunpack.c.l.s4 1983009808
        %v1100 = vunpack.c.0.s8 %v1099
        %v1101 = vlaneseq
        %v1102 = vshrl.u32 %v1101, 7
        %v1103 = vsub.s32 %v1100, %v1102
        %v1104 = vrot.slane %v254, %v1103
        %v1106 = vunpack.c.l.s4 1983009808
        %v1107 = vunpack.c.0.s8 %v1106
        %v1108 = vlaneseq
        %v1109 = vshrl.u32 %v1108, 7
        %v1110 = vsub.s32 %v1107, %v1109
        %v1111 = vrot.slane %v1097, %v1110
        %v1112 = vcombine.high %v1104, %v1104
        %v1113 = vcombine.high %v1111, %v1111
        %v1114 = vcombine.high %v255, %v255
        %v1116 = vunpack.c.l.s4 1983009808
        %v1117 = vunpack.c.0.s8 %v1116
        %v1118 = vlaneseq
        %v1119 = vshrl.u32 %v1118, 7
        %v1120 = vsub.s32 %v1117, %v1119
        %v1121 = vrot.slane %v255, %v1120
        %v1123 = vunpack.c.l.s4 1983009808
        %v1124 = vunpack.c.0.s8 %v1123
        %v1125 = vlaneseq
        %v1126 = vshrl.u32 %v1125, 7
        %v1127 = vsub.s32 %v1124, %v1126
        %v1128 = vrot.slane %v1114, %v1127
        %v1129 = vcombine.high %v1121, %v1121
        %v1130 = vcombine.high %v1128, %v1128
        %v1131 = vcombine.high %v256, %v256
        %v1133 = vunpack.c.l.s4 1983009808
        %v1134 = vunpack.c.0.s8 %v1133
        %v1135 = vlaneseq
        %v1136 = vshrl.u32 %v1135, 7
        %v1137 = vsub.s32 %v1134, %v1136
        %v1138 = vrot.slane %v256, %v1137
        %v1140 = vunpack.c.l.s4 1983009808
        %v1141 = vunpack.c.0.s8 %v1140
        %v1142 = vlaneseq
        %v1143 = vshrl.u32 %v1142, 7
        %v1144 = vsub.s32 %v1141, %v1143
        %v1145 = vrot.slane %v1131, %v1144
        %v1146 = vcombine.high %v1138, %v1138
        %v1147 = vcombine.high %v1145, %v1145
        %v1148 = vcombine.high %v257, %v257
        %v1150 = vunpack.c.l.s4 1983009808
        %v1151 = vunpack.c.0.s8 %v1150
        %v1152 = vlaneseq
        %v1153 = vshrl.u32 %v1152, 7
        %v1154 = vsub.s32 %v1151, %v1153
        %v1155 = vrot.slane %v257, %v1154
        %v1157 = vunpack.c.l.s4 1983009808
        %v1158 = vunpack.c.0.s8 %v1157
        %v1159 = vlaneseq
        %v1160 = vshrl.u32 %v1159, 7
        %v1161 = vsub.s32 %v1158, %v1160
        %v1162 = vrot.slane %v1148, %v1161
        %v1163 = vcombine.high %v1155, %v1155
        %v1164 = vcombine.high %v1162, %v1162
        %v1165 = vcombine.high %v258, %v258
        %v1167 = vunpack.c.l.s4 1983009808
        %v1168 = vunpack.c.0.s8 %v1167
        %v1169 = vlaneseq
        %v1170 = vshrl.u32 %v1169, 7
        %v1171 = vsub.s32 %v1168, %v1170
        %v1172 = vrot.slane %v258, %v1171
        %v1174 = vunpack.c.l.s4 1983009808
        %v1175 = vunpack.c.0.s8 %v1174
        %v1176 = vlaneseq
        %v1177 = vshrl.u32 %v1176, 7
        %v1178 = vsub.s32 %v1175, %v1177
        %v1179 = vrot.slane %v1165, %v1178
        %v1180 = vcombine.high %v1172, %v1172
        %v1181 = vcombine.high %v1179, %v1179
        %v1182 = vcombine.high %v259, %v259
        %v1184 = vunpack.c.l.s4 1983009808
        %v1185 = vunpack.c.0.s8 %v1184
        %v1186 = vlaneseq
        %v1187 = vshrl.u32 %v1186, 7
        %v1188 = vsub.s32 %v1185, %v1187
        %v1189 = vrot.slane %v259, %v1188
        %v1191 = vunpack.c.l.s4 1983009808
        %v1192 = vunpack.c.0.s8 %v1191
        %v1193 = vlaneseq
        %v1194 = vshrl.u32 %v1193, 7
        %v1195 = vsub.s32 %v1192, %v1194
        %v1196 = vrot.slane %v1182, %v1195
        %v1197 = vcombine.high %v1189, %v1189
        %v1198 = vcombine.high %v1196, %v1196
        %v1199 = vcombine.high %v260, %v260
        %v1201 = vunpack.c.l.s4 1983009808
        %v1202 = vunpack.c.0.s8 %v1201
        %v1203 = vlaneseq
        %v1204 = vshrl.u32 %v1203, 7
        %v1205 = vsub.s32 %v1202, %v1204
        %v1206 = vrot.slane %v260, %v1205
        %v1208 = vunpack.c.l.s4 1983009808
        %v1209 = vunpack.c.0.s8 %v1208
        %v1210 = vlaneseq
        %v1211 = vshrl.u32 %v1210, 7
        %v1212 = vsub.s32 %v1209, %v1211
        %v1213 = vrot.slane %v1199, %v1212
        %v1214 = vcombine.high %v1206, %v1206
        %v1215 = vcombine.high %v1213, %v1213
        %v1216 = vcombine.high %v261, %v261
        %v1218 = vunpack.c.l.s4 1983009808
        %v1219 = vunpack.c.0.s8 %v1218
        %v1220 = vlaneseq
        %v1221 = vshrl.u32 %v1220, 7
        %v1222 = vsub.s32 %v1219, %v1221
        %v1223 = vrot.slane %v261, %v1222
        %v1225 = vunpack.c.l.s4 1983009808
        %v1226 = vunpack.c.0.s8 %v1225
        %v1227 = vlaneseq
        %v1228 = vshrl.u32 %v1227, 7
        %v1229 = vsub.s32 %v1226, %v1228
        %v1230 = vrot.slane %v1216, %v1229
        %v1231 = vcombine.high %v1223, %v1223
        %v1232 = vcombine.high %v1230, %v1230
        %v1233 = vcombine.high %v262, %v262
        %v1235 = vunpack.c.l.s4 1983009808
        %v1236 = vunpack.c.0.s8 %v1235
        %v1237 = vlaneseq
        %v1238 = vshrl.u32 %v1237, 7
        %v1239 = vsub.s32 %v1236, %v1238
        %v1240 = vrot.slane %v262, %v1239
        %v1242 = vunpack.c.l.s4 1983009808
        %v1243 = vunpack.c.0.s8 %v1242
        %v1244 = vlaneseq
        %v1245 = vshrl.u32 %v1244, 7
        %v1246 = vsub.s32 %v1243, %v1245
        %v1247 = vrot.slane %v1233, %v1246
        %v1248 = vcombine.high %v1240, %v1240
        %v1249 = vcombine.high %v1247, %v1247
        %v1250 = vcombine.high %v263, %v263
        %v1252 = vunpack.c.l.s4 1983009808
        %v1253 = vunpack.c.0.s8 %v1252
        %v1254 = vlaneseq
        %v1255 = vshrl.u32 %v1254, 7
        %v1256 = vsub.s32 %v1253, %v1255
        %v1257 = vrot.slane %v263, %v1256
        %v1259 = vunpack.c.l.s4 1983009808
        %v1260 = vunpack.c.0.s8 %v1259
        %v1261 = vlaneseq
        %v1262 = vshrl.u32 %v1261, 7
        %v1263 = vsub.s32 %v1260, %v1262
        %v1264 = vrot.slane %v1250, %v1263
        %v1265 = vcombine.high %v1257, %v1257
        %v1266 = vcombine.high %v1264, %v1264
        %v1268 = vunpack.c.l.s4 1983009808
        %v1269 = vunpack.c.0.s8 %v1268
        %v1270 = vlaneseq
        %v1271 = vshrl.u32 %v1270, 7
        %v1272 = vsub.s32 %v1269, %v1271
        %v1273 = vrot.slane %v264, %v1272
        %1323 = vmatprep.subr.mxu0 0.0
        %1324 = vmatpush1.msra.mxu0 %v266
        %1325 = vmatprep.subr.mxu0 0.0
        %1326 = vmatpush1.msra.mxu0 %v267
        %1327 = vmatprep.subr.mxu0 0.0
        %1328 = vmatpush1.msra.mxu0 %v268
        %1329 = vmatprep.subr.mxu0 0.0
        %1330 = vmatpush1.msra.mxu0 %v269
        %1331 = vmatprep.subr.mxu0 0.0
        %1332 = vmatpush1.msra.mxu0 %v270
        %1333 = vmatprep.subr.mxu0 0.0
        %1334 = vmatpush1.msra.mxu0 %v271
        %1335 = vmatprep.subr.mxu0 0.0
        %1336 = vmatpush1.msra.mxu0 %v272
        %1337 = vmatprep.subr.mxu0 0.0
        %1338 = vmatpush1.msra.mxu0 %v273
        %1339 = vmatprep.subr.mxu0 0.0
        %1340 = vmatpush1.msra.mxu0 %v274
        %1341 = vmatprep.subr.mxu0 0.0
        %1342 = vmatpush1.msra.mxu0 %v275
        %1343 = vmatprep.subr.mxu0 0.0
        %1344 = vmatpush1.msra.mxu0 %v276
        %1345 = vmatprep.subr.mxu0 0.0
        %1346 = vmatpush1.msra.mxu0 %v277
        %1347 = vmatprep.subr.mxu0 0.0
        %1348 = vmatpush1.msra.mxu0 %v278
        %1349 = vmatprep.subr.mxu0 0.0
        %1350 = vmatpush1.msra.mxu0 %v279
        %1351 = vmatprep.subr.mxu0 0.0
        %1352 = vmatpush1.msra.mxu0 %v280
        %1353 = vmatprep.subr.mxu0 0.0
        %1354 = vmatpush1.msra.mxu0 %v281
        %1355 = vmatprep.subr.mxu0 0.0
        %1356 = vmatpush1.msra.mxu0 %v282
        %1357 = vmatprep.subr.mxu0 0.0
        %1358 = vmatpush1.msra.mxu0 %v283
        %1359 = vmatprep.subr.mxu0 0.0
        %1360 = vmatpush1.msra.mxu0 %v284
        %1361 = vmatprep.subr.mxu0 0.0
        %1362 = vmatpush1.msra.mxu0 %v285
        %1363 = vmatprep.subr.mxu0 0.0
        %1364 = vmatpush1.msra.mxu0 %v286
        %1365 = vmatprep.subr.mxu0 0.0
        %1366 = vmatpush1.msra.mxu0 %v287
        %1367 = vmatprep.subr.mxu0 0.0
        %1368 = vmatpush1.msra.mxu0 %v288
        %1369 = vmatprep.subr.mxu0 0.0
        %1370 = vmatpush1.msra.mxu0 %v289
        %1371 = vmatprep.subr.mxu0 0.0
        %1372 = vmatpush1.msra.mxu0 %v290
        %1373 = vmatprep.subr.mxu0 0.0
        %1374 = vmatpush1.msra.mxu0 %v291
        %1375 = vmatprep.subr.mxu0 0.0
        %1376 = vmatpush1.msra.mxu0 %v292
        %1377 = vmatprep.subr.mxu0 0.0
        %1378 = vmatpush1.msra.mxu0 %v293
        %1379 = vmatprep.subr.mxu0 0.0
        %1380 = vmatpush1.msra.mxu0 %v294
        %1381 = vmatprep.subr.mxu0 0.0
        %1382 = vmatpush1.msra.mxu0 %v295
        %1383 = vmatprep.subr.mxu0 0.0
        %1384 = vmatpush1.msra.mxu0 %v296
        %1385 = vmatprep.subr.mxu0 0.0
        %1386 = vmatpush1.msra.mxu0 %v297
        %1387 = vmatprep.mubr.f32.mxu0 %v1078
        %1388 = vmatmul.mubr.f32.gmra.mrb[0].mxu0 %v1070
        %v1389 = vpop.f32.mrb[0].mxu0
        %v1390 = vadd.f32 0.0, %v1389
        %v1391 = vpop.f32.mrb[0].mxu0
        %1392 = vdwg.mxu0
        %1393 = vmatprep.subr.mxu0 0.0
        %1394 = vmatpush1.msra.mxu0 %v298
        %1395 = vmatprep.subr.mxu0 0.0
        %1396 = vmatpush1.msra.mxu0 %v299
        %1397 = vmatprep.subr.mxu0 0.0
        %1398 = vmatpush1.msra.mxu0 %v300
        %1399 = vmatprep.subr.mxu0 0.0
        %1400 = vmatpush1.msra.mxu0 %v301
        %1401 = vmatprep.subr.mxu0 0.0
        %1402 = vmatpush1.msra.mxu0 %v302
        %1403 = vmatprep.subr.mxu0 0.0
        %1404 = vmatpush1.msra.mxu0 %v303
        %1405 = vmatprep.subr.mxu0 0.0
        %1406 = vmatpush1.msra.mxu0 %v304
        %1407 = vmatprep.subr.mxu0 0.0
        %1408 = vmatpush1.msra.mxu0 %v305
        %1409 = vmatprep.subr.mxu0 0.0
        %1410 = vmatpush1.msra.mxu0 %v306
        %1411 = vmatprep.subr.mxu0 0.0
        %1412 = vmatpush1.msra.mxu0 %v307
        %1413 = vmatprep.subr.mxu0 0.0
        %1414 = vmatpush1.msra.mxu0 %v308
        %1415 = vmatprep.subr.mxu0 0.0
        %1416 = vmatpush1.msra.mxu0 %v309
        %1417 = vmatprep.subr.mxu0 0.0
        %1418 = vmatpush1.msra.mxu0 %v310
        %1419 = vmatprep.subr.mxu0 0.0
        %1420 = vmatpush1.msra.mxu0 %v311
        %1421 = vmatprep.subr.mxu0 0.0
        %1422 = vmatpush1.msra.mxu0 %v312
        %1423 = vmatprep.subr.mxu0 0.0
        %1424 = vmatpush1.msra.mxu0 %v313
        %1425 = vmatprep.subr.mxu0 0.0
        %1426 = vmatpush1.msra.mxu0 %v314
        %1427 = vmatprep.subr.mxu0 0.0
        %1428 = vmatpush1.msra.mxu0 %v315
        %1429 = vmatprep.subr.mxu0 0.0
        %1430 = vmatpush1.msra.mxu0 %v316
        %1431 = vmatprep.subr.mxu0 0.0
        %1432 = vmatpush1.msra.mxu0 %v317
        %1433 = vmatprep.subr.mxu0 0.0
        %1434 = vmatpush1.msra.mxu0 %v318
        %1435 = vmatprep.subr.mxu0 0.0
        %1436 = vmatpush1.msra.mxu0 %v319
        %1437 = vmatprep.subr.mxu0 0.0
        %1438 = vmatpush1.msra.mxu0 %v320
        %1439 = vmatprep.subr.mxu0 0.0
        %1440 = vmatpush1.msra.mxu0 %v321
        %1441 = vmatprep.subr.mxu0 0.0
        %1442 = vmatpush1.msra.mxu0 %v322
        %1443 = vmatprep.subr.mxu0 0.0
        %1444 = vmatpush1.msra.mxu0 %v323
        %1445 = vmatprep.subr.mxu0 0.0
        %1446 = vmatpush1.msra.mxu0 %v324
        %1447 = vmatprep.subr.mxu0 0.0
        %1448 = vmatpush1.msra.mxu0 %v325
        %1449 = vmatprep.subr.mxu0 0.0
        %1450 = vmatpush1.msra.mxu0 %v326
        %1451 = vmatprep.subr.mxu0 0.0
        %1452 = vmatpush1.msra.mxu0 %v327
        %1453 = vmatprep.subr.mxu0 0.0
        %1454 = vmatpush1.msra.mxu0 %v328
        %1455 = vmatprep.subr.mxu0 0.0
        %1456 = vmatpush1.msra.mxu0 %v329
        %1457 = vmatprep.mubr.f32.mxu0 %v1079
        %1458 = vmatmul.mubr.f32.gmra.mrb[0].mxu0 %v1077
        %v1459 = vpop.f32.mrb[0].mxu0
        %v1460 = vadd.f32 %v1390, %v1459
        %v1461 = vpop.f32.mrb[0].mxu0
        %1462 = vdwg.mxu0
        %1463 = vmatprep.subr.mxu0 0.0
        %1464 = vmatpush1.msra.mxu0 %v330
        %1465 = vmatprep.subr.mxu0 0.0
        %1466 = vmatpush1.msra.mxu0 %v331
        %1467 = vmatprep.subr.mxu0 0.0
        %1468 = vmatpush1.msra.mxu0 %v332
        %1469 = vmatprep.subr.mxu0 0.0
        %1470 = vmatpush1.msra.mxu0 %v333
        %1471 = vmatprep.subr.mxu0 0.0
        %1472 = vmatpush1.msra.mxu0 %v334
        %1473 = vmatprep.subr.mxu0 0.0
        %1474 = vmatpush1.msra.mxu0 %v335
        %1475 = vmatprep.subr.mxu0 0.0
        %1476 = vmatpush1.msra.mxu0 %v336
        %1477 = vmatprep.subr.mxu0 0.0
        %1478 = vmatpush1.msra.mxu0 %v337
        %1479 = vmatprep.subr.mxu0 0.0
        %1480 = vmatpush1.msra.mxu0 %v338
        %1481 = vmatprep.subr.mxu0 0.0
        %1482 = vmatpush1.msra.mxu0 %v339
        %1483 = vmatprep.subr.mxu0 0.0
        %1484 = vmatpush1.msra.mxu0 %v340
        %1485 = vmatprep.subr.mxu0 0.0
        %1486 = vmatpush1.msra.mxu0 %v341
        %1487 = vmatprep.subr.mxu0 0.0
        %1488 = vmatpush1.msra.mxu0 %v342
        %1489 = vmatprep.subr.mxu0 0.0
        %1490 = vmatpush1.msra.mxu0 %v343
        %1491 = vmatprep.subr.mxu0 0.0
        %1492 = vmatpush1.msra.mxu0 %v344
        %1493 = vmatprep.subr.mxu0 0.0
        %1494 = vmatpush1.msra.mxu0 %v345
        %1495 = vmatprep.subr.mxu0 0.0
        %1496 = vmatpush1.msra.mxu0 %v346
        %1497 = vmatprep.subr.mxu0 0.0
        %1498 = vmatpush1.msra.mxu0 %v347
        %1499 = vmatprep.subr.mxu0 0.0
        %1500 = vmatpush1.msra.mxu0 %v348
        %1501 = vmatprep.subr.mxu0 0.0
        %1502 = vmatpush1.msra.mxu0 %v349
        %1503 = vmatprep.subr.mxu0 0.0
        %1504 = vmatpush1.msra.mxu0 %v350
        %1505 = vmatprep.subr.mxu0 0.0
        %1506 = vmatpush1.msra.mxu0 %v351
        %1507 = vmatprep.subr.mxu0 0.0
        %1508 = vmatpush1.msra.mxu0 %v352
        %1509 = vmatprep.subr.mxu0 0.0
        %1510 = vmatpush1.msra.mxu0 %v353
        %1511 = vmatprep.subr.mxu0 0.0
        %1512 = vmatpush1.msra.mxu0 %v354
        %1513 = vmatprep.subr.mxu0 0.0
        %1514 = vmatpush1.msra.mxu0 %v355
        %1515 = vmatprep.subr.mxu0 0.0
        %1516 = vmatpush1.msra.mxu0 %v356
        %1517 = vmatprep.subr.mxu0 0.0
        %1518 = vmatpush1.msra.mxu0 %v357
        %1519 = vmatprep.subr.mxu0 0.0
        %1520 = vmatpush1.msra.mxu0 %v358
        %1521 = vmatprep.subr.mxu0 0.0
        %1522 = vmatpush1.msra.mxu0 %v359
        %1523 = vmatprep.subr.mxu0 0.0
        %1524 = vmatpush1.msra.mxu0 %v360
        %1525 = vmatprep.subr.mxu0 0.0
        %1526 = vmatpush1.msra.mxu0 %v361
        %1527 = vmatprep.mubr.f32.mxu0 %v1095
        %1528 = vmatmul.mubr.f32.gmra.mrb[0].mxu0 %v1087
        %v1529 = vpop.f32.mrb[0].mxu0
        %v1530 = vadd.f32 %v1460, %v1529
        %v1531 = vpop.f32.mrb[0].mxu0
        %1532 = vdwg.mxu0
        %1533 = vmatprep.subr.mxu0 0.0
        %1534 = vmatpush1.msra.mxu0 %v362
        %1535 = vmatprep.subr.mxu0 0.0
        %1536 = vmatpush1.msra.mxu0 %v363
        %1537 = vmatprep.subr.mxu0 0.0
        %1538 = vmatpush1.msra.mxu0 %v364
        %1539 = vmatprep.subr.mxu0 0.0
        %1540 = vmatpush1.msra.mxu0 %v365
        %1541 = vmatprep.subr.mxu0 0.0
        %1542 = vmatpush1.msra.mxu0 %v366
        %1543 = vmatprep.subr.mxu0 0.0
        %1544 = vmatpush1.msra.mxu0 %v367
        %1545 = vmatprep.subr.mxu0 0.0
        %1546 = vmatpush1.msra.mxu0 %v368
        %1547 = vmatprep.subr.mxu0 0.0
        %1548 = vmatpush1.msra.mxu0 %v369
        %1549 = vmatprep.subr.mxu0 0.0
        %1550 = vmatpush1.msra.mxu0 %v370
        %1551 = vmatprep.subr.mxu0 0.0
        %1552 = vmatpush1.msra.mxu0 %v371
        %1553 = vmatprep.subr.mxu0 0.0
        %1554 = vmatpush1.msra.mxu0 %v372
        %1555 = vmatprep.subr.mxu0 0.0
        %1556 = vmatpush1.msra.mxu0 %v373
        %1557 = vmatprep.subr.mxu0 0.0
        %1558 = vmatpush1.msra.mxu0 %v374
        %1559 = vmatprep.subr.mxu0 0.0
        %1560 = vmatpush1.msra.mxu0 %v375
        %1561 = vmatprep.subr.mxu0 0.0
        %1562 = vmatpush1.msra.mxu0 %v376
        %1563 = vmatprep.subr.mxu0 0.0
        %1564 = vmatpush1.msra.mxu0 %v377
        %1565 = vmatprep.subr.mxu0 0.0
        %1566 = vmatpush1.msra.mxu0 %v378
        %1567 = vmatprep.subr.mxu0 0.0
        %1568 = vmatpush1.msra.mxu0 %v379
        %1569 = vmatprep.subr.mxu0 0.0
        %1570 = vmatpush1.msra.mxu0 %v380
        %1571 = vmatprep.subr.mxu0 0.0
        %1572 = vmatpush1.msra.mxu0 %v381
        %1573 = vmatprep.subr.mxu0 0.0
        %1574 = vmatpush1.msra.mxu0 %v382
        %1575 = vmatprep.subr.mxu0 0.0
        %1576 = vmatpush1.msra.mxu0 %v383
        %1577 = vmatprep.subr.mxu0 0.0
        %1578 = vmatpush1.msra.mxu0 %v384
        %1579 = vmatprep.subr.mxu0 0.0
        %1580 = vmatpush1.msra.mxu0 %v385
        %1581 = vmatprep.subr.mxu0 0.0
        %1582 = vmatpush1.msra.mxu0 %v386
        %1583 = vmatprep.subr.mxu0 0.0
        %1584 = vmatpush1.msra.mxu0 %v387
        %1585 = vmatprep.subr.mxu0 0.0
        %1586 = vmatpush1.msra.mxu0 %v388
        %1587 = vmatprep.subr.mxu0 0.0
        %1588 = vmatpush1.msra.mxu0 %v389
        %1589 = vmatprep.subr.mxu0 0.0
        %1590 = vmatpush1.msra.mxu0 %v390
        %1591 = vmatprep.subr.mxu0 0.0
        %1592 = vmatpush1.msra.mxu0 %v391
        %1593 = vmatprep.subr.mxu0 0.0
        %1594 = vmatpush1.msra.mxu0 %v392
        %1595 = vmatprep.subr.mxu0 0.0
        %1596 = vmatpush1.msra.mxu0 %v393
        %1597 = vmatprep.mubr.f32.mxu0 %v1096
        %1598 = vmatmul.mubr.f32.gmra.mrb[0].mxu0 %v1094
        %v1599 = vpop.f32.mrb[0].mxu0
        %v1600 = vadd.f32 %v1530, %v1599
        %v1601 = vpop.f32.mrb[0].mxu0
        %1602 = vdwg.mxu0
        %1603 = vmatprep.subr.mxu0 0.0
        %1604 = vmatpush1.msra.mxu0 %v394
        %1605 = vmatprep.subr.mxu0 0.0
        %1606 = vmatpush1.msra.mxu0 %v395
        %1607 = vmatprep.subr.mxu0 0.0
        %1608 = vmatpush1.msra.mxu0 %v396
        %1609 = vmatprep.subr.mxu0 0.0
        %1610 = vmatpush1.msra.mxu0 %v397
        %1611 = vmatprep.subr.mxu0 0.0
        %1612 = vmatpush1.msra.mxu0 %v398
        %1613 = vmatprep.subr.mxu0 0.0
        %1614 = vmatpush1.msra.mxu0 %v399
        %1615 = vmatprep.subr.mxu0 0.0
        %1616 = vmatpush1.msra.mxu0 %v400
        %1617 = vmatprep.subr.mxu0 0.0
        %1618 = vmatpush1.msra.mxu0 %v401
        %1619 = vmatprep.subr.mxu0 0.0
        %1620 = vmatpush1.msra.mxu0 %v402
        %1621 = vmatprep.subr.mxu0 0.0
        %1622 = vmatpush1.msra.mxu0 %v403
        %1623 = vmatprep.subr.mxu0 0.0
        %1624 = vmatpush1.msra.mxu0 %v404
        %1625 = vmatprep.subr.mxu0 0.0
        %1626 = vmatpush1.msra.mxu0 %v405
        %1627 = vmatprep.subr.mxu0 0.0
        %1628 = vmatpush1.msra.mxu0 %v406
        %1629 = vmatprep.subr.mxu0 0.0
        %1630 = vmatpush1.msra.mxu0 %v407
        %1631 = vmatprep.subr.mxu0 0.0
        %1632 = vmatpush1.msra.mxu0 %v408
        %1633 = vmatprep.subr.mxu0 0.0
        %1634 = vmatpush1.msra.mxu0 %v409
        %1635 = vmatprep.subr.mxu0 0.0
        %1636 = vmatpush1.msra.mxu0 %v410
        %1637 = vmatprep.subr.mxu0 0.0
        %1638 = vmatpush1.msra.mxu0 %v411
        %1639 = vmatprep.subr.mxu0 0.0
        %1640 = vmatpush1.msra.mxu0 %v412
        %1641 = vmatprep.subr.mxu0 0.0
        %1642 = vmatpush1.msra.mxu0 %v413
        %1643 = vmatprep.subr.mxu0 0.0
        %1644 = vmatpush1.msra.mxu0 %v414
        %1645 = vmatprep.subr.mxu0 0.0
        %1646 = vmatpush1.msra.mxu0 %v415
        %1647 = vmatprep.subr.mxu0 0.0
        %1648 = vmatpush1.msra.mxu0 %v416
        %1649 = vmatprep.subr.mxu0 0.0
        %1650 = vmatpush1.msra.mxu0 %v417
        %1651 = vmatprep.subr.mxu0 0.0
        %1652 = vmatpush1.msra.mxu0 %v418
        %1653 = vmatprep.subr.mxu0 0.0
        %1654 = vmatpush1.msra.mxu0 %v419
        %1655 = vmatprep.subr.mxu0 0.0
        %1656 = vmatpush1.msra.mxu0 %v420
        %1657 = vmatprep.subr.mxu0 0.0
        %1658 = vmatpush1.msra.mxu0 %v421
        %1659 = vmatprep.subr.mxu0 0.0
        %1660 = vmatpush1.msra.mxu0 %v422
        %1661 = vmatprep.subr.mxu0 0.0
        %1662 = vmatpush1.msra.mxu0 %v423
        %1663 = vmatprep.subr.mxu0 0.0
        %1664 = vmatpush1.msra.mxu0 %v424
        %1665 = vmatprep.subr.mxu0 0.0
        %1666 = vmatpush1.msra.mxu0 %v425
        %1667 = vmatprep.mubr.f32.mxu0 %v1112
        %1668 = vmatmul.mubr.f32.gmra.mrb[0].mxu0 %v1104
        %v1669 = vpop.f32.mrb[0].mxu0
        %v1670 = vadd.f32 %v1600, %v1669
        %v1671 = vpop.f32.mrb[0].mxu0
        %1672 = vdwg.mxu0
        %1673 = vmatprep.subr.mxu0 0.0
        %1674 = vmatpush1.msra.mxu0 %v426
        %1675 = vmatprep.subr.mxu0 0.0
        %1676 = vmatpush1.msra.mxu0 %v427
        %1677 = vmatprep.subr.mxu0 0.0
        %1678 = vmatpush1.msra.mxu0 %v428
        %1679 = vmatprep.subr.mxu0 0.0
        %1680 = vmatpush1.msra.mxu0 %v429
        %1681 = vmatprep.subr.mxu0 0.0
        %1682 = vmatpush1.msra.mxu0 %v430
        %1683 = vmatprep.subr.mxu0 0.0
        %1684 = vmatpush1.msra.mxu0 %v431
        %1685 = vmatprep.subr.mxu0 0.0
        %1686 = vmatpush1.msra.mxu0 %v432
        %1687 = vmatprep.subr.mxu0 0.0
        %1688 = vmatpush1.msra.mxu0 %v433
        %1689 = vmatprep.subr.mxu0 0.0
        %1690 = vmatpush1.msra.mxu0 %v434
        %1691 = vmatprep.subr.mxu0 0.0
        %1692 = vmatpush1.msra.mxu0 %v435
        %1693 = vmatprep.subr.mxu0 0.0
        %1694 = vmatpush1.msra.mxu0 %v436
        %1695 = vmatprep.subr.mxu0 0.0
        %1696 = vmatpush1.msra.mxu0 %v437
        %1697 = vmatprep.subr.mxu0 0.0
        %1698 = vmatpush1.msra.mxu0 %v438
        %1699 = vmatprep.subr.mxu0 0.0
        %1700 = vmatpush1.msra.mxu0 %v439
        %1701 = vmatprep.subr.mxu0 0.0
        %1702 = vmatpush1.msra.mxu0 %v440
        %1703 = vmatprep.subr.mxu0 0.0
        %1704 = vmatpush1.msra.mxu0 %v441
        %1705 = vmatprep.subr.mxu0 0.0
        %1706 = vmatpush1.msra.mxu0 %v442
        %1707 = vmatprep.subr.mxu0 0.0
        %1708 = vmatpush1.msra.mxu0 %v443
        %1709 = vmatprep.subr.mxu0 0.0
        %1710 = vmatpush1.msra.mxu0 %v444
        %1711 = vmatprep.subr.mxu0 0.0
        %1712 = vmatpush1.msra.mxu0 %v445
        %1713 = vmatprep.subr.mxu0 0.0
        %1714 = vmatpush1.msra.mxu0 %v446
        %1715 = vmatprep.subr.mxu0 0.0
        %1716 = vmatpush1.msra.mxu0 %v447
        %1717 = vmatprep.subr.mxu0 0.0
        %1718 = vmatpush1.msra.mxu0 %v448
        %1719 = vmatprep.subr.mxu0 0.0
        %1720 = vmatpush1.msra.mxu0 %v449
        %1721 = vmatprep.subr.mxu0 0.0
        %1722 = vmatpush1.msra.mxu0 %v450
        %1723 = vmatprep.subr.mxu0 0.0
        %1724 = vmatpush1.msra.mxu0 %v451
        %1725 = vmatprep.subr.mxu0 0.0
        %1726 = vmatpush1.msra.mxu0 %v452
        %1727 = vmatprep.subr.mxu0 0.0
        %1728 = vmatpush1.msra.mxu0 %v453
        %1729 = vmatprep.subr.mxu0 0.0
        %1730 = vmatpush1.msra.mxu0 %v454
        %1731 = vmatprep.subr.mxu0 0.0
        %1732 = vmatpush1.msra.mxu0 %v455
        %1733 = vmatprep.subr.mxu0 0.0
        %1734 = vmatpush1.msra.mxu0 %v456
        %1735 = vmatprep.subr.mxu0 0.0
        %1736 = vmatpush1.msra.mxu0 %v457
        %1737 = vmatprep.mubr.f32.mxu0 %v1113
        %1738 = vmatmul.mubr.f32.gmra.mrb[0].mxu0 %v1111
        %v1739 = vpop.f32.mrb[0].mxu0
        %v1740 = vadd.f32 %v1670, %v1739
        %v1741 = vpop.f32.mrb[0].mxu0
        %1742 = vdwg.mxu0
        %1743 = vmatprep.subr.mxu0 0.0
        %1744 = vmatpush1.msra.mxu0 %v458
        %1745 = vmatprep.subr.mxu0 0.0
        %1746 = vmatpush1.msra.mxu0 %v459
        %1747 = vmatprep.subr.mxu0 0.0
        %1748 = vmatpush1.msra.mxu0 %v460
        %1749 = vmatprep.subr.mxu0 0.0
        %1750 = vmatpush1.msra.mxu0 %v461
        %1751 = vmatprep.subr.mxu0 0.0
        %1752 = vmatpush1.msra.mxu0 %v462
        %1753 = vmatprep.subr.mxu0 0.0
        %1754 = vmatpush1.msra.mxu0 %v463
        %1755 = vmatprep.subr.mxu0 0.0
        %1756 = vmatpush1.msra.mxu0 %v464
        %1757 = vmatprep.subr.mxu0 0.0
        %1758 = vmatpush1.msra.mxu0 %v465
        %1759 = vmatprep.subr.mxu0 0.0
        %1760 = vmatpush1.msra.mxu0 %v466
        %1761 = vmatprep.subr.mxu0 0.0
        %1762 = vmatpush1.msra.mxu0 %v467
        %1763 = vmatprep.subr.mxu0 0.0
        %1764 = vmatpush1.msra.mxu0 %v468
        %1765 = vmatprep.subr.mxu0 0.0
        %1766 = vmatpush1.msra.mxu0 %v469
        %1767 = vmatprep.subr.mxu0 0.0
        %1768 = vmatpush1.msra.mxu0 %v470
        %1769 = vmatprep.subr.mxu0 0.0
        %1770 = vmatpush1.msra.mxu0 %v471
        %1771 = vmatprep.subr.mxu0 0.0
        %1772 = vmatpush1.msra.mxu0 %v472
        %1773 = vmatprep.subr.mxu0 0.0
        %1774 = vmatpush1.msra.mxu0 %v473
        %1775 = vmatprep.subr.mxu0 0.0
        %1776 = vmatpush1.msra.mxu0 %v474
        %1777 = vmatprep.subr.mxu0 0.0
        %1778 = vmatpush1.msra.mxu0 %v475
        %1779 = vmatprep.subr.mxu0 0.0
        %1780 = vmatpush1.msra.mxu0 %v476
        %1781 = vmatprep.subr.mxu0 0.0
        %1782 = vmatpush1.msra.mxu0 %v477
        %1783 = vmatprep.subr.mxu0 0.0
        %1784 = vmatpush1.msra.mxu0 %v478
        %1785 = vmatprep.subr.mxu0 0.0
        %1786 = vmatpush1.msra.mxu0 %v479
        %1787 = vmatprep.subr.mxu0 0.0
        %1788 = vmatpush1.msra.mxu0 %v480
        %1789 = vmatprep.subr.mxu0 0.0
        %1790 = vmatpush1.msra.mxu0 %v481
        %1791 = vmatprep.subr.mxu0 0.0
        %1792 = vmatpush1.msra.mxu0 %v482
        %1793 = vmatprep.subr.mxu0 0.0
        %1794 = vmatpush1.msra.mxu0 %v483
        %1795 = vmatprep.subr.mxu0 0.0
        %1796 = vmatpush1.msra.mxu0 %v484
        %1797 = vmatprep.subr.mxu0 0.0
        %1798 = vmatpush1.msra.mxu0 %v485
        %1799 = vmatprep.subr.mxu0 0.0
        %1800 = vmatpush1.msra.mxu0 %v486
        %1801 = vmatprep.subr.mxu0 0.0
        %1802 = vmatpush1.msra.mxu0 %v487
        %1803 = vmatprep.subr.mxu0 0.0
        %1804 = vmatpush1.msra.mxu0 %v488
        %1805 = vmatprep.subr.mxu0 0.0
        %1806 = vmatpush1.msra.mxu0 %v489
        %1807 = vmatprep.mubr.f32.mxu0 %v1129
        %1808 = vmatmul.mubr.f32.gmra.mrb[0].mxu0 %v1121
        %v1809 = vpop.f32.mrb[0].mxu0
        %v1810 = vadd.f32 %v1740, %v1809
        %v1811 = vpop.f32.mrb[0].mxu0
        %1812 = vdwg.mxu0
        %1813 = vmatprep.subr.mxu0 0.0
        %1814 = vmatpush1.msra.mxu0 %v490
        %1815 = vmatprep.subr.mxu0 0.0
        %1816 = vmatpush1.msra.mxu0 %v491
        %1817 = vmatprep.subr.mxu0 0.0
        %1818 = vmatpush1.msra.mxu0 %v492
        %1819 = vmatprep.subr.mxu0 0.0
        %1820 = vmatpush1.msra.mxu0 %v493
        %1821 = vmatprep.subr.mxu0 0.0
        %1822 = vmatpush1.msra.mxu0 %v494
        %1823 = vmatprep.subr.mxu0 0.0
        %1824 = vmatpush1.msra.mxu0 %v495
        %1825 = vmatprep.subr.mxu0 0.0
        %1826 = vmatpush1.msra.mxu0 %v496
        %1827 = vmatprep.subr.mxu0 0.0
        %1828 = vmatpush1.msra.mxu0 %v497
        %1829 = vmatprep.subr.mxu0 0.0
        %1830 = vmatpush1.msra.mxu0 %v498
        %1831 = vmatprep.subr.mxu0 0.0
        %1832 = vmatpush1.msra.mxu0 %v499
        %1833 = vmatprep.subr.mxu0 0.0
        %1834 = vmatpush1.msra.mxu0 %v500
        %1835 = vmatprep.subr.mxu0 0.0
        %1836 = vmatpush1.msra.mxu0 %v501
        %1837 = vmatprep.subr.mxu0 0.0
        %1838 = vmatpush1.msra.mxu0 %v502
        %1839 = vmatprep.subr.mxu0 0.0
        %1840 = vmatpush1.msra.mxu0 %v503
        %1841 = vmatprep.subr.mxu0 0.0
        %1842 = vmatpush1.msra.mxu0 %v504
        %1843 = vmatprep.subr.mxu0 0.0
        %1844 = vmatpush1.msra.mxu0 %v505
        %1845 = vmatprep.subr.mxu0 0.0
        %1846 = vmatpush1.msra.mxu0 %v506
        %1847 = vmatprep.subr.mxu0 0.0
        %1848 = vmatpush1.msra.mxu0 %v507
        %1849 = vmatprep.subr.mxu0 0.0
        %1850 = vmatpush1.msra.mxu0 %v508
        %1851 = vmatprep.subr.mxu0 0.0
        %1852 = vmatpush1.msra.mxu0 %v509
        %1853 = vmatprep.subr.mxu0 0.0
        %1854 = vmatpush1.msra.mxu0 %v510
        %1855 = vmatprep.subr.mxu0 0.0
        %1856 = vmatpush1.msra.mxu0 %v511
        %1857 = vmatprep.subr.mxu0 0.0
        %1858 = vmatpush1.msra.mxu0 %v512
        %1859 = vmatprep.subr.mxu0 0.0
        %1860 = vmatpush1.msra.mxu0 %v513
        %1861 = vmatprep.subr.mxu0 0.0
        %1862 = vmatpush1.msra.mxu0 %v514
        %1863 = vmatprep.subr.mxu0 0.0
        %1864 = vmatpush1.msra.mxu0 %v515
        %1865 = vmatprep.subr.mxu0 0.0
        %1866 = vmatpush1.msra.mxu0 %v516
        %1867 = vmatprep.subr.mxu0 0.0
        %1868 = vmatpush1.msra.mxu0 %v517
        %1869 = vmatprep.subr.mxu0 0.0
        %1870 = vmatpush1.msra.mxu0 %v518
        %1871 = vmatprep.subr.mxu0 0.0
        %1872 = vmatpush1.msra.mxu0 %v519
        %1873 = vmatprep.subr.mxu0 0.0
        %1874 = vmatpush1.msra.mxu0 %v520
        %1875 = vmatprep.subr.mxu0 0.0
        %1876 = vmatpush1.msra.mxu0 %v521
        %1877 = vmatprep.mubr.f32.mxu0 %v1130
        %1878 = vmatmul.mubr.f32.gmra.mrb[0].mxu0 %v1128
        %v1879 = vpop.f32.mrb[0].mxu0
        %v1880 = vadd.f32 %v1810, %v1879
        %v1881 = vpop.f32.mrb[0].mxu0
        %1882 = vdwg.mxu0
        %1883 = vmatprep.subr.mxu0 0.0
        %1884 = vmatpush1.msra.mxu0 %v522
        %1885 = vmatprep.subr.mxu0 0.0
        %1886 = vmatpush1.msra.mxu0 %v523
        %1887 = vmatprep.subr.mxu0 0.0
        %1888 = vmatpush1.msra.mxu0 %v524
        %1889 = vmatprep.subr.mxu0 0.0
        %1890 = vmatpush1.msra.mxu0 %v525
        %1891 = vmatprep.subr.mxu0 0.0
        %1892 = vmatpush1.msra.mxu0 %v526
        %1893 = vmatprep.subr.mxu0 0.0
        %1894 = vmatpush1.msra.mxu0 %v527
        %1895 = vmatprep.subr.mxu0 0.0
        %1896 = vmatpush1.msra.mxu0 %v528
        %1897 = vmatprep.subr.mxu0 0.0
        %1898 = vmatpush1.msra.mxu0 %v529
        %1899 = vmatprep.subr.mxu0 0.0
        %1900 = vmatpush1.msra.mxu0 %v530
        %1901 = vmatprep.subr.mxu0 0.0
        %1902 = vmatpush1.msra.mxu0 %v531
        %1903 = vmatprep.subr.mxu0 0.0
        %1904 = vmatpush1.msra.mxu0 %v532
        %1905 = vmatprep.subr.mxu0 0.0
        %1906 = vmatpush1.msra.mxu0 %v533
        %1907 = vmatprep.subr.mxu0 0.0
        %1908 = vmatpush1.msra.mxu0 %v534
        %1909 = vmatprep.subr.mxu0 0.0
        %1910 = vmatpush1.msra.mxu0 %v535
        %1911 = vmatprep.subr.mxu0 0.0
        %1912 = vmatpush1.msra.mxu0 %v536
        %1913 = vmatprep.subr.mxu0 0.0
        %1914 = vmatpush1.msra.mxu0 %v537
        %1915 = vmatprep.subr.mxu0 0.0
        %1916 = vmatpush1.msra.mxu0 %v538
        %1917 = vmatprep.subr.mxu0 0.0
        %1918 = vmatpush1.msra.mxu0 %v539
        %1919 = vmatprep.subr.mxu0 0.0
        %1920 = vmatpush1.msra.mxu0 %v540
        %1921 = vmatprep.subr.mxu0 0.0
        %1922 = vmatpush1.msra.mxu0 %v541
        %1923 = vmatprep.subr.mxu0 0.0
        %1924 = vmatpush1.msra.mxu0 %v542
        %1925 = vmatprep.subr.mxu0 0.0
        %1926 = vmatpush1.msra.mxu0 %v543
        %1927 = vmatprep.subr.mxu0 0.0
        %1928 = vmatpush1.msra.mxu0 %v544
        %1929 = vmatprep.subr.mxu0 0.0
        %1930 = vmatpush1.msra.mxu0 %v545
        %1931 = vmatprep.subr.mxu0 0.0
        %1932 = vmatpush1.msra.mxu0 %v546
        %1933 = vmatprep.subr.mxu0 0.0
        %1934 = vmatpush1.msra.mxu0 %v547
        %1935 = vmatprep.subr.mxu0 0.0
        %1936 = vmatpush1.msra.mxu0 %v548
        %1937 = vmatprep.subr.mxu0 0.0
        %1938 = vmatpush1.msra.mxu0 %v549
        %1939 = vmatprep.subr.mxu0 0.0
        %1940 = vmatpush1.msra.mxu0 %v550
        %1941 = vmatprep.subr.mxu0 0.0
        %1942 = vmatpush1.msra.mxu0 %v551
        %1943 = vmatprep.subr.mxu0 0.0
        %1944 = vmatpush1.msra.mxu0 %v552
        %1945 = vmatprep.subr.mxu0 0.0
        %1946 = vmatpush1.msra.mxu0 %v553
        %1947 = vmatprep.mubr.f32.mxu0 %v1146
        %1948 = vmatmul.mubr.f32.gmra.mrb[0].mxu0 %v1138
        %v1949 = vpop.f32.mrb[0].mxu0
        %v1950 = vadd.f32 %v1880, %v1949
        %v1951 = vpop.f32.mrb[0].mxu0
        %1952 = vdwg.mxu0
        %1953 = vmatprep.subr.mxu0 0.0
        %1954 = vmatpush1.msra.mxu0 %v554
        %1955 = vmatprep.subr.mxu0 0.0
        %1956 = vmatpush1.msra.mxu0 %v555
        %1957 = vmatprep.subr.mxu0 0.0
        %1958 = vmatpush1.msra.mxu0 %v556
        %1959 = vmatprep.subr.mxu0 0.0
        %1960 = vmatpush1.msra.mxu0 %v557
        %1961 = vmatprep.subr.mxu0 0.0
        %1962 = vmatpush1.msra.mxu0 %v558
        %1963 = vmatprep.subr.mxu0 0.0
        %1964 = vmatpush1.msra.mxu0 %v559
        %1965 = vmatprep.subr.mxu0 0.0
        %1966 = vmatpush1.msra.mxu0 %v560
        %1967 = vmatprep.subr.mxu0 0.0
        %1968 = vmatpush1.msra.mxu0 %v561
        %1969 = vmatprep.subr.mxu0 0.0
        %1970 = vmatpush1.msra.mxu0 %v562
        %1971 = vmatprep.subr.mxu0 0.0
        %1972 = vmatpush1.msra.mxu0 %v563
        %1973 = vmatprep.subr.mxu0 0.0
        %1974 = vmatpush1.msra.mxu0 %v564
        %1975 = vmatprep.subr.mxu0 0.0
        %1976 = vmatpush1.msra.mxu0 %v565
        %1977 = vmatprep.subr.mxu0 0.0
        %1978 = vmatpush1.msra.mxu0 %v566
        %1979 = vmatprep.subr.mxu0 0.0
        %1980 = vmatpush1.msra.mxu0 %v567
        %1981 = vmatprep.subr.mxu0 0.0
        %1982 = vmatpush1.msra.mxu0 %v568
        %1983 = vmatprep.subr.mxu0 0.0
        %1984 = vmatpush1.msra.mxu0 %v569
        %1985 = vmatprep.subr.mxu0 0.0
        %1986 = vmatpush1.msra.mxu0 %v570
        %1987 = vmatprep.subr.mxu0 0.0
        %1988 = vmatpush1.msra.mxu0 %v571
        %1989 = vmatprep.subr.mxu0 0.0
        %1990 = vmatpush1.msra.mxu0 %v572
        %1991 = vmatprep.subr.mxu0 0.0
        %1992 = vmatpush1.msra.mxu0 %v573
        %1993 = vmatprep.subr.mxu0 0.0
        %1994 = vmatpush1.msra.mxu0 %v574
        %1995 = vmatprep.subr.mxu0 0.0
        %1996 = vmatpush1.msra.mxu0 %v575
        %1997 = vmatprep.subr.mxu0 0.0
        %1998 = vmatpush1.msra.mxu0 %v576
        %1999 = vmatprep.subr.mxu0 0.0
        %2000 = vmatpush1.msra.mxu0 %v577
        %2001 = vmatprep.subr.mxu0 0.0
        %2002 = vmatpush1.msra.mxu0 %v578
        %2003 = vmatprep.subr.mxu0 0.0
        %2004 = vmatpush1.msra.mxu0 %v579
        %2005 = vmatprep.subr.mxu0 0.0
        %2006 = vmatpush1.msra.mxu0 %v580
        %2007 = vmatprep.subr.mxu0 0.0
        %2008 = vmatpush1.msra.mxu0 %v581
        %2009 = vmatprep.subr.mxu0 0.0
        %2010 = vmatpush1.msra.mxu0 %v582
        %2011 = vmatprep.subr.mxu0 0.0
        %2012 = vmatpush1.msra.mxu0 %v583
        %2013 = vmatprep.subr.mxu0 0.0
        %2014 = vmatpush1.msra.mxu0 %v584
        %2015 = vmatprep.subr.mxu0 0.0
        %2016 = vmatpush1.msra.mxu0 %v585
        %2017 = vmatprep.mubr.f32.mxu0 %v1147
        %2018 = vmatmul.mubr.f32.gmra.mrb[0].mxu0 %v1145
        %v2019 = vpop.f32.mrb[0].mxu0
        %v2020 = vadd.f32 %v1950, %v2019
        %v2021 = vpop.f32.mrb[0].mxu0
        %2022 = vdwg.mxu0
        %2023 = vmatprep.subr.mxu0 0.0
        %2024 = vmatpush1.msra.mxu0 %v586
        %2025 = vmatprep.subr.mxu0 0.0
        %2026 = vmatpush1.msra.mxu0 %v587
        %2027 = vmatprep.subr.mxu0 0.0
        %2028 = vmatpush1.msra.mxu0 %v588
        %2029 = vmatprep.subr.mxu0 0.0
        %2030 = vmatpush1.msra.mxu0 %v589
        %2031 = vmatprep.subr.mxu0 0.0
        %2032 = vmatpush1.msra.mxu0 %v590
        %2033 = vmatprep.subr.mxu0 0.0
        %2034 = vmatpush1.msra.mxu0 %v591
        %2035 = vmatprep.subr.mxu0 0.0
        %2036 = vmatpush1.msra.mxu0 %v592
        %2037 = vmatprep.subr.mxu0 0.0
        %2038 = vmatpush1.msra.mxu0 %v593
        %2039 = vmatprep.subr.mxu0 0.0
        %2040 = vmatpush1.msra.mxu0 %v594
        %2041 = vmatprep.subr.mxu0 0.0
        %2042 = vmatpush1.msra.mxu0 %v595
        %2043 = vmatprep.subr.mxu0 0.0
        %2044 = vmatpush1.msra.mxu0 %v596
        %2045 = vmatprep.subr.mxu0 0.0
        %2046 = vmatpush1.msra.mxu0 %v597
        %2047 = vmatprep.subr.mxu0 0.0
        %2048 = vmatpush1.msra.mxu0 %v598
        %2049 = vmatprep.subr.mxu0 0.0
        %2050 = vmatpush1.msra.mxu0 %v599
        %2051 = vmatprep.subr.mxu0 0.0
        %2052 = vmatpush1.msra.mxu0 %v600
        %2053 = vmatprep.subr.mxu0 0.0
        %2054 = vmatpush1.msra.mxu0 %v601
        %2055 = vmatprep.subr.mxu0 0.0
        %2056 = vmatpush1.msra.mxu0 %v602
        %2057 = vmatprep.subr.mxu0 0.0
        %2058 = vmatpush1.msra.mxu0 %v603
        %2059 = vmatprep.subr.mxu0 0.0
        %2060 = vmatpush1.msra.mxu0 %v604
        %2061 = vmatprep.subr.mxu0 0.0
        %2062 = vmatpush1.msra.mxu0 %v605
        %2063 = vmatprep.subr.mxu0 0.0
        %2064 = vmatpush1.msra.mxu0 %v606
        %2065 = vmatprep.subr.mxu0 0.0
        %2066 = vmatpush1.msra.mxu0 %v607
        %2067 = vmatprep.subr.mxu0 0.0
        %2068 = vmatpush1.msra.mxu0 %v608
        %2069 = vmatprep.subr.mxu0 0.0
        %2070 = vmatpush1.msra.mxu0 %v609
        %2071 = vmatprep.subr.mxu0 0.0
        %2072 = vmatpush1.msra.mxu0 %v610
        %2073 = vmatprep.subr.mxu0 0.0
        %2074 = vmatpush1.msra.mxu0 %v611
        %2075 = vmatprep.subr.mxu0 0.0
        %2076 = vmatpush1.msra.mxu0 %v612
        %2077 = vmatprep.subr.mxu0 0.0
        %2078 = vmatpush1.msra.mxu0 %v613
        %2079 = vmatprep.subr.mxu0 0.0
        %2080 = vmatpush1.msra.mxu0 %v614
        %2081 = vmatprep.subr.mxu0 0.0
        %2082 = vmatpush1.msra.mxu0 %v615
        %2083 = vmatprep.subr.mxu0 0.0
        %2084 = vmatpush1.msra.mxu0 %v616
        %2085 = vmatprep.subr.mxu0 0.0
        %2086 = vmatpush1.msra.mxu0 %v617
        %2087 = vmatprep.mubr.f32.mxu0 %v1163
        %2088 = vmatmul.mubr.f32.gmra.mrb[0].mxu0 %v1155
        %v2089 = vpop.f32.mrb[0].mxu0
        %v2090 = vadd.f32 %v2020, %v2089
        %v2091 = vpop.f32.mrb[0].mxu0
        %2092 = vdwg.mxu0
        %2093 = vmatprep.subr.mxu0 0.0
        %2094 = vmatpush1.msra.mxu0 %v618
        %2095 = vmatprep.subr.mxu0 0.0
        %2096 = vmatpush1.msra.mxu0 %v619
        %2097 = vmatprep.subr.mxu0 0.0
        %2098 = vmatpush1.msra.mxu0 %v620
        %2099 = vmatprep.subr.mxu0 0.0
        %2100 = vmatpush1.msra.mxu0 %v621
        %2101 = vmatprep.subr.mxu0 0.0
        %2102 = vmatpush1.msra.mxu0 %v622
        %2103 = vmatprep.subr.mxu0 0.0
        %2104 = vmatpush1.msra.mxu0 %v623
        %2105 = vmatprep.subr.mxu0 0.0
        %2106 = vmatpush1.msra.mxu0 %v624
        %2107 = vmatprep.subr.mxu0 0.0
        %2108 = vmatpush1.msra.mxu0 %v625
        %2109 = vmatprep.subr.mxu0 0.0
        %2110 = vmatpush1.msra.mxu0 %v626
        %2111 = vmatprep.subr.mxu0 0.0
        %2112 = vmatpush1.msra.mxu0 %v627
        %2113 = vmatprep.subr.mxu0 0.0
        %2114 = vmatpush1.msra.mxu0 %v628
        %2115 = vmatprep.subr.mxu0 0.0
        %2116 = vmatpush1.msra.mxu0 %v629
        %2117 = vmatprep.subr.mxu0 0.0
        %2118 = vmatpush1.msra.mxu0 %v630
        %2119 = vmatprep.subr.mxu0 0.0
        %2120 = vmatpush1.msra.mxu0 %v631
        %2121 = vmatprep.subr.mxu0 0.0
        %2122 = vmatpush1.msra.mxu0 %v632
        %2123 = vmatprep.subr.mxu0 0.0
        %2124 = vmatpush1.msra.mxu0 %v633
        %2125 = vmatprep.subr.mxu0 0.0
        %2126 = vmatpush1.msra.mxu0 %v634
        %2127 = vmatprep.subr.mxu0 0.0
        %2128 = vmatpush1.msra.mxu0 %v635
        %2129 = vmatprep.subr.mxu0 0.0
        %2130 = vmatpush1.msra.mxu0 %v636
        %2131 = vmatprep.subr.mxu0 0.0
        %2132 = vmatpush1.msra.mxu0 %v637
        %2133 = vmatprep.subr.mxu0 0.0
        %2134 = vmatpush1.msra.mxu0 %v638
        %2135 = vmatprep.subr.mxu0 0.0
        %2136 = vmatpush1.msra.mxu0 %v639
        %2137 = vmatprep.subr.mxu0 0.0
        %2138 = vmatpush1.msra.mxu0 %v640
        %2139 = vmatprep.subr.mxu0 0.0
        %2140 = vmatpush1.msra.mxu0 %v641
        %2141 = vmatprep.subr.mxu0 0.0
        %2142 = vmatpush1.msra.mxu0 %v642
        %2143 = vmatprep.subr.mxu0 0.0
        %2144 = vmatpush1.msra.mxu0 %v643
        %2145 = vmatprep.subr.mxu0 0.0
        %2146 = vmatpush1.msra.mxu0 %v644
        %2147 = vmatprep.subr.mxu0 0.0
        %2148 = vmatpush1.msra.mxu0 %v645
        %2149 = vmatprep.subr.mxu0 0.0
        %2150 = vmatpush1.msra.mxu0 %v646
        %2151 = vmatprep.subr.mxu0 0.0
        %2152 = vmatpush1.msra.mxu0 %v647
        %2153 = vmatprep.subr.mxu0 0.0
        %2154 = vmatpush1.msra.mxu0 %v648
        %2155 = vmatprep.subr.mxu0 0.0
        %2156 = vmatpush1.msra.mxu0 %v649
        %2157 = vmatprep.mubr.f32.mxu0 %v1164
        %2158 = vmatmul.mubr.f32.gmra.mrb[0].mxu0 %v1162
        %v2159 = vpop.f32.mrb[0].mxu0
        %v2160 = vadd.f32 %v2090, %v2159
        %v2161 = vpop.f32.mrb[0].mxu0
        %2162 = vdwg.mxu0
        %2163 = vmatprep.subr.mxu0 0.0
        %2164 = vmatpush1.msra.mxu0 %v650
        %2165 = vmatprep.subr.mxu0 0.0
        %2166 = vmatpush1.msra.mxu0 %v651
        %2167 = vmatprep.subr.mxu0 0.0
        %2168 = vmatpush1.msra.mxu0 %v652
        %2169 = vmatprep.subr.mxu0 0.0
        %2170 = vmatpush1.msra.mxu0 %v653
        %2171 = vmatprep.subr.mxu0 0.0
        %2172 = vmatpush1.msra.mxu0 %v654
        %2173 = vmatprep.subr.mxu0 0.0
        %2174 = vmatpush1.msra.mxu0 %v655
        %2175 = vmatprep.subr.mxu0 0.0
        %2176 = vmatpush1.msra.mxu0 %v656
        %2177 = vmatprep.subr.mxu0 0.0
        %2178 = vmatpush1.msra.mxu0 %v657
        %2179 = vmatprep.subr.mxu0 0.0
        %2180 = vmatpush1.msra.mxu0 %v658
        %2181 = vmatprep.subr.mxu0 0.0
        %2182 = vmatpush1.msra.mxu0 %v659
        %2183 = vmatprep.subr.mxu0 0.0
        %2184 = vmatpush1.msra.mxu0 %v660
        %2185 = vmatprep.subr.mxu0 0.0
        %2186 = vmatpush1.msra.mxu0 %v661
        %2187 = vmatprep.subr.mxu0 0.0
        %2188 = vmatpush1.msra.mxu0 %v662
        %2189 = vmatprep.subr.mxu0 0.0
        %2190 = vmatpush1.msra.mxu0 %v663
        %2191 = vmatprep.subr.mxu0 0.0
        %2192 = vmatpush1.msra.mxu0 %v664
        %2193 = vmatprep.subr.mxu0 0.0
        %2194 = vmatpush1.msra.mxu0 %v665
        %2195 = vmatprep.subr.mxu0 0.0
        %2196 = vmatpush1.msra.mxu0 %v666
        %2197 = vmatprep.subr.mxu0 0.0
        %2198 = vmatpush1.msra.mxu0 %v667
        %2199 = vmatprep.subr.mxu0 0.0
        %2200 = vmatpush1.msra.mxu0 %v668
        %2201 = vmatprep.subr.mxu0 0.0
        %2202 = vmatpush1.msra.mxu0 %v669
        %2203 = vmatprep.subr.mxu0 0.0
        %2204 = vmatpush1.msra.mxu0 %v670
        %2205 = vmatprep.subr.mxu0 0.0
        %2206 = vmatpush1.msra.mxu0 %v671
        %2207 = vmatprep.subr.mxu0 0.0
        %2208 = vmatpush1.msra.mxu0 %v672
        %2209 = vmatprep.subr.mxu0 0.0
        %2210 = vmatpush1.msra.mxu0 %v673
        %2211 = vmatprep.subr.mxu0 0.0
        %2212 = vmatpush1.msra.mxu0 %v674
        %2213 = vmatprep.subr.mxu0 0.0
        %2214 = vmatpush1.msra.mxu0 %v675
        %2215 = vmatprep.subr.mxu0 0.0
        %2216 = vmatpush1.msra.mxu0 %v676
        %2217 = vmatprep.subr.mxu0 0.0
        %2218 = vmatpush1.msra.mxu0 %v677
        %2219 = vmatprep.subr.mxu0 0.0
        %2220 = vmatpush1.msra.mxu0 %v678
        %2221 = vmatprep.subr.mxu0 0.0
        %2222 = vmatpush1.msra.mxu0 %v679
        %2223 = vmatprep.subr.mxu0 0.0
        %2224 = vmatpush1.msra.mxu0 %v680
        %2225 = vmatprep.subr.mxu0 0.0
        %2226 = vmatpush1.msra.mxu0 %v681
        %2227 = vmatprep.mubr.f32.mxu0 %v1180
        %2228 = vmatmul.mubr.f32.gmra.mrb[0].mxu0 %v1172
        %v2229 = vpop.f32.mrb[0].mxu0
        %v2230 = vadd.f32 %v2160, %v2229
        %v2231 = vpop.f32.mrb[0].mxu0
        %2232 = vdwg.mxu0
        %2233 = vmatprep.subr.mxu0 0.0
        %2234 = vmatpush1.msra.mxu0 %v682
        %2235 = vmatprep.subr.mxu0 0.0
        %2236 = vmatpush1.msra.mxu0 %v683
        %2237 = vmatprep.subr.mxu0 0.0
        %2238 = vmatpush1.msra.mxu0 %v684
        %2239 = vmatprep.subr.mxu0 0.0
        %2240 = vmatpush1.msra.mxu0 %v685
        %2241 = vmatprep.subr.mxu0 0.0
        %2242 = vmatpush1.msra.mxu0 %v686
        %2243 = vmatprep.subr.mxu0 0.0
        %2244 = vmatpush1.msra.mxu0 %v687
        %2245 = vmatprep.subr.mxu0 0.0
        %2246 = vmatpush1.msra.mxu0 %v688
        %2247 = vmatprep.subr.mxu0 0.0
        %2248 = vmatpush1.msra.mxu0 %v689
        %2249 = vmatprep.subr.mxu0 0.0
        %2250 = vmatpush1.msra.mxu0 %v690
        %2251 = vmatprep.subr.mxu0 0.0
        %2252 = vmatpush1.msra.mxu0 %v691
        %2253 = vmatprep.subr.mxu0 0.0
        %2254 = vmatpush1.msra.mxu0 %v692
        %2255 = vmatprep.subr.mxu0 0.0
        %2256 = vmatpush1.msra.mxu0 %v693
        %2257 = vmatprep.subr.mxu0 0.0
        %2258 = vmatpush1.msra.mxu0 %v694
        %2259 = vmatprep.subr.mxu0 0.0
        %2260 = vmatpush1.msra.mxu0 %v695
        %2261 = vmatprep.subr.mxu0 0.0
        %2262 = vmatpush1.msra.mxu0 %v696
        %2263 = vmatprep.subr.mxu0 0.0
        %2264 = vmatpush1.msra.mxu0 %v697
        %2265 = vmatprep.subr.mxu0 0.0
        %2266 = vmatpush1.msra.mxu0 %v698
        %2267 = vmatprep.subr.mxu0 0.0
        %2268 = vmatpush1.msra.mxu0 %v699
        %2269 = vmatprep.subr.mxu0 0.0
        %2270 = vmatpush1.msra.mxu0 %v700
        %2271 = vmatprep.subr.mxu0 0.0
        %2272 = vmatpush1.msra.mxu0 %v701
        %2273 = vmatprep.subr.mxu0 0.0
        %2274 = vmatpush1.msra.mxu0 %v702
        %2275 = vmatprep.subr.mxu0 0.0
        %2276 = vmatpush1.msra.mxu0 %v703
        %2277 = vmatprep.subr.mxu0 0.0
        %2278 = vmatpush1.msra.mxu0 %v704
        %2279 = vmatprep.subr.mxu0 0.0
        %2280 = vmatpush1.msra.mxu0 %v705
        %2281 = vmatprep.subr.mxu0 0.0
        %2282 = vmatpush1.msra.mxu0 %v706
        %2283 = vmatprep.subr.mxu0 0.0
        %2284 = vmatpush1.msra.mxu0 %v707
        %2285 = vmatprep.subr.mxu0 0.0
        %2286 = vmatpush1.msra.mxu0 %v708
        %2287 = vmatprep.subr.mxu0 0.0
        %2288 = vmatpush1.msra.mxu0 %v709
        %2289 = vmatprep.subr.mxu0 0.0
        %2290 = vmatpush1.msra.mxu0 %v710
        %2291 = vmatprep.subr.mxu0 0.0
        %2292 = vmatpush1.msra.mxu0 %v711
        %2293 = vmatprep.subr.mxu0 0.0
        %2294 = vmatpush1.msra.mxu0 %v712
        %2295 = vmatprep.subr.mxu0 0.0
        %2296 = vmatpush1.msra.mxu0 %v713
        %2297 = vmatprep.mubr.f32.mxu0 %v1181
        %2298 = vmatmul.mubr.f32.gmra.mrb[0].mxu0 %v1179
        %v2299 = vpop.f32.mrb[0].mxu0
        %v2300 = vadd.f32 %v2230, %v2299
        %v2301 = vpop.f32.mrb[0].mxu0
        %2302 = vdwg.mxu0
        %2303 = vmatprep.subr.mxu0 0.0
        %2304 = vmatpush1.msra.mxu0 %v714
        %2305 = vmatprep.subr.mxu0 0.0
        %2306 = vmatpush1.msra.mxu0 %v715
        %2307 = vmatprep.subr.mxu0 0.0
        %2308 = vmatpush1.msra.mxu0 %v716
        %2309 = vmatprep.subr.mxu0 0.0
        %2310 = vmatpush1.msra.mxu0 %v717
        %2311 = vmatprep.subr.mxu0 0.0
        %2312 = vmatpush1.msra.mxu0 %v718
        %2313 = vmatprep.subr.mxu0 0.0
        %2314 = vmatpush1.msra.mxu0 %v719
        %2315 = vmatprep.subr.mxu0 0.0
        %2316 = vmatpush1.msra.mxu0 %v720
        %2317 = vmatprep.subr.mxu0 0.0
        %2318 = vmatpush1.msra.mxu0 %v721
        %2319 = vmatprep.subr.mxu0 0.0
        %2320 = vmatpush1.msra.mxu0 %v722
        %2321 = vmatprep.subr.mxu0 0.0
        %2322 = vmatpush1.msra.mxu0 %v723
        %2323 = vmatprep.subr.mxu0 0.0
        %2324 = vmatpush1.msra.mxu0 %v724
        %2325 = vmatprep.subr.mxu0 0.0
        %2326 = vmatpush1.msra.mxu0 %v725
        %2327 = vmatprep.subr.mxu0 0.0
        %2328 = vmatpush1.msra.mxu0 %v726
        %2329 = vmatprep.subr.mxu0 0.0
        %2330 = vmatpush1.msra.mxu0 %v727
        %2331 = vmatprep.subr.mxu0 0.0
        %2332 = vmatpush1.msra.mxu0 %v728
        %2333 = vmatprep.subr.mxu0 0.0
        %2334 = vmatpush1.msra.mxu0 %v729
        %2335 = vmatprep.subr.mxu0 0.0
        %2336 = vmatpush1.msra.mxu0 %v730
        %2337 = vmatprep.subr.mxu0 0.0
        %2338 = vmatpush1.msra.mxu0 %v731
        %2339 = vmatprep.subr.mxu0 0.0
        %2340 = vmatpush1.msra.mxu0 %v732
        %2341 = vmatprep.subr.mxu0 0.0
        %2342 = vmatpush1.msra.mxu0 %v733
        %2343 = vmatprep.subr.mxu0 0.0
        %2344 = vmatpush1.msra.mxu0 %v734
        %2345 = vmatprep.subr.mxu0 0.0
        %2346 = vmatpush1.msra.mxu0 %v735
        %2347 = vmatprep.subr.mxu0 0.0
        %2348 = vmatpush1.msra.mxu0 %v736
        %2349 = vmatprep.subr.mxu0 0.0
        %2350 = vmatpush1.msra.mxu0 %v737
        %2351 = vmatprep.subr.mxu0 0.0
        %2352 = vmatpush1.msra.mxu0 %v738
        %2353 = vmatprep.subr.mxu0 0.0
        %2354 = vmatpush1.msra.mxu0 %v739
        %2355 = vmatprep.subr.mxu0 0.0
        %2356 = vmatpush1.msra.mxu0 %v740
        %2357 = vmatprep.subr.mxu0 0.0
        %2358 = vmatpush1.msra.mxu0 %v741
        %2359 = vmatprep.subr.mxu0 0.0
        %2360 = vmatpush1.msra.mxu0 %v742
        %2361 = vmatprep.subr.mxu0 0.0
        %2362 = vmatpush1.msra.mxu0 %v743
        %2363 = vmatprep.subr.mxu0 0.0
        %2364 = vmatpush1.msra.mxu0 %v744
        %2365 = vmatprep.subr.mxu0 0.0
        %2366 = vmatpush1.msra.mxu0 %v745
        %2367 = vmatprep.mubr.f32.mxu0 %v1197
        %2368 = vmatmul.mubr.f32.gmra.mrb[0].mxu0 %v1189
        %v2369 = vpop.f32.mrb[0].mxu0
        %v2370 = vadd.f32 %v2300, %v2369
        %v2371 = vpop.f32.mrb[0].mxu0
        %2372 = vdwg.mxu0
        %2373 = vmatprep.subr.mxu0 0.0
        %2374 = vmatpush1.msra.mxu0 %v746
        %2375 = vmatprep.subr.mxu0 0.0
        %2376 = vmatpush1.msra.mxu0 %v747
        %2377 = vmatprep.subr.mxu0 0.0
        %2378 = vmatpush1.msra.mxu0 %v748
        %2379 = vmatprep.subr.mxu0 0.0
        %2380 = vmatpush1.msra.mxu0 %v749
        %2381 = vmatprep.subr.mxu0 0.0
        %2382 = vmatpush1.msra.mxu0 %v750
        %2383 = vmatprep.subr.mxu0 0.0
        %2384 = vmatpush1.msra.mxu0 %v751
        %2385 = vmatprep.subr.mxu0 0.0
        %2386 = vmatpush1.msra.mxu0 %v752
        %2387 = vmatprep.subr.mxu0 0.0
        %2388 = vmatpush1.msra.mxu0 %v753
        %2389 = vmatprep.subr.mxu0 0.0
        %2390 = vmatpush1.msra.mxu0 %v754
        %2391 = vmatprep.subr.mxu0 0.0
        %2392 = vmatpush1.msra.mxu0 %v755
        %2393 = vmatprep.subr.mxu0 0.0
        %2394 = vmatpush1.msra.mxu0 %v756
        %2395 = vmatprep.subr.mxu0 0.0
        %2396 = vmatpush1.msra.mxu0 %v757
        %2397 = vmatprep.subr.mxu0 0.0
        %2398 = vmatpush1.msra.mxu0 %v758
        %2399 = vmatprep.subr.mxu0 0.0
        %2400 = vmatpush1.msra.mxu0 %v759
        %2401 = vmatprep.subr.mxu0 0.0
        %2402 = vmatpush1.msra.mxu0 %v760
        %2403 = vmatprep.subr.mxu0 0.0
        %2404 = vmatpush1.msra.mxu0 %v761
        %2405 = vmatprep.subr.mxu0 0.0
        %2406 = vmatpush1.msra.mxu0 %v762
        %2407 = vmatprep.subr.mxu0 0.0
        %2408 = vmatpush1.msra.mxu0 %v763
        %2409 = vmatprep.subr.mxu0 0.0
        %2410 = vmatpush1.msra.mxu0 %v764
        %2411 = vmatprep.subr.mxu0 0.0
        %2412 = vmatpush1.msra.mxu0 %v765
        %2413 = vmatprep.subr.mxu0 0.0
        %2414 = vmatpush1.msra.mxu0 %v766
        %2415 = vmatprep.subr.mxu0 0.0
        %2416 = vmatpush1.msra.mxu0 %v767
        %2417 = vmatprep.subr.mxu0 0.0
        %2418 = vmatpush1.msra.mxu0 %v768
        %2419 = vmatprep.subr.mxu0 0.0
        %2420 = vmatpush1.msra.mxu0 %v769
        %2421 = vmatprep.subr.mxu0 0.0
        %2422 = vmatpush1.msra.mxu0 %v770
        %2423 = vmatprep.subr.mxu0 0.0
        %2424 = vmatpush1.msra.mxu0 %v771
        %2425 = vmatprep.subr.mxu0 0.0
        %2426 = vmatpush1.msra.mxu0 %v772
        %2427 = vmatprep.subr.mxu0 0.0
        %2428 = vmatpush1.msra.mxu0 %v773
        %2429 = vmatprep.subr.mxu0 0.0
        %2430 = vmatpush1.msra.mxu0 %v774
        %2431 = vmatprep.subr.mxu0 0.0
        %2432 = vmatpush1.msra.mxu0 %v775
        %2433 = vmatprep.subr.mxu0 0.0
        %2434 = vmatpush1.msra.mxu0 %v776
        %2435 = vmatprep.subr.mxu0 0.0
        %2436 = vmatpush1.msra.mxu0 %v777
        %2437 = vmatprep.mubr.f32.mxu0 %v1198
        %2438 = vmatmul.mubr.f32.gmra.mrb[0].mxu0 %v1196
        %v2439 = vpop.f32.mrb[0].mxu0
        %v2440 = vadd.f32 %v2370, %v2439
        %v2441 = vpop.f32.mrb[0].mxu0
        %2442 = vdwg.mxu0
        %2443 = vmatprep.subr.mxu0 0.0
        %2444 = vmatpush1.msra.mxu0 %v778
        %2445 = vmatprep.subr.mxu0 0.0
        %2446 = vmatpush1.msra.mxu0 %v779
        %2447 = vmatprep.subr.mxu0 0.0
        %2448 = vmatpush1.msra.mxu0 %v780
        %2449 = vmatprep.subr.mxu0 0.0
        %2450 = vmatpush1.msra.mxu0 %v781
        %2451 = vmatprep.subr.mxu0 0.0
        %2452 = vmatpush1.msra.mxu0 %v782
        %2453 = vmatprep.subr.mxu0 0.0
        %2454 = vmatpush1.msra.mxu0 %v783
        %2455 = vmatprep.subr.mxu0 0.0
        %2456 = vmatpush1.msra.mxu0 %v784
        %2457 = vmatprep.subr.mxu0 0.0
        %2458 = vmatpush1.msra.mxu0 %v785
        %2459 = vmatprep.subr.mxu0 0.0
        %2460 = vmatpush1.msra.mxu0 %v786
        %2461 = vmatprep.subr.mxu0 0.0
        %2462 = vmatpush1.msra.mxu0 %v787
        %2463 = vmatprep.subr.mxu0 0.0
        %2464 = vmatpush1.msra.mxu0 %v788
        %2465 = vmatprep.subr.mxu0 0.0
        %2466 = vmatpush1.msra.mxu0 %v789
        %2467 = vmatprep.subr.mxu0 0.0
        %2468 = vmatpush1.msra.mxu0 %v790
        %2469 = vmatprep.subr.mxu0 0.0
        %2470 = vmatpush1.msra.mxu0 %v791
        %2471 = vmatprep.subr.mxu0 0.0
        %2472 = vmatpush1.msra.mxu0 %v792
        %2473 = vmatprep.subr.mxu0 0.0
        %2474 = vmatpush1.msra.mxu0 %v793
        %2475 = vmatprep.subr.mxu0 0.0
        %2476 = vmatpush1.msra.mxu0 %v794
        %2477 = vmatprep.subr.mxu0 0.0
        %2478 = vmatpush1.msra.mxu0 %v795
        %2479 = vmatprep.subr.mxu0 0.0
        %2480 = vmatpush1.msra.mxu0 %v796
        %2481 = vmatprep.subr.mxu0 0.0
        %2482 = vmatpush1.msra.mxu0 %v797
        %2483 = vmatprep.subr.mxu0 0.0
        %2484 = vmatpush1.msra.mxu0 %v798
        %2485 = vmatprep.subr.mxu0 0.0
        %2486 = vmatpush1.msra.mxu0 %v799
        %2487 = vmatprep.subr.mxu0 0.0
        %2488 = vmatpush1.msra.mxu0 %v800
        %2489 = vmatprep.subr.mxu0 0.0
        %2490 = vmatpush1.msra.mxu0 %v801
        %2491 = vmatprep.subr.mxu0 0.0
        %2492 = vmatpush1.msra.mxu0 %v802
        %2493 = vmatprep.subr.mxu0 0.0
        %2494 = vmatpush1.msra.mxu0 %v803
        %2495 = vmatprep.subr.mxu0 0.0
        %2496 = vmatpush1.msra.mxu0 %v804
        %2497 = vmatprep.subr.mxu0 0.0
        %2498 = vmatpush1.msra.mxu0 %v805
        %2499 = vmatprep.subr.mxu0 0.0
        %2500 = vmatpush1.msra.mxu0 %v806
        %2501 = vmatprep.subr.mxu0 0.0
        %2502 = vmatpush1.msra.mxu0 %v807
        %2503 = vmatprep.subr.mxu0 0.0
        %2504 = vmatpush1.msra.mxu0 %v808
        %2505 = vmatprep.subr.mxu0 0.0
        %2506 = vmatpush1.msra.mxu0 %v809
        %2507 = vmatprep.mubr.f32.mxu0 %v1214
        %2508 = vmatmul.mubr.f32.gmra.mrb[0].mxu0 %v1206
        %v2509 = vpop.f32.mrb[0].mxu0
        %v2510 = vadd.f32 %v2440, %v2509
        %v2511 = vpop.f32.mrb[0].mxu0
        %2512 = vdwg.mxu0
        %2513 = vmatprep.subr.mxu0 0.0
        %2514 = vmatpush1.msra.mxu0 %v810
        %2515 = vmatprep.subr.mxu0 0.0
        %2516 = vmatpush1.msra.mxu0 %v811
        %2517 = vmatprep.subr.mxu0 0.0
        %2518 = vmatpush1.msra.mxu0 %v812
        %2519 = vmatprep.subr.mxu0 0.0
        %2520 = vmatpush1.msra.mxu0 %v813
        %2521 = vmatprep.subr.mxu0 0.0
        %2522 = vmatpush1.msra.mxu0 %v814
        %2523 = vmatprep.subr.mxu0 0.0
        %2524 = vmatpush1.msra.mxu0 %v815
        %2525 = vmatprep.subr.mxu0 0.0
        %2526 = vmatpush1.msra.mxu0 %v816
        %2527 = vmatprep.subr.mxu0 0.0
        %2528 = vmatpush1.msra.mxu0 %v817
        %2529 = vmatprep.subr.mxu0 0.0
        %2530 = vmatpush1.msra.mxu0 %v818
        %2531 = vmatprep.subr.mxu0 0.0
        %2532 = vmatpush1.msra.mxu0 %v819
        %2533 = vmatprep.subr.mxu0 0.0
        %2534 = vmatpush1.msra.mxu0 %v820
        %2535 = vmatprep.subr.mxu0 0.0
        %2536 = vmatpush1.msra.mxu0 %v821
        %2537 = vmatprep.subr.mxu0 0.0
        %2538 = vmatpush1.msra.mxu0 %v822
        %2539 = vmatprep.subr.mxu0 0.0
        %2540 = vmatpush1.msra.mxu0 %v823
        %2541 = vmatprep.subr.mxu0 0.0
        %2542 = vmatpush1.msra.mxu0 %v824
        %2543 = vmatprep.subr.mxu0 0.0
        %2544 = vmatpush1.msra.mxu0 %v825
        %2545 = vmatprep.subr.mxu0 0.0
        %2546 = vmatpush1.msra.mxu0 %v826
        %2547 = vmatprep.subr.mxu0 0.0
        %2548 = vmatpush1.msra.mxu0 %v827
        %2549 = vmatprep.subr.mxu0 0.0
        %2550 = vmatpush1.msra.mxu0 %v828
        %2551 = vmatprep.subr.mxu0 0.0
        %2552 = vmatpush1.msra.mxu0 %v829
        %2553 = vmatprep.subr.mxu0 0.0
        %2554 = vmatpush1.msra.mxu0 %v830
        %2555 = vmatprep.subr.mxu0 0.0
        %2556 = vmatpush1.msra.mxu0 %v831
        %2557 = vmatprep.subr.mxu0 0.0
        %2558 = vmatpush1.msra.mxu0 %v832
        %2559 = vmatprep.subr.mxu0 0.0
        %2560 = vmatpush1.msra.mxu0 %v833
        %2561 = vmatprep.subr.mxu0 0.0
        %2562 = vmatpush1.msra.mxu0 %v834
        %2563 = vmatprep.subr.mxu0 0.0
        %2564 = vmatpush1.msra.mxu0 %v835
        %2565 = vmatprep.subr.mxu0 0.0
        %2566 = vmatpush1.msra.mxu0 %v836
        %2567 = vmatprep.subr.mxu0 0.0
        %2568 = vmatpush1.msra.mxu0 %v837
        %2569 = vmatprep.subr.mxu0 0.0
        %2570 = vmatpush1.msra.mxu0 %v838
        %2571 = vmatprep.subr.mxu0 0.0
        %2572 = vmatpush1.msra.mxu0 %v839
        %2573 = vmatprep.subr.mxu0 0.0
        %2574 = vmatpush1.msra.mxu0 %v840
        %2575 = vmatprep.subr.mxu0 0.0
        %2576 = vmatpush1.msra.mxu0 %v841
        %2577 = vmatprep.mubr.f32.mxu0 %v1215
        %2578 = vmatmul.mubr.f32.gmra.mrb[0].mxu0 %v1213
        %v2579 = vpop.f32.mrb[0].mxu0
        %v2580 = vadd.f32 %v2510, %v2579
        %v2581 = vpop.f32.mrb[0].mxu0
        %2582 = vdwg.mxu0
        %2583 = vmatprep.subr.mxu0 0.0
        %2584 = vmatpush1.msra.mxu0 %v842
        %2585 = vmatprep.subr.mxu0 0.0
        %2586 = vmatpush1.msra.mxu0 %v843
        %2587 = vmatprep.subr.mxu0 0.0
        %2588 = vmatpush1.msra.mxu0 %v844
        %2589 = vmatprep.subr.mxu0 0.0
        %2590 = vmatpush1.msra.mxu0 %v845
        %2591 = vmatprep.subr.mxu0 0.0
        %2592 = vmatpush1.msra.mxu0 %v846
        %2593 = vmatprep.subr.mxu0 0.0
        %2594 = vmatpush1.msra.mxu0 %v847
        %2595 = vmatprep.subr.mxu0 0.0
        %2596 = vmatpush1.msra.mxu0 %v848
        %2597 = vmatprep.subr.mxu0 0.0
        %2598 = vmatpush1.msra.mxu0 %v849
        %2599 = vmatprep.subr.mxu0 0.0
        %2600 = vmatpush1.msra.mxu0 %v850
        %2601 = vmatprep.subr.mxu0 0.0
        %2602 = vmatpush1.msra.mxu0 %v851
        %2603 = vmatprep.subr.mxu0 0.0
        %2604 = vmatpush1.msra.mxu0 %v852
        %2605 = vmatprep.subr.mxu0 0.0
        %2606 = vmatpush1.msra.mxu0 %v853
        %2607 = vmatprep.subr.mxu0 0.0
        %2608 = vmatpush1.msra.mxu0 %v854
        %2609 = vmatprep.subr.mxu0 0.0
        %2610 = vmatpush1.msra.mxu0 %v855
        %2611 = vmatprep.subr.mxu0 0.0
        %2612 = vmatpush1.msra.mxu0 %v856
        %2613 = vmatprep.subr.mxu0 0.0
        %2614 = vmatpush1.msra.mxu0 %v857
        %2615 = vmatprep.subr.mxu0 0.0
        %2616 = vmatpush1.msra.mxu0 %v858
        %2617 = vmatprep.subr.mxu0 0.0
        %2618 = vmatpush1.msra.mxu0 %v859
        %2619 = vmatprep.subr.mxu0 0.0
        %2620 = vmatpush1.msra.mxu0 %v860
        %2621 = vmatprep.subr.mxu0 0.0
        %2622 = vmatpush1.msra.mxu0 %v861
        %2623 = vmatprep.subr.mxu0 0.0
        %2624 = vmatpush1.msra.mxu0 %v862
        %2625 = vmatprep.subr.mxu0 0.0
        %2626 = vmatpush1.msra.mxu0 %v863
        %2627 = vmatprep.subr.mxu0 0.0
        %2628 = vmatpush1.msra.mxu0 %v864
        %2629 = vmatprep.subr.mxu0 0.0
        %2630 = vmatpush1.msra.mxu0 %v865
        %2631 = vmatprep.subr.mxu0 0.0
        %2632 = vmatpush1.msra.mxu0 %v866
        %2633 = vmatprep.subr.mxu0 0.0
        %2634 = vmatpush1.msra.mxu0 %v867
        %2635 = vmatprep.subr.mxu0 0.0
        %2636 = vmatpush1.msra.mxu0 %v868
        %2637 = vmatprep.subr.mxu0 0.0
        %2638 = vmatpush1.msra.mxu0 %v869
        %2639 = vmatprep.subr.mxu0 0.0
        %2640 = vmatpush1.msra.mxu0 %v870
        %2641 = vmatprep.subr.mxu0 0.0
        %2642 = vmatpush1.msra.mxu0 %v871
        %2643 = vmatprep.subr.mxu0 0.0
        %2644 = vmatpush1.msra.mxu0 %v872
        %2645 = vmatprep.subr.mxu0 0.0
        %2646 = vmatpush1.msra.mxu0 %v873
        %2647 = vmatprep.mubr.f32.mxu0 %v1231
        %2648 = vmatmul.mubr.f32.gmra.mrb[0].mxu0 %v1223
        %v2649 = vpop.f32.mrb[0].mxu0
        %v2650 = vadd.f32 %v2580, %v2649
        %v2651 = vpop.f32.mrb[0].mxu0
        %2652 = vdwg.mxu0
        %2653 = vmatprep.subr.mxu0 0.0
        %2654 = vmatpush1.msra.mxu0 %v874
        %2655 = vmatprep.subr.mxu0 0.0
        %2656 = vmatpush1.msra.mxu0 %v875
        %2657 = vmatprep.subr.mxu0 0.0
        %2658 = vmatpush1.msra.mxu0 %v876
        %2659 = vmatprep.subr.mxu0 0.0
        %2660 = vmatpush1.msra.mxu0 %v877
        %2661 = vmatprep.subr.mxu0 0.0
        %2662 = vmatpush1.msra.mxu0 %v878
        %2663 = vmatprep.subr.mxu0 0.0
        %2664 = vmatpush1.msra.mxu0 %v879
        %2665 = vmatprep.subr.mxu0 0.0
        %2666 = vmatpush1.msra.mxu0 %v880
        %2667 = vmatprep.subr.mxu0 0.0
        %2668 = vmatpush1.msra.mxu0 %v881
        %2669 = vmatprep.subr.mxu0 0.0
        %2670 = vmatpush1.msra.mxu0 %v882
        %2671 = vmatprep.subr.mxu0 0.0
        %2672 = vmatpush1.msra.mxu0 %v883
        %2673 = vmatprep.subr.mxu0 0.0
        %2674 = vmatpush1.msra.mxu0 %v884
        %2675 = vmatprep.subr.mxu0 0.0
        %2676 = vmatpush1.msra.mxu0 %v885
        %2677 = vmatprep.subr.mxu0 0.0
        %2678 = vmatpush1.msra.mxu0 %v886
        %2679 = vmatprep.subr.mxu0 0.0
        %2680 = vmatpush1.msra.mxu0 %v887
        %2681 = vmatprep.subr.mxu0 0.0
        %2682 = vmatpush1.msra.mxu0 %v888
        %2683 = vmatprep.subr.mxu0 0.0
        %2684 = vmatpush1.msra.mxu0 %v889
        %2685 = vmatprep.subr.mxu0 0.0
        %2686 = vmatpush1.msra.mxu0 %v890
        %2687 = vmatprep.subr.mxu0 0.0
        %2688 = vmatpush1.msra.mxu0 %v891
        %2689 = vmatprep.subr.mxu0 0.0
        %2690 = vmatpush1.msra.mxu0 %v892
        %2691 = vmatprep.subr.mxu0 0.0
        %2692 = vmatpush1.msra.mxu0 %v893
        %2693 = vmatprep.subr.mxu0 0.0
        %2694 = vmatpush1.msra.mxu0 %v894
        %2695 = vmatprep.subr.mxu0 0.0
        %2696 = vmatpush1.msra.mxu0 %v895
        %2697 = vmatprep.subr.mxu0 0.0
        %2698 = vmatpush1.msra.mxu0 %v896
        %2699 = vmatprep.subr.mxu0 0.0
        %2700 = vmatpush1.msra.mxu0 %v897
        %2701 = vmatprep.subr.mxu0 0.0
        %2702 = vmatpush1.msra.mxu0 %v898
        %2703 = vmatprep.subr.mxu0 0.0
        %2704 = vmatpush1.msra.mxu0 %v899
        %2705 = vmatprep.subr.mxu0 0.0
        %2706 = vmatpush1.msra.mxu0 %v900
        %2707 = vmatprep.subr.mxu0 0.0
        %2708 = vmatpush1.msra.mxu0 %v901
        %2709 = vmatprep.subr.mxu0 0.0
        %2710 = vmatpush1.msra.mxu0 %v902
        %2711 = vmatprep.subr.mxu0 0.0
        %2712 = vmatpush1.msra.mxu0 %v903
        %2713 = vmatprep.subr.mxu0 0.0
        %2714 = vmatpush1.msra.mxu0 %v904
        %2715 = vmatprep.subr.mxu0 0.0
        %2716 = vmatpush1.msra.mxu0 %v905
        %2717 = vmatprep.mubr.f32.mxu0 %v1232
        %2718 = vmatmul.mubr.f32.gmra.mrb[0].mxu0 %v1230
        %v2719 = vpop.f32.mrb[0].mxu0
        %v2720 = vadd.f32 %v2650, %v2719
        %v2721 = vpop.f32.mrb[0].mxu0
        %2722 = vdwg.mxu0
        %2723 = vmatprep.subr.mxu0 0.0
        %2724 = vmatpush1.msra.mxu0 %v906
        %2725 = vmatprep.subr.mxu0 0.0
        %2726 = vmatpush1.msra.mxu0 %v907
        %2727 = vmatprep.subr.mxu0 0.0
        %2728 = vmatpush1.msra.mxu0 %v908
        %2729 = vmatprep.subr.mxu0 0.0
        %2730 = vmatpush1.msra.mxu0 %v909
        %2731 = vmatprep.subr.mxu0 0.0
        %2732 = vmatpush1.msra.mxu0 %v910
        %2733 = vmatprep.subr.mxu0 0.0
        %2734 = vmatpush1.msra.mxu0 %v911
        %2735 = vmatprep.subr.mxu0 0.0
        %2736 = vmatpush1.msra.mxu0 %v912
        %2737 = vmatprep.subr.mxu0 0.0
        %2738 = vmatpush1.msra.mxu0 %v913
        %2739 = vmatprep.subr.mxu0 0.0
        %2740 = vmatpush1.msra.mxu0 %v914
        %2741 = vmatprep.subr.mxu0 0.0
        %2742 = vmatpush1.msra.mxu0 %v915
        %2743 = vmatprep.subr.mxu0 0.0
        %2744 = vmatpush1.msra.mxu0 %v916
        %2745 = vmatprep.subr.mxu0 0.0
        %2746 = vmatpush1.msra.mxu0 %v917
        %2747 = vmatprep.subr.mxu0 0.0
        %2748 = vmatpush1.msra.mxu0 %v918
        %2749 = vmatprep.subr.mxu0 0.0
        %2750 = vmatpush1.msra.mxu0 %v919
        %2751 = vmatprep.subr.mxu0 0.0
        %2752 = vmatpush1.msra.mxu0 %v920
        %2753 = vmatprep.subr.mxu0 0.0
        %2754 = vmatpush1.msra.mxu0 %v921
        %2755 = vmatprep.subr.mxu0 0.0
        %2756 = vmatpush1.msra.mxu0 %v922
        %2757 = vmatprep.subr.mxu0 0.0
        %2758 = vmatpush1.msra.mxu0 %v923
        %2759 = vmatprep.subr.mxu0 0.0
        %2760 = vmatpush1.msra.mxu0 %v924
        %2761 = vmatprep.subr.mxu0 0.0
        %2762 = vmatpush1.msra.mxu0 %v925
        %2763 = vmatprep.subr.mxu0 0.0
        %2764 = vmatpush1.msra.mxu0 %v926
        %2765 = vmatprep.subr.mxu0 0.0
        %2766 = vmatpush1.msra.mxu0 %v927
        %2767 = vmatprep.subr.mxu0 0.0
        %2768 = vmatpush1.msra.mxu0 %v928
        %2769 = vmatprep.subr.mxu0 0.0
        %2770 = vmatpush1.msra.mxu0 %v929
        %2771 = vmatprep.subr.mxu0 0.0
        %2772 = vmatpush1.msra.mxu0 %v930
        %2773 = vmatprep.subr.mxu0 0.0
        %2774 = vmatpush1.msra.mxu0 %v931
        %2775 = vmatprep.subr.mxu0 0.0
        %2776 = vmatpush1.msra.mxu0 %v932
        %2777 = vmatprep.subr.mxu0 0.0
        %2778 = vmatpush1.msra.mxu0 %v933
        %2779 = vmatprep.subr.mxu0 0.0
        %2780 = vmatpush1.msra.mxu0 %v934
        %2781 = vmatprep.subr.mxu0 0.0
        %2782 = vmatpush1.msra.mxu0 %v935
        %2783 = vmatprep.subr.mxu0 0.0
        %2784 = vmatpush1.msra.mxu0 %v936
        %2785 = vmatprep.subr.mxu0 0.0
        %2786 = vmatpush1.msra.mxu0 %v937
        %2787 = vmatprep.mubr.f32.mxu0 %v1248
        %2788 = vmatmul.mubr.f32.gmra.mrb[0].mxu0 %v1240
        %v2789 = vpop.f32.mrb[0].mxu0
        %v2790 = vadd.f32 %v2720, %v2789
        %v2791 = vpop.f32.mrb[0].mxu0
        %2792 = vdwg.mxu0
        %2793 = vmatprep.subr.mxu0 0.0
        %2794 = vmatpush1.msra.mxu0 %v938
        %2795 = vmatprep.subr.mxu0 0.0
        %2796 = vmatpush1.msra.mxu0 %v939
        %2797 = vmatprep.subr.mxu0 0.0
        %2798 = vmatpush1.msra.mxu0 %v940
        %2799 = vmatprep.subr.mxu0 0.0
        %2800 = vmatpush1.msra.mxu0 %v941
        %2801 = vmatprep.subr.mxu0 0.0
        %2802 = vmatpush1.msra.mxu0 %v942
        %2803 = vmatprep.subr.mxu0 0.0
        %2804 = vmatpush1.msra.mxu0 %v943
        %2805 = vmatprep.subr.mxu0 0.0
        %2806 = vmatpush1.msra.mxu0 %v944
        %2807 = vmatprep.subr.mxu0 0.0
        %2808 = vmatpush1.msra.mxu0 %v945
        %2809 = vmatprep.subr.mxu0 0.0
        %2810 = vmatpush1.msra.mxu0 %v946
        %2811 = vmatprep.subr.mxu0 0.0
        %2812 = vmatpush1.msra.mxu0 %v947
        %2813 = vmatprep.subr.mxu0 0.0
        %2814 = vmatpush1.msra.mxu0 %v948
        %2815 = vmatprep.subr.mxu0 0.0
        %2816 = vmatpush1.msra.mxu0 %v949
        %2817 = vmatprep.subr.mxu0 0.0
        %2818 = vmatpush1.msra.mxu0 %v950
        %2819 = vmatprep.subr.mxu0 0.0
        %2820 = vmatpush1.msra.mxu0 %v951
        %2821 = vmatprep.subr.mxu0 0.0
        %2822 = vmatpush1.msra.mxu0 %v952
        %2823 = vmatprep.subr.mxu0 0.0
        %2824 = vmatpush1.msra.mxu0 %v953
        %2825 = vmatprep.subr.mxu0 0.0
        %2826 = vmatpush1.msra.mxu0 %v954
        %2827 = vmatprep.subr.mxu0 0.0
        %2828 = vmatpush1.msra.mxu0 %v955
        %2829 = vmatprep.subr.mxu0 0.0
        %2830 = vmatpush1.msra.mxu0 %v956
        %2831 = vmatprep.subr.mxu0 0.0
        %2832 = vmatpush1.msra.mxu0 %v957
        %2833 = vmatprep.subr.mxu0 0.0
        %2834 = vmatpush1.msra.mxu0 %v958
        %2835 = vmatprep.subr.mxu0 0.0
        %2836 = vmatpush1.msra.mxu0 %v959
        %2837 = vmatprep.subr.mxu0 0.0
        %2838 = vmatpush1.msra.mxu0 %v960
        %2839 = vmatprep.subr.mxu0 0.0
        %2840 = vmatpush1.msra.mxu0 %v961
        %2841 = vmatprep.subr.mxu0 0.0
        %2842 = vmatpush1.msra.mxu0 %v962
        %2843 = vmatprep.subr.mxu0 0.0
        %2844 = vmatpush1.msra.mxu0 %v963
        %2845 = vmatprep.subr.mxu0 0.0
        %2846 = vmatpush1.msra.mxu0 %v964
        %2847 = vmatprep.subr.mxu0 0.0
        %2848 = vmatpush1.msra.mxu0 %v965
        %2849 = vmatprep.subr.mxu0 0.0
        %2850 = vmatpush1.msra.mxu0 %v966
        %2851 = vmatprep.subr.mxu0 0.0
        %2852 = vmatpush1.msra.mxu0 %v967
        %2853 = vmatprep.subr.mxu0 0.0
        %2854 = vmatpush1.msra.mxu0 %v968
        %2855 = vmatprep.subr.mxu0 0.0
        %2856 = vmatpush1.msra.mxu0 %v969
        %2857 = vmatprep.mubr.f32.mxu0 %v1249
        %2858 = vmatmul.mubr.f32.gmra.mrb[0].mxu0 %v1247
        %v2859 = vpop.f32.mrb[0].mxu0
        %v2860 = vadd.f32 %v2790, %v2859
        %v2861 = vpop.f32.mrb[0].mxu0
        %2862 = vdwg.mxu0
        %2863 = vmatprep.subr.mxu0 0.0
        %2864 = vmatpush1.msra.mxu0 %v970
        %2865 = vmatprep.subr.mxu0 0.0
        %2866 = vmatpush1.msra.mxu0 %v971
        %2867 = vmatprep.subr.mxu0 0.0
        %2868 = vmatpush1.msra.mxu0 %v972
        %2869 = vmatprep.subr.mxu0 0.0
        %2870 = vmatpush1.msra.mxu0 %v973
        %2871 = vmatprep.subr.mxu0 0.0
        %2872 = vmatpush1.msra.mxu0 %v974
        %2873 = vmatprep.subr.mxu0 0.0
        %2874 = vmatpush1.msra.mxu0 %v975
        %2875 = vmatprep.subr.mxu0 0.0
        %2876 = vmatpush1.msra.mxu0 %v976
        %2877 = vmatprep.subr.mxu0 0.0
        %2878 = vmatpush1.msra.mxu0 %v977
        %2879 = vmatprep.subr.mxu0 0.0
        %2880 = vmatpush1.msra.mxu0 %v978
        %2881 = vmatprep.subr.mxu0 0.0
        %2882 = vmatpush1.msra.mxu0 %v979
        %2883 = vmatprep.subr.mxu0 0.0
        %2884 = vmatpush1.msra.mxu0 %v980
        %2885 = vmatprep.subr.mxu0 0.0
        %2886 = vmatpush1.msra.mxu0 %v981
        %2887 = vmatprep.subr.mxu0 0.0
        %2888 = vmatpush1.msra.mxu0 %v982
        %2889 = vmatprep.subr.mxu0 0.0
        %2890 = vmatpush1.msra.mxu0 %v983
        %2891 = vmatprep.subr.mxu0 0.0
        %2892 = vmatpush1.msra.mxu0 %v984
        %2893 = vmatprep.subr.mxu0 0.0
        %2894 = vmatpush1.msra.mxu0 %v985
        %2895 = vmatprep.subr.mxu0 0.0
        %2896 = vmatpush1.msra.mxu0 %v986
        %2897 = vmatprep.subr.mxu0 0.0
        %2898 = vmatpush1.msra.mxu0 %v987
        %2899 = vmatprep.subr.mxu0 0.0
        %2900 = vmatpush1.msra.mxu0 %v988
        %2901 = vmatprep.subr.mxu0 0.0
        %2902 = vmatpush1.msra.mxu0 %v989
        %2903 = vmatprep.subr.mxu0 0.0
        %2904 = vmatpush1.msra.mxu0 %v990
        %2905 = vmatprep.subr.mxu0 0.0
        %2906 = vmatpush1.msra.mxu0 %v991
        %2907 = vmatprep.subr.mxu0 0.0
        %2908 = vmatpush1.msra.mxu0 %v992
        %2909 = vmatprep.subr.mxu0 0.0
        %2910 = vmatpush1.msra.mxu0 %v993
        %2911 = vmatprep.subr.mxu0 0.0
        %2912 = vmatpush1.msra.mxu0 %v994
        %2913 = vmatprep.subr.mxu0 0.0
        %2914 = vmatpush1.msra.mxu0 %v995
        %2915 = vmatprep.subr.mxu0 0.0
        %2916 = vmatpush1.msra.mxu0 %v996
        %2917 = vmatprep.subr.mxu0 0.0
        %2918 = vmatpush1.msra.mxu0 %v997
        %2919 = vmatprep.subr.mxu0 0.0
        %2920 = vmatpush1.msra.mxu0 %v998
        %2921 = vmatprep.subr.mxu0 0.0
        %2922 = vmatpush1.msra.mxu0 %v999
        %2923 = vmatprep.subr.mxu0 0.0
        %2924 = vmatpush1.msra.mxu0 %v1000
        %2925 = vmatprep.subr.mxu0 0.0
        %2926 = vmatpush1.msra.mxu0 %v1001
        %2927 = vmatprep.mubr.f32.mxu0 %v1265
        %2928 = vmatmul.mubr.f32.gmra.mrb[0].mxu0 %v1257
        %v2929 = vpop.f32.mrb[0].mxu0
        %v2930 = vadd.f32 %v2860, %v2929
        %v2931 = vpop.f32.mrb[0].mxu0
        %2932 = vdwg.mxu0
        %2933 = vmatprep.subr.mxu0 0.0
        %2934 = vmatpush1.msra.mxu0 %v1002
        %2935 = vmatprep.subr.mxu0 0.0
        %2936 = vmatpush1.msra.mxu0 %v1003
        %2937 = vmatprep.subr.mxu0 0.0
        %2938 = vmatpush1.msra.mxu0 %v1004
        %2939 = vmatprep.subr.mxu0 0.0
        %2940 = vmatpush1.msra.mxu0 %v1005
        %2941 = vmatprep.subr.mxu0 0.0
        %2942 = vmatpush1.msra.mxu0 %v1006
        %2943 = vmatprep.subr.mxu0 0.0
        %2944 = vmatpush1.msra.mxu0 %v1007
        %2945 = vmatprep.subr.mxu0 0.0
        %2946 = vmatpush1.msra.mxu0 %v1008
        %2947 = vmatprep.subr.mxu0 0.0
        %2948 = vmatpush1.msra.mxu0 %v1009
        %2949 = vmatprep.subr.mxu0 0.0
        %2950 = vmatpush1.msra.mxu0 %v1010
        %2951 = vmatprep.subr.mxu0 0.0
        %2952 = vmatpush1.msra.mxu0 %v1011
        %2953 = vmatprep.subr.mxu0 0.0
        %2954 = vmatpush1.msra.mxu0 %v1012
        %2955 = vmatprep.subr.mxu0 0.0
        %2956 = vmatpush1.msra.mxu0 %v1013
        %2957 = vmatprep.subr.mxu0 0.0
        %2958 = vmatpush1.msra.mxu0 %v1014
        %2959 = vmatprep.subr.mxu0 0.0
        %2960 = vmatpush1.msra.mxu0 %v1015
        %2961 = vmatprep.subr.mxu0 0.0
        %2962 = vmatpush1.msra.mxu0 %v1016
        %2963 = vmatprep.subr.mxu0 0.0
        %2964 = vmatpush1.msra.mxu0 %v1017
        %2965 = vmatprep.subr.mxu0 0.0
        %2966 = vmatpush1.msra.mxu0 %v1018
        %2967 = vmatprep.subr.mxu0 0.0
        %2968 = vmatpush1.msra.mxu0 %v1019
        %2969 = vmatprep.subr.mxu0 0.0
        %2970 = vmatpush1.msra.mxu0 %v1020
        %2971 = vmatprep.subr.mxu0 0.0
        %2972 = vmatpush1.msra.mxu0 %v1021
        %2973 = vmatprep.subr.mxu0 0.0
        %2974 = vmatpush1.msra.mxu0 %v1022
        %2975 = vmatprep.subr.mxu0 0.0
        %2976 = vmatpush1.msra.mxu0 %v1023
        %2977 = vmatprep.subr.mxu0 0.0
        %2978 = vmatpush1.msra.mxu0 %v1024
        %2979 = vmatprep.subr.mxu0 0.0
        %2980 = vmatpush1.msra.mxu0 %v1025
        %2981 = vmatprep.subr.mxu0 0.0
        %2982 = vmatpush1.msra.mxu0 %v1026
        %2983 = vmatprep.subr.mxu0 0.0
        %2984 = vmatpush1.msra.mxu0 %v1027
        %2985 = vmatprep.subr.mxu0 0.0
        %2986 = vmatpush1.msra.mxu0 %v1028
        %2987 = vmatprep.subr.mxu0 0.0
        %2988 = vmatpush1.msra.mxu0 %v1029
        %2989 = vmatprep.subr.mxu0 0.0
        %2990 = vmatpush1.msra.mxu0 %v1030
        %2991 = vmatprep.subr.mxu0 0.0
        %2992 = vmatpush1.msra.mxu0 %v1031
        %2993 = vmatprep.subr.mxu0 0.0
        %2994 = vmatpush1.msra.mxu0 %v1032
        %2995 = vmatprep.subr.mxu0 0.0
        %2996 = vmatpush1.msra.mxu0 %v1033
        %2997 = vmatprep.mubr.f32.mxu0 %v1266
        %2998 = vmatmul.mubr.f32.gmra.mrb[0].mxu0 %v1264
        %v2999 = vpop.f32.mrb[0].mxu0
        %v3000 = vadd.f32 %v2930, %v2999
        %v3001 = vpop.f32.mrb[0].mxu0
        %3002 = vdwg.mxu0
        %3003 = vmatprep.subr.mxu0 0.0
        %3004 = vmatpush1.msra.mxu0 %v1034
        %3005 = vmatprep.subr.mxu0 0.0
        %3006 = vmatpush1.msra.mxu0 %v1035
        %3007 = vmatprep.subr.mxu0 0.0
        %3008 = vmatpush1.msra.mxu0 %v1036
        %3009 = vmatprep.subr.mxu0 0.0
        %3010 = vmatpush1.msra.mxu0 %v1037
        %3011 = vmatprep.subr.mxu0 0.0
        %3012 = vmatpush1.msra.mxu0 %v1038
        %3013 = vmatprep.subr.mxu0 0.0
        %3014 = vmatpush1.msra.mxu0 %v1039
        %3015 = vmatprep.subr.mxu0 0.0
        %3016 = vmatpush1.msra.mxu0 %v1040
        %3017 = vmatprep.subr.mxu0 0.0
        %3018 = vmatpush1.msra.mxu0 %v1041
        %3019 = vmatprep.subr.mxu0 0.0
        %3020 = vmatpush1.msra.mxu0 %v1042
        %3021 = vmatprep.subr.mxu0 0.0
        %3022 = vmatpush1.msra.mxu0 %v1043
        %3023 = vmatprep.subr.mxu0 0.0
        %3024 = vmatpush1.msra.mxu0 %v1044
        %3025 = vmatprep.subr.mxu0 0.0
        %3026 = vmatpush1.msra.mxu0 %v1045
        %3027 = vmatprep.subr.mxu0 0.0
        %3028 = vmatpush1.msra.mxu0 %v1046
        %3029 = vmatprep.subr.mxu0 0.0
        %3030 = vmatpush1.msra.mxu0 %v1047
        %3031 = vmatprep.subr.mxu0 0.0
        %3032 = vmatpush1.msra.mxu0 %v1048
        %3033 = vmatprep.subr.mxu0 0.0
        %3034 = vmatpush1.msra.mxu0 %v1049
        %3035 = vmatprep.subr.mxu0 0.0
        %3036 = vmatpush1.msra.mxu0 0.0
        %3037 = vmatprep.subr.mxu0 0.0
        %3038 = vmatpush1.msra.mxu0 0.0
        %3039 = vmatprep.subr.mxu0 0.0
        %3040 = vmatpush1.msra.mxu0 0.0
        %3041 = vmatprep.subr.mxu0 0.0
        %3042 = vmatpush1.msra.mxu0 0.0
        %3043 = vmatprep.subr.mxu0 0.0
        %3044 = vmatpush1.msra.mxu0 0.0
        %3045 = vmatprep.subr.mxu0 0.0
        %3046 = vmatpush1.msra.mxu0 0.0
        %3047 = vmatprep.subr.mxu0 0.0
        %3048 = vmatpush1.msra.mxu0 0.0
        %3049 = vmatprep.subr.mxu0 0.0
        %3050 = vmatpush1.msra.mxu0 0.0
        %3051 = vmatprep.subr.mxu0 0.0
        %3052 = vmatpush1.msra.mxu0 0.0
        %3053 = vmatprep.subr.mxu0 0.0
        %3054 = vmatpush1.msra.mxu0 0.0
        %3055 = vmatprep.subr.mxu0 0.0
        %3056 = vmatpush1.msra.mxu0 0.0
        %3057 = vmatprep.subr.mxu0 0.0
        %3058 = vmatpush1.msra.mxu0 0.0
        %3059 = vmatprep.subr.mxu0 0.0
        %3060 = vmatpush1.msra.mxu0 0.0
        %3061 = vmatprep.subr.mxu0 0.0
        %3062 = vmatpush1.msra.mxu0 0.0
        %3063 = vmatprep.subr.mxu0 0.0
        %3064 = vmatpush1.msra.mxu0 0.0
        %3065 = vmatprep.subr.mxu0 0.0
        %3066 = vmatpush1.msra.mxu0 0.0
        %3067 = vmatprep.mubr.f32.mxu0 0.0
        %3068 = vmatmul.mubr.f32.gmra.mrb[0].mxu0 %v1273
        %v3069 = vpop.f32.mrb[0].mxu0
        %v3070 = vadd.f32 %v3000, %v3069
        %v3071 = vpop.f32.mrb[0].mxu0
        %3072 = vdwg.mxu0
        %v3073 = vadd.f32 %v265, %v3070
        %vm3074 = vcmask 123904
        %3075 = vst.msk [vmem:[#allocation2] sm:$0x3] %vm3074, %v3073
        %p3076 = scmp.eq.s32.totalorder %s26, 7
        // Predicated region
        $region37: #{tpu_custom_call.1} parent=27 // pred_check
          %p3077 = pneg %p3076
        $region38: #{tpu_custom_call.1} parent=27 // pred_check_branch
          %3079 = sbr.rel (%p3077) target = $region40
        $region39: #{tpu_custom_call.1} parent=27 // pred_region
          %v3080 = vld [vmem:[#allocation2] sm:$0x3]
          %3081 = vst.msk [vmem:[%s222] sm:$0x3] %vm3074, %v3080
        $region40: #{tpu_custom_call.1} parent=27 // pred_fallthru
          _
        %s3082 = sand.u32 %s110, 1
        %s3083 = scalar_lea.sflag [#allocation5], %s3082
        %s3084 = sand.u32 %s110, 1
        %s3085 = smul.addr %s3084, 2
        %s3086 = scalar_lea.vmem [#allocation6], %s3085
        // Predicated region
        $region41: #{tpu_custom_call.1} parent=27 // pred_check
          %p3087 = pneg %p120
        $region42: #{tpu_custom_call.1} parent=27 // pred_check_branch
          %3089 = sbr.rel (%p3087) target = $region44
        $region43: #{tpu_custom_call.1} parent=27 // pred_region
          %s3091 = ssub.s32 32, 32
          %3092 = vsyncadd %s3083, %s3091
          %s3093 = sadd.s32 %s25, %s24
          %s3094 = smul.addr %s3093, 32
          %s3095 = scalar_lea.hbm %s2, %s3094
          %s3097 = sshll.u32 %s3086, 4
          %s3098 = int_to_ptr.vmem [resolvable:$true] %s3097
          %3100 = dma.vmem_to_hbm [thread:$0]  %s3098, 32, %s3095, %s3083
        $region44: #{tpu_custom_call.1} parent=27 // pred_fallthru
          _
      $region28: #{tpu_custom_call.1} parent=5 // pred_fallthru
        _
      %p3101 = scmp.le.s32.totalorder 2, %s14
      // Predicated region
      $region45: #{tpu_custom_call.1} parent=5 // pred_check
        %p3102 = pneg %p3101
      $region46: #{tpu_custom_call.1} parent=5 // pred_check_branch
        %3104 = sbr.rel (%p3102) target = $region48
      $region47: #{tpu_custom_call.1} parent=5 // pred_region
        %s3105 = ssub.s32 %s14, 2
        // Predicated region
        $region49: #{tpu_custom_call.1} parent=47 // pred_check
          %p3106 = pneg %p126
        $region50: #{tpu_custom_call.1} parent=47 // pred_check_branch
          %3108 = sbr.rel (%p3106) target = $region52
        $region51: #{tpu_custom_call.1} parent=47 // pred_region
          %s3109 = sand.u32 %s111, 1
          %s3110 = scalar_lea.sflag [#allocation5], %s3109
          %s3111 = sand.u32 %s111, 1
          %s3112 = smul.addr %s3111, 2
          %s3113 = scalar_lea.vmem [#allocation6], %s3112
          %3114 = dma.done %s3110, 32
        $region52: #{tpu_custom_call.1} parent=47 // pred_fallthru
          _
      $region48: #{tpu_custom_call.1} parent=5 // pred_fallthru
        _
    $region6: #{tpu_custom_call.1} parent=1 // loop_footer
      %s18 = sadd.s32 1, %s14
    $region7: #{tpu_custom_call.1} parent=1 // loop_footer_branch
      %13 = sbr.rel target = $region3
    $region8: #{tpu_custom_call.1} parent=1 // loop_exit
      _
    %3115 = vsyncpa [#allocation4], 1
    %s3116 = scalar_lea.sflag [#allocation4], 1
    %3117 = vsyncpa %s3116, 1
    %3118 = vsyncpa [#allocation5], 1
    %s3119 = scalar_lea.sflag [#allocation5], 1
    %3120 = vsyncpa %s3119, 1

</llo_original>
